<compile_context>
chip_gen: v6e
topology: v6e:2x2x1
jax: 0.10.0
libtpu: 0.0.40
codegen_flags: <defaults>
</compile_context>

<pallas_src>
import jax
import jax.numpy as jnp
from jax.experimental import pallas as pl
from jax.experimental.pallas import tpu as pltpu

F32 = jnp.float32


# --------------------------------------------------------------------------
# Fused forward kernel
# --------------------------------------------------------------------------
def _fused_caption_kernel(img_ref, cap_ref, wc_ref, bc_ref, embtab_ref,
                          wfeat_ref, wemb_ref, bfcin_ref,
                          wih4_ref, whh4_ref, b4_ref,
                          wfc_ref, bfc_ref,
                          out_ref, hseq_ref):
    # img_ref:    (B, C, H*W)           images flattened over space
    # cap_ref:    (T*B, 1) int32        time-major token ids
    # wc_ref:     (C, 512) / bc_ref (1, 512)   CNN stand-in (1/HW pre-folded)
    # embtab_ref: (V, E)                embedding table
    # wfeat_ref:  (512, E), wemb_ref: (E, E), bfcin_ref: (1, E)   split fc_input
    # wih4_ref:   (4, E, H), whh4_ref: (4, H, H), b4_ref: (4, 1, H)  gate order i,f,g,o
    # wfc_ref:    (H, Vp), bfc_ref: (1, Vp)    vocab padded to lane-dense width
    # out_ref:    (T*B, Vp)             time-major logits
    # hseq_ref:   (T*B, H)              VMEM scratch for the hidden sequence
    B = img_ref.shape[0]
    TB = cap_ref.shape[0]
    T = TB // B
    V = embtab_ref.shape[0]
    H = whh4_ref.shape[1]

    # ---- CNN stand-in: global average pool (scale folded into wc) + projection
    pooled = jnp.sum(img_ref[...], axis=-1)                                   # (B, C)
    feats = jnp.dot(pooled, wc_ref[...], preferred_element_type=F32) + bc_ref[...]   # (B, 512)

    # ---- feature half of fc_input: computed once per image, broadcast over T
    feat_lin = (jnp.dot(feats, wfeat_ref[...], preferred_element_type=F32)
                + bfcin_ref[...])                                             # (B, E)

    # ---- embedding lookup as one-hot @ table (MXU), time-major rows
    cap = cap_ref[...]                                                        # (T*B, 1)
    iota_v = jax.lax.broadcasted_iota(jnp.int32, (TB, V), 1)
    one_hot = (cap == iota_v).astype(F32)                                     # (T*B, V)
    emb = jnp.dot(one_hot, embtab_ref[...], preferred_element_type=F32)       # (T*B, E)
    xe = jnp.dot(emb, wemb_ref[...], preferred_element_type=F32)              # (T*B, E)

    # ---- hoist x @ W_ih out of the recurrence; per-gate slabs avoid lane slicing
    gex = [jnp.dot(xe, wih4_ref[k], preferred_element_type=F32)
           for k in range(4)]                                                 # 4 x (T*B, H)
    gfb = [jnp.dot(feat_lin, wih4_ref[k], preferred_element_type=F32) + b4_ref[k]
           for k in range(4)]                                                 # 4 x (B, H)
    whh = [whh4_ref[k] for k in range(4)]                                     # 4 x (H, H)

    # ---- LSTM recurrence, fully unrolled over T (static indices everywhere)
    h = jnp.zeros((B, H), F32)
    c = jnp.zeros((B, H), F32)
    for t in range(T):
        r0, r1 = t * B, (t + 1) * B
        pre = [gex[k][r0:r1, :] + gfb[k]
               + jnp.dot(h, whh[k], preferred_element_type=F32)
               for k in range(4)]
        i_g = jax.nn.sigmoid(pre[0])
        f_g = jax.nn.sigmoid(pre[1])
        g_g = jnp.tanh(pre[2])
        o_g = jax.nn.sigmoid(pre[3])
        c = f_g * c + i_g * g_g
        h = o_g * jnp.tanh(c)
        hseq_ref[r0:r1, :] = h

    # ---- final classifier: one batched matmul, lane-dense (Vp % 128 == 0) store
    out_ref[...] = (jnp.dot(hseq_ref[...], wfc_ref[...], preferred_element_type=F32)
                    + bfc_ref[...])


# --------------------------------------------------------------------------
# Wrapper mirroring ImageCaptioningModel.forward
# --------------------------------------------------------------------------
def image_captioning_forward(params, images, captions):
    B, C, Hs, Ws = images.shape
    T = captions.shape[1]
    Fdim = params["cnn_w"].shape[1]                 # 512 (resnet18 feature dim)
    E = params["embedding"].shape[1]
    H = params["w_hh"].shape[0]
    V = params["w_fc"].shape[1]
    Vp = ((V + 127) // 128) * 128                   # lane-dense logits width

    img = images.reshape(B, C, Hs * Ws)
    cap_tm = captions.T.reshape(T * B, 1).astype(jnp.int32)     # time-major ids

    # fold 1/(H*W) of the average pool into the projection weight
    wc = params["cnn_w"] * (1.0 / (Hs * Ws))

    # split fc_input so the feature half is computed once per image
    w_feat = params["w_fc_in"][:Fdim, :]            # (512, E)
    w_emb = params["w_fc_in"][Fdim:, :]             # (E, E)

    # per-gate weight slabs (PyTorch gate order i, f, g, o)
    wih4 = params["w_ih"].reshape(E, 4, H).transpose(1, 0, 2)    # (4, E, H)
    whh4 = params["w_hh"].reshape(H, 4, H).transpose(1, 0, 2)    # (4, H, H)
    b4 = params["b_lstm"].reshape(1, 4, H).transpose(1, 0, 2)    # (4, 1, H)

    w_fc, b_fc = params["w_fc"], params["b_fc"]
    if Vp != V:
        w_fc = jnp.pad(w_fc, ((0, 0), (0, Vp - V)))
        b_fc = jnp.pad(b_fc, ((0, 0), (0, Vp - V)))

    vmem = pl.BlockSpec(memory_space=pltpu.MemorySpace.VMEM)
    out = pl.pallas_call(
        _fused_caption_kernel,
        out_shape=jax.ShapeDtypeStruct((T * B, Vp), F32),
        in_specs=[vmem] * 13,
        out_specs=vmem,
        scratch_shapes=[pltpu.VMEM((T * B, H), F32)],
    )(img, cap_tm, wc, params["cnn_b"], params["embedding"],
      w_feat, w_emb, params["b_fc_in"], wih4, whh4, b4, w_fc, b_fc)

    # (T*B, Vp) time-major -> (B, T, V)
    return out.reshape(T, B, Vp)[:, :, :V].transpose(1, 0, 2)


# --------------------------------------------------------------------------
# Pure-JAX reference (straightforward repeat/concat/LSTM) for a sanity check
# --------------------------------------------------------------------------
def _reference_forward(params, images, captions):
    B, C, Hs, Ws = images.shape
    T = captions.shape[1]
    H = params["w_hh"].shape[0]
    feats = (jnp.mean(images.reshape(B, C, -1), axis=-1) @ params["cnn_w"]
             + params["cnn_b"])
    emb = params["embedding"][captions]
    feat_rep = jnp.repeat(feats[:, None, :], T, axis=1)
    x = (jnp.concatenate([feat_rep, emb], axis=2) @ params["w_fc_in"]
         + params["b_fc_in"])
    h = jnp.zeros((B, H), F32)
    c = jnp.zeros((B, H), F32)
    outs = []
    for t in range(T):
        g = x[:, t, :] @ params["w_ih"] + h @ params["w_hh"] + params["b_lstm"]
        i = jax.nn.sigmoid(g[:, :H])
        f = jax.nn.sigmoid(g[:, H:2 * H])
        gg = jnp.tanh(g[:, 2 * H:3 * H])
        o = jax.nn.sigmoid(g[:, 3 * H:])
        c = f * c + i * gg
        h = o * jnp.tanh(c)
        outs.append(h)
    hseq = jnp.stack(outs, axis=1)
    return hseq @ params["w_fc"] + params["b_fc"]


# --------------------------------------------------------------------------
# Deterministic parameter initialization (shapes follow the nn.Module __init__)
# --------------------------------------------------------------------------
def init_params(key, vocab_size, embedding_dim=32, hidden_dim=32,
                in_channels=3, feat_dim=512):
    ks = jax.random.split(key, 10)

    def u(k, shape, scale):
        return jax.random.uniform(k, shape, F32, -scale, scale)

    s_in = (feat_dim + embedding_dim) ** -0.5
    s_h = hidden_dim ** -0.5
    return {
        # CNN stand-in: GAP + (C -> 512) projection
        "cnn_w": u(ks[0], (in_channels, feat_dim), 0.1),
        "cnn_b": u(ks[1], (1, feat_dim), 0.1),
        # nn.Embedding(vocab_size, embedding_dim)
        "embedding": jax.random.normal(ks[2], (vocab_size, embedding_dim), F32),
        # nn.Linear(512 + embedding_dim, embedding_dim)  (stored as (in, out))
        "w_fc_in": u(ks[3], (feat_dim + embedding_dim, embedding_dim), s_in),
        "b_fc_in": u(ks[4], (1, embedding_dim), s_in),
        # nn.LSTM(embedding_dim, hidden_dim) weights, gate order i,f,g,o
        "w_ih": u(ks[5], (embedding_dim, 4 * hidden_dim), s_h),
        "w_hh": u(ks[6], (hidden_dim, 4 * hidden_dim), s_h),
        "b_lstm": u(ks[7], (1, 4 * hidden_dim), s_h),   # b_ih + b_hh combined
        # nn.Linear(hidden_dim, vocab_size)  (stored as (in, out))
        "w_fc": u(ks[8], (hidden_dim, vocab_size), s_h),
        "b_fc": u(ks[9], (1, vocab_size), s_h),
    }


if __name__ == "__main__":
    key = jax.random.PRNGKey(0)
    k_img, k_cap, k_par = jax.random.split(key, 3)

    B, C, Himg, Wimg = 2, 3, 16, 16
    T, vocab_size = 8, 64
    embedding_dim = hidden_dim = 32

    images = jax.random.normal(k_img, (B, C, Himg, Wimg), F32)
    captions = jax.random.randint(k_cap, (B, T), 0, vocab_size, dtype=jnp.int32)
    params = init_params(k_par, vocab_size, embedding_dim, hidden_dim, in_channels=C)

    out = jax.jit(image_captioning_forward)(params, images, captions)
    out = jax.block_until_ready(out)
    assert out.shape == (B, T, vocab_size), out.shape
    assert out.dtype == jnp.float32

    ref = _reference_forward(params, images, captions)
    max_err = float(jnp.max(jnp.abs(out - ref)))
    assert jnp.allclose(out, ref, atol=1e-2, rtol=1e-2), max_err

    print("KERNEL_OK")
</pallas_src>

<mosaic_0001>
module attributes {stable_mosaic.version = 11 : i64} {
  func.func @_fused_caption_kernel(%arg0: memref<2x3x256xf32, #tpu.memory_space<vmem>>, %arg1: memref<16x1xi32, #tpu.memory_space<vmem>>, %arg2: memref<3x512xf32, #tpu.memory_space<vmem>>, %arg3: memref<1x512xf32, #tpu.memory_space<vmem>>, %arg4: memref<64x32xf32, #tpu.memory_space<vmem>>, %arg5: memref<512x32xf32, #tpu.memory_space<vmem>>, %arg6: memref<32x32xf32, #tpu.memory_space<vmem>>, %arg7: memref<1x32xf32, #tpu.memory_space<vmem>>, %arg8: memref<4x32x32xf32, #tpu.memory_space<vmem>>, %arg9: memref<4x32x32xf32, #tpu.memory_space<vmem>>, %arg10: memref<4x1x32xf32, #tpu.memory_space<vmem>>, %arg11: memref<32x128xf32, #tpu.memory_space<vmem>>, %arg12: memref<1x128xf32, #tpu.memory_space<vmem>>, %arg13: memref<16x128xf32, #tpu.memory_space<vmem>>, %arg14: memref<16x32xf32, #tpu.memory_space<vmem>>) attributes {dimension_semantics = [], scalar_prefetch = 0 : i64, scratch_operands = 1 : i64, tpu.core_type = #tpu.core_type<tc>} {
    %c0 = arith.constant 0 : index
    %c0_0 = arith.constant 0 : index
    %c0_1 = arith.constant 0 : index
    %0 = vector.load %arg0[%c0, %c0_0, %c0_1] : memref<2x3x256xf32, #tpu.memory_space<vmem>>, vector<2x3x256xf32>
    %cst = arith.constant dense<0.000000e+00> : vector<2x3xf32>
    %1 = vector.multi_reduction <add>, %0, %cst [2] : vector<2x3x256xf32> to vector<2x3xf32>
    %c0_2 = arith.constant 0 : index
    %c0_3 = arith.constant 0 : index
    %2 = vector.load %arg2[%c0_2, %c0_3] : memref<3x512xf32, #tpu.memory_space<vmem>>, vector<3x512xf32>
    %cst_4 = arith.constant dense<0.000000e+00> : vector<2x512xf32>
    %3 = tpu.matmul %1, %2, %cst_4 {dimension_numbers = #tpu.dot_dimension_numbers<[1], [0], [0], [1], [0, 0, 1, 1], [], []>} : vector<2x3xf32>, vector<3x512xf32>, vector<2x512xf32> -> vector<2x512xf32>
    %c0_5 = arith.constant 0 : index
    %c0_6 = arith.constant 0 : index
    %4 = vector.load %arg3[%c0_5, %c0_6] : memref<1x512xf32, #tpu.memory_space<vmem>>, vector<1x512xf32>
    %5 = vector.broadcast %4 : vector<1x512xf32> to vector<2x512xf32>
    %6 = arith.addf %3, %5 : vector<2x512xf32>
    %c0_7 = arith.constant 0 : index
    %c0_8 = arith.constant 0 : index
    %7 = vector.load %arg5[%c0_7, %c0_8] : memref<512x32xf32, #tpu.memory_space<vmem>>, vector<512x32xf32>
    %cst_9 = arith.constant dense<0.000000e+00> : vector<2x32xf32>
    %8 = tpu.matmul %6, %7, %cst_9 {dimension_numbers = #tpu.dot_dimension_numbers<[1], [0], [0], [1], [0, 0, 1, 1], [], []>} : vector<2x512xf32>, vector<512x32xf32>, vector<2x32xf32> -> vector<2x32xf32>
    %c0_10 = arith.constant 0 : index
    %c0_11 = arith.constant 0 : index
    %9 = vector.load %arg7[%c0_10, %c0_11] : memref<1x32xf32, #tpu.memory_space<vmem>>, vector<1x32xf32>
    %10 = vector.broadcast %9 : vector<1x32xf32> to vector<2x32xf32>
    %11 = arith.addf %8, %10 : vector<2x32xf32>
    %c0_12 = arith.constant 0 : index
    %c0_13 = arith.constant 0 : index
    %12 = vector.load %arg1[%c0_12, %c0_13] : memref<16x1xi32, #tpu.memory_space<vmem>>, vector<16x1xi32>
    %13 = tpu.iota {dimensions = array<i32: 1>} : vector<16x64xi32>
    %14 = vector.broadcast %12 : vector<16x1xi32> to vector<16x64xi32>
    %15 = arith.cmpi eq, %14, %13 : vector<16x64xi32>
    %16 = arith.extui %15 : vector<16x64xi1> to vector<16x64xi32>
    %17 = arith.sitofp %16 : vector<16x64xi32> to vector<16x64xf32>
    %c0_14 = arith.constant 0 : index
    %c0_15 = arith.constant 0 : index
    %18 = vector.load %arg4[%c0_14, %c0_15] : memref<64x32xf32, #tpu.memory_space<vmem>>, vector<64x32xf32>
    %cst_16 = arith.constant dense<0.000000e+00> : vector<16x32xf32>
    %19 = tpu.matmul %17, %18, %cst_16 {dimension_numbers = #tpu.dot_dimension_numbers<[1], [0], [0], [1], [0, 0, 1, 1], [], []>} : vector<16x64xf32>, vector<64x32xf32>, vector<16x32xf32> -> vector<16x32xf32>
    %c0_17 = arith.constant 0 : index
    %c0_18 = arith.constant 0 : index
    %20 = vector.load %arg6[%c0_17, %c0_18] : memref<32x32xf32, #tpu.memory_space<vmem>>, vector<32x32xf32>
    %cst_19 = arith.constant dense<0.000000e+00> : vector<16x32xf32>
    %21 = tpu.matmul %19, %20, %cst_19 {dimension_numbers = #tpu.dot_dimension_numbers<[1], [0], [0], [1], [0, 0, 1, 1], [], []>} : vector<16x32xf32>, vector<32x32xf32>, vector<16x32xf32> -> vector<16x32xf32>
    %c0_20 = arith.constant 0 : index
    %c0_21 = arith.constant 0 : index
    %c0_22 = arith.constant 0 : index
    %22 = vector.load %arg8[%c0_20, %c0_21, %c0_22] : memref<4x32x32xf32, #tpu.memory_space<vmem>>, vector<1x32x32xf32>
    %23 = vector.shape_cast %22 : vector<1x32x32xf32> to vector<32x32xf32>
    %cst_23 = arith.constant dense<0.000000e+00> : vector<16x32xf32>
    %24 = tpu.matmul %21, %23, %cst_23 {dimension_numbers = #tpu.dot_dimension_numbers<[1], [0], [0], [1], [0, 0, 1, 1], [], []>} : vector<16x32xf32>, vector<32x32xf32>, vector<16x32xf32> -> vector<16x32xf32>
    %c1 = arith.constant 1 : index
    %c0_24 = arith.constant 0 : index
    %c0_25 = arith.constant 0 : index
    %25 = vector.load %arg8[%c1, %c0_24, %c0_25] : memref<4x32x32xf32, #tpu.memory_space<vmem>>, vector<1x32x32xf32>
    %26 = vector.shape_cast %25 : vector<1x32x32xf32> to vector<32x32xf32>
    %cst_26 = arith.constant dense<0.000000e+00> : vector<16x32xf32>
    %27 = tpu.matmul %21, %26, %cst_26 {dimension_numbers = #tpu.dot_dimension_numbers<[1], [0], [0], [1], [0, 0, 1, 1], [], []>} : vector<16x32xf32>, vector<32x32xf32>, vector<16x32xf32> -> vector<16x32xf32>
    %c2 = arith.constant 2 : index
    %c0_27 = arith.constant 0 : index
    %c0_28 = arith.constant 0 : index
    %28 = vector.load %arg8[%c2, %c0_27, %c0_28] : memref<4x32x32xf32, #tpu.memory_space<vmem>>, vector<1x32x32xf32>
    %29 = vector.shape_cast %28 : vector<1x32x32xf32> to vector<32x32xf32>
    %cst_29 = arith.constant dense<0.000000e+00> : vector<16x32xf32>
    %30 = tpu.matmul %21, %29, %cst_29 {dimension_numbers = #tpu.dot_dimension_numbers<[1], [0], [0], [1], [0, 0, 1, 1], [], []>} : vector<16x32xf32>, vector<32x32xf32>, vector<16x32xf32> -> vector<16x32xf32>
    %c3 = arith.constant 3 : index
    %c0_30 = arith.constant 0 : index
    %c0_31 = arith.constant 0 : index
    %31 = vector.load %arg8[%c3, %c0_30, %c0_31] : memref<4x32x32xf32, #tpu.memory_space<vmem>>, vector<1x32x32xf32>
    %32 = vector.shape_cast %31 : vector<1x32x32xf32> to vector<32x32xf32>
    %cst_32 = arith.constant dense<0.000000e+00> : vector<16x32xf32>
    %33 = tpu.matmul %21, %32, %cst_32 {dimension_numbers = #tpu.dot_dimension_numbers<[1], [0], [0], [1], [0, 0, 1, 1], [], []>} : vector<16x32xf32>, vector<32x32xf32>, vector<16x32xf32> -> vector<16x32xf32>
    %c0_33 = arith.constant 0 : index
    %c0_34 = arith.constant 0 : index
    %c0_35 = arith.constant 0 : index
    %34 = vector.load %arg8[%c0_33, %c0_34, %c0_35] : memref<4x32x32xf32, #tpu.memory_space<vmem>>, vector<1x32x32xf32>
    %35 = vector.shape_cast %34 : vector<1x32x32xf32> to vector<32x32xf32>
    %cst_36 = arith.constant dense<0.000000e+00> : vector<2x32xf32>
    %36 = tpu.matmul %11, %35, %cst_36 {dimension_numbers = #tpu.dot_dimension_numbers<[1], [0], [0], [1], [0, 0, 1, 1], [], []>} : vector<2x32xf32>, vector<32x32xf32>, vector<2x32xf32> -> vector<2x32xf32>
    %c0_37 = arith.constant 0 : index
    %c0_38 = arith.constant 0 : index
    %c0_39 = arith.constant 0 : index
    %37 = vector.load %arg10[%c0_37, %c0_38, %c0_39] : memref<4x1x32xf32, #tpu.memory_space<vmem>>, vector<1x1x32xf32>
    %38 = vector.shape_cast %37 : vector<1x1x32xf32> to vector<1x32xf32>
    %39 = vector.broadcast %38 : vector<1x32xf32> to vector<2x32xf32>
    %40 = arith.addf %36, %39 : vector<2x32xf32>
    %c1_40 = arith.constant 1 : index
    %c0_41 = arith.constant 0 : index
    %c0_42 = arith.constant 0 : index
    %41 = vector.load %arg8[%c1_40, %c0_41, %c0_42] : memref<4x32x32xf32, #tpu.memory_space<vmem>>, vector<1x32x32xf32>
    %42 = vector.shape_cast %41 : vector<1x32x32xf32> to vector<32x32xf32>
    %cst_43 = arith.constant dense<0.000000e+00> : vector<2x32xf32>
    %43 = tpu.matmul %11, %42, %cst_43 {dimension_numbers = #tpu.dot_dimension_numbers<[1], [0], [0], [1], [0, 0, 1, 1], [], []>} : vector<2x32xf32>, vector<32x32xf32>, vector<2x32xf32> -> vector<2x32xf32>
    %c1_44 = arith.constant 1 : index
    %c0_45 = arith.constant 0 : index
    %c0_46 = arith.constant 0 : index
    %44 = vector.load %arg10[%c1_44, %c0_45, %c0_46] : memref<4x1x32xf32, #tpu.memory_space<vmem>>, vector<1x1x32xf32>
    %45 = vector.shape_cast %44 : vector<1x1x32xf32> to vector<1x32xf32>
    %46 = vector.broadcast %45 : vector<1x32xf32> to vector<2x32xf32>
    %47 = arith.addf %43, %46 : vector<2x32xf32>
    %c2_47 = arith.constant 2 : index
    %c0_48 = arith.constant 0 : index
    %c0_49 = arith.constant 0 : index
    %48 = vector.load %arg8[%c2_47, %c0_48, %c0_49] : memref<4x32x32xf32, #tpu.memory_space<vmem>>, vector<1x32x32xf32>
    %49 = vector.shape_cast %48 : vector<1x32x32xf32> to vector<32x32xf32>
    %cst_50 = arith.constant dense<0.000000e+00> : vector<2x32xf32>
    %50 = tpu.matmul %11, %49, %cst_50 {dimension_numbers = #tpu.dot_dimension_numbers<[1], [0], [0], [1], [0, 0, 1, 1], [], []>} : vector<2x32xf32>, vector<32x32xf32>, vector<2x32xf32> -> vector<2x32xf32>
    %c2_51 = arith.constant 2 : index
    %c0_52 = arith.constant 0 : index
    %c0_53 = arith.constant 0 : index
    %51 = vector.load %arg10[%c2_51, %c0_52, %c0_53] : memref<4x1x32xf32, #tpu.memory_space<vmem>>, vector<1x1x32xf32>
    %52 = vector.shape_cast %51 : vector<1x1x32xf32> to vector<1x32xf32>
    %53 = vector.broadcast %52 : vector<1x32xf32> to vector<2x32xf32>
    %54 = arith.addf %50, %53 : vector<2x32xf32>
    %c3_54 = arith.constant 3 : index
    %c0_55 = arith.constant 0 : index
    %c0_56 = arith.constant 0 : index
    %55 = vector.load %arg8[%c3_54, %c0_55, %c0_56] : memref<4x32x32xf32, #tpu.memory_space<vmem>>, vector<1x32x32xf32>
    %56 = vector.shape_cast %55 : vector<1x32x32xf32> to vector<32x32xf32>
    %cst_57 = arith.constant dense<0.000000e+00> : vector<2x32xf32>
    %57 = tpu.matmul %11, %56, %cst_57 {dimension_numbers = #tpu.dot_dimension_numbers<[1], [0], [0], [1], [0, 0, 1, 1], [], []>} : vector<2x32xf32>, vector<32x32xf32>, vector<2x32xf32> -> vector<2x32xf32>
    %c3_58 = arith.constant 3 : index
    %c0_59 = arith.constant 0 : index
    %c0_60 = arith.constant 0 : index
    %58 = vector.load %arg10[%c3_58, %c0_59, %c0_60] : memref<4x1x32xf32, #tpu.memory_space<vmem>>, vector<1x1x32xf32>
    %59 = vector.shape_cast %58 : vector<1x1x32xf32> to vector<1x32xf32>
    %60 = vector.broadcast %59 : vector<1x32xf32> to vector<2x32xf32>
    %61 = arith.addf %57, %60 : vector<2x32xf32>
    %c0_61 = arith.constant 0 : index
    %c0_62 = arith.constant 0 : index
    %c0_63 = arith.constant 0 : index
    %62 = vector.load %arg9[%c0_61, %c0_62, %c0_63] : memref<4x32x32xf32, #tpu.memory_space<vmem>>, vector<1x32x32xf32>
    %63 = vector.shape_cast %62 : vector<1x32x32xf32> to vector<32x32xf32>
    %c1_64 = arith.constant 1 : index
    %c0_65 = arith.constant 0 : index
    %c0_66 = arith.constant 0 : index
    %64 = vector.load %arg9[%c1_64, %c0_65, %c0_66] : memref<4x32x32xf32, #tpu.memory_space<vmem>>, vector<1x32x32xf32>
    %65 = vector.shape_cast %64 : vector<1x32x32xf32> to vector<32x32xf32>
    %c2_67 = arith.constant 2 : index
    %c0_68 = arith.constant 0 : index
    %c0_69 = arith.constant 0 : index
    %66 = vector.load %arg9[%c2_67, %c0_68, %c0_69] : memref<4x32x32xf32, #tpu.memory_space<vmem>>, vector<1x32x32xf32>
    %67 = vector.shape_cast %66 : vector<1x32x32xf32> to vector<32x32xf32>
    %c3_70 = arith.constant 3 : index
    %c0_71 = arith.constant 0 : index
    %c0_72 = arith.constant 0 : index
    %68 = vector.load %arg9[%c3_70, %c0_71, %c0_72] : memref<4x32x32xf32, #tpu.memory_space<vmem>>, vector<1x32x32xf32>
    %69 = vector.shape_cast %68 : vector<1x32x32xf32> to vector<32x32xf32>
    %cst_73 = arith.constant 0.000000e+00 : f32
    %70 = vector.broadcast %cst_73 : f32 to vector<2x32xf32>
    %cst_74 = arith.constant 0.000000e+00 : f32
    %71 = vector.broadcast %cst_74 : f32 to vector<2x32xf32>
    %72 = vector.extract_strided_slice %24 {offsets = [0, 0], sizes = [2, 32], strides = [1, 1]} : vector<16x32xf32> to vector<2x32xf32>
    %73 = arith.addf %72, %40 : vector<2x32xf32>
    %cst_75 = arith.constant dense<0.000000e+00> : vector<2x32xf32>
    %74 = tpu.matmul %70, %63, %cst_75 {dimension_numbers = #tpu.dot_dimension_numbers<[1], [0], [0], [1], [0, 0, 1, 1], [], []>} : vector<2x32xf32>, vector<32x32xf32>, vector<2x32xf32> -> vector<2x32xf32>
    %75 = arith.addf %73, %74 : vector<2x32xf32>
    %76 = vector.extract_strided_slice %27 {offsets = [0, 0], sizes = [2, 32], strides = [1, 1]} : vector<16x32xf32> to vector<2x32xf32>
    %77 = arith.addf %76, %47 : vector<2x32xf32>
    %cst_76 = arith.constant dense<0.000000e+00> : vector<2x32xf32>
    %78 = tpu.matmul %70, %65, %cst_76 {dimension_numbers = #tpu.dot_dimension_numbers<[1], [0], [0], [1], [0, 0, 1, 1], [], []>} : vector<2x32xf32>, vector<32x32xf32>, vector<2x32xf32> -> vector<2x32xf32>
    %79 = arith.addf %77, %78 : vector<2x32xf32>
    %80 = vector.extract_strided_slice %30 {offsets = [0, 0], sizes = [2, 32], strides = [1, 1]} : vector<16x32xf32> to vector<2x32xf32>
    %81 = arith.addf %80, %54 : vector<2x32xf32>
    %cst_77 = arith.constant dense<0.000000e+00> : vector<2x32xf32>
    %82 = tpu.matmul %70, %67, %cst_77 {dimension_numbers = #tpu.dot_dimension_numbers<[1], [0], [0], [1], [0, 0, 1, 1], [], []>} : vector<2x32xf32>, vector<32x32xf32>, vector<2x32xf32> -> vector<2x32xf32>
    %83 = arith.addf %81, %82 : vector<2x32xf32>
    %84 = vector.extract_strided_slice %33 {offsets = [0, 0], sizes = [2, 32], strides = [1, 1]} : vector<16x32xf32> to vector<2x32xf32>
    %85 = arith.addf %84, %61 : vector<2x32xf32>
    %cst_78 = arith.constant dense<0.000000e+00> : vector<2x32xf32>
    %86 = tpu.matmul %70, %69, %cst_78 {dimension_numbers = #tpu.dot_dimension_numbers<[1], [0], [0], [1], [0, 0, 1, 1], [], []>} : vector<2x32xf32>, vector<32x32xf32>, vector<2x32xf32> -> vector<2x32xf32>
    %87 = arith.addf %85, %86 : vector<2x32xf32>
    %88 = arith.negf %75 : vector<2x32xf32>
    %89 = math.exp %88 : vector<2x32xf32>
    %cst_79 = arith.constant 1.000000e+00 : f32
    %90 = vector.broadcast %cst_79 : f32 to vector<2x32xf32>
    %91 = arith.addf %90, %89 : vector<2x32xf32>
    %92 = arith.divf %90, %91 : vector<2x32xf32>
    %93 = arith.negf %79 : vector<2x32xf32>
    %94 = math.exp %93 : vector<2x32xf32>
    %cst_80 = arith.constant 1.000000e+00 : f32
    %95 = vector.broadcast %cst_80 : f32 to vector<2x32xf32>
    %96 = arith.addf %95, %94 : vector<2x32xf32>
    %97 = arith.divf %95, %96 : vector<2x32xf32>
    %98 = math.tanh %83 : vector<2x32xf32>
    %99 = arith.negf %87 : vector<2x32xf32>
    %100 = math.exp %99 : vector<2x32xf32>
    %cst_81 = arith.constant 1.000000e+00 : f32
    %101 = vector.broadcast %cst_81 : f32 to vector<2x32xf32>
    %102 = arith.addf %101, %100 : vector<2x32xf32>
    %103 = arith.divf %101, %102 : vector<2x32xf32>
    %104 = arith.mulf %97, %71 : vector<2x32xf32>
    %105 = arith.mulf %92, %98 : vector<2x32xf32>
    %106 = arith.addf %104, %105 : vector<2x32xf32>
    %107 = math.tanh %106 : vector<2x32xf32>
    %108 = arith.mulf %103, %107 : vector<2x32xf32>
    %c0_82 = arith.constant 0 : index
    %c0_83 = arith.constant 0 : index
    %109 = vector.load %arg14[%c0_82, %c0_83] : memref<16x32xf32, #tpu.memory_space<vmem>>, vector<2x32xf32>
    tpu.vector_store %arg14[%c0_82, %c0_83], %108 {strides = array<i32>} : memref<16x32xf32, #tpu.memory_space<vmem>>, vector<2x32xf32>,
    %110 = vector.extract_strided_slice %24 {offsets = [2, 0], sizes = [2, 32], strides = [1, 1]} : vector<16x32xf32> to vector<2x32xf32>
    %111 = arith.addf %110, %40 : vector<2x32xf32>
    %cst_84 = arith.constant dense<0.000000e+00> : vector<2x32xf32>
    %112 = tpu.matmul %108, %63, %cst_84 {dimension_numbers = #tpu.dot_dimension_numbers<[1], [0], [0], [1], [0, 0, 1, 1], [], []>} : vector<2x32xf32>, vector<32x32xf32>, vector<2x32xf32> -> vector<2x32xf32>
    %113 = arith.addf %111, %112 : vector<2x32xf32>
    %114 = vector.extract_strided_slice %27 {offsets = [2, 0], sizes = [2, 32], strides = [1, 1]} : vector<16x32xf32> to vector<2x32xf32>
    %115 = arith.addf %114, %47 : vector<2x32xf32>
    %cst_85 = arith.constant dense<0.000000e+00> : vector<2x32xf32>
    %116 = tpu.matmul %108, %65, %cst_85 {dimension_numbers = #tpu.dot_dimension_numbers<[1], [0], [0], [1], [0, 0, 1, 1], [], []>} : vector<2x32xf32>, vector<32x32xf32>, vector<2x32xf32> -> vector<2x32xf32>
    %117 = arith.addf %115, %116 : vector<2x32xf32>
    %118 = vector.extract_strided_slice %30 {offsets = [2, 0], sizes = [2, 32], strides = [1, 1]} : vector<16x32xf32> to vector<2x32xf32>
    %119 = arith.addf %118, %54 : vector<2x32xf32>
    %cst_86 = arith.constant dense<0.000000e+00> : vector<2x32xf32>
    %120 = tpu.matmul %108, %67, %cst_86 {dimension_numbers = #tpu.dot_dimension_numbers<[1], [0], [0], [1], [0, 0, 1, 1], [], []>} : vector<2x32xf32>, vector<32x32xf32>, vector<2x32xf32> -> vector<2x32xf32>
    %121 = arith.addf %119, %120 : vector<2x32xf32>
    %122 = vector.extract_strided_slice %33 {offsets = [2, 0], sizes = [2, 32], strides = [1, 1]} : vector<16x32xf32> to vector<2x32xf32>
    %123 = arith.addf %122, %61 : vector<2x32xf32>
    %cst_87 = arith.constant dense<0.000000e+00> : vector<2x32xf32>
    %124 = tpu.matmul %108, %69, %cst_87 {dimension_numbers = #tpu.dot_dimension_numbers<[1], [0], [0], [1], [0, 0, 1, 1], [], []>} : vector<2x32xf32>, vector<32x32xf32>, vector<2x32xf32> -> vector<2x32xf32>
    %125 = arith.addf %123, %124 : vector<2x32xf32>
    %126 = arith.negf %113 : vector<2x32xf32>
    %127 = math.exp %126 : vector<2x32xf32>
    %cst_88 = arith.constant 1.000000e+00 : f32
    %128 = vector.broadcast %cst_88 : f32 to vector<2x32xf32>
    %129 = arith.addf %128, %127 : vector<2x32xf32>
    %130 = arith.divf %128, %129 : vector<2x32xf32>
    %131 = arith.negf %117 : vector<2x32xf32>
    %132 = math.exp %131 : vector<2x32xf32>
    %cst_89 = arith.constant 1.000000e+00 : f32
    %133 = vector.broadcast %cst_89 : f32 to vector<2x32xf32>
    %134 = arith.addf %133, %132 : vector<2x32xf32>
    %135 = arith.divf %133, %134 : vector<2x32xf32>
    %136 = math.tanh %121 : vector<2x32xf32>
    %137 = arith.negf %125 : vector<2x32xf32>
    %138 = math.exp %137 : vector<2x32xf32>
    %cst_90 = arith.constant 1.000000e+00 : f32
    %139 = vector.broadcast %cst_90 : f32 to vector<2x32xf32>
    %140 = arith.addf %139, %138 : vector<2x32xf32>
    %141 = arith.divf %139, %140 : vector<2x32xf32>
    %142 = arith.mulf %135, %106 : vector<2x32xf32>
    %143 = arith.mulf %130, %136 : vector<2x32xf32>
    %144 = arith.addf %142, %143 : vector<2x32xf32>
    %145 = math.tanh %144 : vector<2x32xf32>
    %146 = arith.mulf %141, %145 : vector<2x32xf32>
    %c2_91 = arith.constant 2 : index
    %c0_92 = arith.constant 0 : index
    %147 = vector.load %arg14[%c2_91, %c0_92] : memref<16x32xf32, #tpu.memory_space<vmem>>, vector<2x32xf32>
    tpu.vector_store %arg14[%c2_91, %c0_92], %146 {strides = array<i32>} : memref<16x32xf32, #tpu.memory_space<vmem>>, vector<2x32xf32>,
    %148 = vector.extract_strided_slice %24 {offsets = [4, 0], sizes = [2, 32], strides = [1, 1]} : vector<16x32xf32> to vector<2x32xf32>
    %149 = arith.addf %148, %40 : vector<2x32xf32>
    %cst_93 = arith.constant dense<0.000000e+00> : vector<2x32xf32>
    %150 = tpu.matmul %146, %63, %cst_93 {dimension_numbers = #tpu.dot_dimension_numbers<[1], [0], [0], [1], [0, 0, 1, 1], [], []>} : vector<2x32xf32>, vector<32x32xf32>, vector<2x32xf32> -> vector<2x32xf32>
    %151 = arith.addf %149, %150 : vector<2x32xf32>
    %152 = vector.extract_strided_slice %27 {offsets = [4, 0], sizes = [2, 32], strides = [1, 1]} : vector<16x32xf32> to vector<2x32xf32>
    %153 = arith.addf %152, %47 : vector<2x32xf32>
    %cst_94 = arith.constant dense<0.000000e+00> : vector<2x32xf32>
    %154 = tpu.matmul %146, %65, %cst_94 {dimension_numbers = #tpu.dot_dimension_numbers<[1], [0], [0], [1], [0, 0, 1, 1], [], []>} : vector<2x32xf32>, vector<32x32xf32>, vector<2x32xf32> -> vector<2x32xf32>
    %155 = arith.addf %153, %154 : vector<2x32xf32>
    %156 = vector.extract_strided_slice %30 {offsets = [4, 0], sizes = [2, 32], strides = [1, 1]} : vector<16x32xf32> to vector<2x32xf32>
    %157 = arith.addf %156, %54 : vector<2x32xf32>
    %cst_95 = arith.constant dense<0.000000e+00> : vector<2x32xf32>
    %158 = tpu.matmul %146, %67, %cst_95 {dimension_numbers = #tpu.dot_dimension_numbers<[1], [0], [0], [1], [0, 0, 1, 1], [], []>} : vector<2x32xf32>, vector<32x32xf32>, vector<2x32xf32> -> vector<2x32xf32>
    %159 = arith.addf %157, %158 : vector<2x32xf32>
    %160 = vector.extract_strided_slice %33 {offsets = [4, 0], sizes = [2, 32], strides = [1, 1]} : vector<16x32xf32> to vector<2x32xf32>
    %161 = arith.addf %160, %61 : vector<2x32xf32>
    %cst_96 = arith.constant dense<0.000000e+00> : vector<2x32xf32>
    %162 = tpu.matmul %146, %69, %cst_96 {dimension_numbers = #tpu.dot_dimension_numbers<[1], [0], [0], [1], [0, 0, 1, 1], [], []>} : vector<2x32xf32>, vector<32x32xf32>, vector<2x32xf32> -> vector<2x32xf32>
    %163 = arith.addf %161, %162 : vector<2x32xf32>
    %164 = arith.negf %151 : vector<2x32xf32>
    %165 = math.exp %164 : vector<2x32xf32>
    %cst_97 = arith.constant 1.000000e+00 : f32
    %166 = vector.broadcast %cst_97 : f32 to vector<2x32xf32>
    %167 = arith.addf %166, %165 : vector<2x32xf32>
    %168 = arith.divf %166, %167 : vector<2x32xf32>
    %169 = arith.negf %155 : vector<2x32xf32>
    %170 = math.exp %169 : vector<2x32xf32>
    %cst_98 = arith.constant 1.000000e+00 : f32
    %171 = vector.broadcast %cst_98 : f32 to vector<2x32xf32>
    %172 = arith.addf %171, %170 : vector<2x32xf32>
    %173 = arith.divf %171, %172 : vector<2x32xf32>
    %174 = math.tanh %159 : vector<2x32xf32>
    %175 = arith.negf %163 : vector<2x32xf32>
    %176 = math.exp %175 : vector<2x32xf32>
    %cst_99 = arith.constant 1.000000e+00 : f32
    %177 = vector.broadcast %cst_99 : f32 to vector<2x32xf32>
    %178 = arith.addf %177, %176 : vector<2x32xf32>
    %179 = arith.divf %177, %178 : vector<2x32xf32>
    %180 = arith.mulf %173, %144 : vector<2x32xf32>
    %181 = arith.mulf %168, %174 : vector<2x32xf32>
    %182 = arith.addf %180, %181 : vector<2x32xf32>
    %183 = math.tanh %182 : vector<2x32xf32>
    %184 = arith.mulf %179, %183 : vector<2x32xf32>
    %c4 = arith.constant 4 : index
    %c0_100 = arith.constant 0 : index
    %185 = vector.load %arg14[%c4, %c0_100] : memref<16x32xf32, #tpu.memory_space<vmem>>, vector<2x32xf32>
    tpu.vector_store %arg14[%c4, %c0_100], %184 {strides = array<i32>} : memref<16x32xf32, #tpu.memory_space<vmem>>, vector<2x32xf32>,
    %186 = vector.extract_strided_slice %24 {offsets = [6, 0], sizes = [2, 32], strides = [1, 1]} : vector<16x32xf32> to vector<2x32xf32>
    %187 = arith.addf %186, %40 : vector<2x32xf32>
    %cst_101 = arith.constant dense<0.000000e+00> : vector<2x32xf32>
    %188 = tpu.matmul %184, %63, %cst_101 {dimension_numbers = #tpu.dot_dimension_numbers<[1], [0], [0], [1], [0, 0, 1, 1], [], []>} : vector<2x32xf32>, vector<32x32xf32>, vector<2x32xf32> -> vector<2x32xf32>
    %189 = arith.addf %187, %188 : vector<2x32xf32>
    %190 = vector.extract_strided_slice %27 {offsets = [6, 0], sizes = [2, 32], strides = [1, 1]} : vector<16x32xf32> to vector<2x32xf32>
    %191 = arith.addf %190, %47 : vector<2x32xf32>
    %cst_102 = arith.constant dense<0.000000e+00> : vector<2x32xf32>
    %192 = tpu.matmul %184, %65, %cst_102 {dimension_numbers = #tpu.dot_dimension_numbers<[1], [0], [0], [1], [0, 0, 1, 1], [], []>} : vector<2x32xf32>, vector<32x32xf32>, vector<2x32xf32> -> vector<2x32xf32>
    %193 = arith.addf %191, %192 : vector<2x32xf32>
    %194 = vector.extract_strided_slice %30 {offsets = [6, 0], sizes = [2, 32], strides = [1, 1]} : vector<16x32xf32> to vector<2x32xf32>
    %195 = arith.addf %194, %54 : vector<2x32xf32>
    %cst_103 = arith.constant dense<0.000000e+00> : vector<2x32xf32>
    %196 = tpu.matmul %184, %67, %cst_103 {dimension_numbers = #tpu.dot_dimension_numbers<[1], [0], [0], [1], [0, 0, 1, 1], [], []>} : vector<2x32xf32>, vector<32x32xf32>, vector<2x32xf32> -> vector<2x32xf32>
    %197 = arith.addf %195, %196 : vector<2x32xf32>
    %198 = vector.extract_strided_slice %33 {offsets = [6, 0], sizes = [2, 32], strides = [1, 1]} : vector<16x32xf32> to vector<2x32xf32>
    %199 = arith.addf %198, %61 : vector<2x32xf32>
    %cst_104 = arith.constant dense<0.000000e+00> : vector<2x32xf32>
    %200 = tpu.matmul %184, %69, %cst_104 {dimension_numbers = #tpu.dot_dimension_numbers<[1], [0], [0], [1], [0, 0, 1, 1], [], []>} : vector<2x32xf32>, vector<32x32xf32>, vector<2x32xf32> -> vector<2x32xf32>
    %201 = arith.addf %199, %200 : vector<2x32xf32>
    %202 = arith.negf %189 : vector<2x32xf32>
    %203 = math.exp %202 : vector<2x32xf32>
    %cst_105 = arith.constant 1.000000e+00 : f32
    %204 = vector.broadcast %cst_105 : f32 to vector<2x32xf32>
    %205 = arith.addf %204, %203 : vector<2x32xf32>
    %206 = arith.divf %204, %205 : vector<2x32xf32>
    %207 = arith.negf %193 : vector<2x32xf32>
    %208 = math.exp %207 : vector<2x32xf32>
    %cst_106 = arith.constant 1.000000e+00 : f32
    %209 = vector.broadcast %cst_106 : f32 to vector<2x32xf32>
    %210 = arith.addf %209, %208 : vector<2x32xf32>
    %211 = arith.divf %209, %210 : vector<2x32xf32>
    %212 = math.tanh %197 : vector<2x32xf32>
    %213 = arith.negf %201 : vector<2x32xf32>
    %214 = math.exp %213 : vector<2x32xf32>
    %cst_107 = arith.constant 1.000000e+00 : f32
    %215 = vector.broadcast %cst_107 : f32 to vector<2x32xf32>
    %216 = arith.addf %215, %214 : vector<2x32xf32>
    %217 = arith.divf %215, %216 : vector<2x32xf32>
    %218 = arith.mulf %211, %182 : vector<2x32xf32>
    %219 = arith.mulf %206, %212 : vector<2x32xf32>
    %220 = arith.addf %218, %219 : vector<2x32xf32>
    %221 = math.tanh %220 : vector<2x32xf32>
    %222 = arith.mulf %217, %221 : vector<2x32xf32>
    %c6 = arith.constant 6 : index
    %c0_108 = arith.constant 0 : index
    %223 = vector.load %arg14[%c6, %c0_108] : memref<16x32xf32, #tpu.memory_space<vmem>>, vector<2x32xf32>
    tpu.vector_store %arg14[%c6, %c0_108], %222 {strides = array<i32>} : memref<16x32xf32, #tpu.memory_space<vmem>>, vector<2x32xf32>,
    %224 = vector.extract_strided_slice %24 {offsets = [8, 0], sizes = [2, 32], strides = [1, 1]} : vector<16x32xf32> to vector<2x32xf32>
    %225 = arith.addf %224, %40 : vector<2x32xf32>
    %cst_109 = arith.constant dense<0.000000e+00> : vector<2x32xf32>
    %226 = tpu.matmul %222, %63, %cst_109 {dimension_numbers = #tpu.dot_dimension_numbers<[1], [0], [0], [1], [0, 0, 1, 1], [], []>} : vector<2x32xf32>, vector<32x32xf32>, vector<2x32xf32> -> vector<2x32xf32>
    %227 = arith.addf %225, %226 : vector<2x32xf32>
    %228 = vector.extract_strided_slice %27 {offsets = [8, 0], sizes = [2, 32], strides = [1, 1]} : vector<16x32xf32> to vector<2x32xf32>
    %229 = arith.addf %228, %47 : vector<2x32xf32>
    %cst_110 = arith.constant dense<0.000000e+00> : vector<2x32xf32>
    %230 = tpu.matmul %222, %65, %cst_110 {dimension_numbers = #tpu.dot_dimension_numbers<[1], [0], [0], [1], [0, 0, 1, 1], [], []>} : vector<2x32xf32>, vector<32x32xf32>, vector<2x32xf32> -> vector<2x32xf32>
    %231 = arith.addf %229, %230 : vector<2x32xf32>
    %232 = vector.extract_strided_slice %30 {offsets = [8, 0], sizes = [2, 32], strides = [1, 1]} : vector<16x32xf32> to vector<2x32xf32>
    %233 = arith.addf %232, %54 : vector<2x32xf32>
    %cst_111 = arith.constant dense<0.000000e+00> : vector<2x32xf32>
    %234 = tpu.matmul %222, %67, %cst_111 {dimension_numbers = #tpu.dot_dimension_numbers<[1], [0], [0], [1], [0, 0, 1, 1], [], []>} : vector<2x32xf32>, vector<32x32xf32>, vector<2x32xf32> -> vector<2x32xf32>
    %235 = arith.addf %233, %234 : vector<2x32xf32>
    %236 = vector.extract_strided_slice %33 {offsets = [8, 0], sizes = [2, 32], strides = [1, 1]} : vector<16x32xf32> to vector<2x32xf32>
    %237 = arith.addf %236, %61 : vector<2x32xf32>
    %cst_112 = arith.constant dense<0.000000e+00> : vector<2x32xf32>
    %238 = tpu.matmul %222, %69, %cst_112 {dimension_numbers = #tpu.dot_dimension_numbers<[1], [0], [0], [1], [0, 0, 1, 1], [], []>} : vector<2x32xf32>, vector<32x32xf32>, vector<2x32xf32> -> vector<2x32xf32>
    %239 = arith.addf %237, %238 : vector<2x32xf32>
    %240 = arith.negf %227 : vector<2x32xf32>
    %241 = math.exp %240 : vector<2x32xf32>
    %cst_113 = arith.constant 1.000000e+00 : f32
    %242 = vector.broadcast %cst_113 : f32 to vector<2x32xf32>
    %243 = arith.addf %242, %241 : vector<2x32xf32>
    %244 = arith.divf %242, %243 : vector<2x32xf32>
    %245 = arith.negf %231 : vector<2x32xf32>
    %246 = math.exp %245 : vector<2x32xf32>
    %cst_114 = arith.constant 1.000000e+00 : f32
    %247 = vector.broadcast %cst_114 : f32 to vector<2x32xf32>
    %248 = arith.addf %247, %246 : vector<2x32xf32>
    %249 = arith.divf %247, %248 : vector<2x32xf32>
    %250 = math.tanh %235 : vector<2x32xf32>
    %251 = arith.negf %239 : vector<2x32xf32>
    %252 = math.exp %251 : vector<2x32xf32>
    %cst_115 = arith.constant 1.000000e+00 : f32
    %253 = vector.broadcast %cst_115 : f32 to vector<2x32xf32>
    %254 = arith.addf %253, %252 : vector<2x32xf32>
    %255 = arith.divf %253, %254 : vector<2x32xf32>
    %256 = arith.mulf %249, %220 : vector<2x32xf32>
    %257 = arith.mulf %244, %250 : vector<2x32xf32>
    %258 = arith.addf %256, %257 : vector<2x32xf32>
    %259 = math.tanh %258 : vector<2x32xf32>
    %260 = arith.mulf %255, %259 : vector<2x32xf32>
    %c8 = arith.constant 8 : index
    %c0_116 = arith.constant 0 : index
    %261 = vector.load %arg14[%c8, %c0_116] : memref<16x32xf32, #tpu.memory_space<vmem>>, vector<2x32xf32>
    tpu.vector_store %arg14[%c8, %c0_116], %260 {strides = array<i32>} : memref<16x32xf32, #tpu.memory_space<vmem>>, vector<2x32xf32>,
    %262 = vector.extract_strided_slice %24 {offsets = [10, 0], sizes = [2, 32], strides = [1, 1]} : vector<16x32xf32> to vector<2x32xf32>
    %263 = arith.addf %262, %40 : vector<2x32xf32>
    %cst_117 = arith.constant dense<0.000000e+00> : vector<2x32xf32>
    %264 = tpu.matmul %260, %63, %cst_117 {dimension_numbers = #tpu.dot_dimension_numbers<[1], [0], [0], [1], [0, 0, 1, 1], [], []>} : vector<2x32xf32>, vector<32x32xf32>, vector<2x32xf32> -> vector<2x32xf32>
    %265 = arith.addf %263, %264 : vector<2x32xf32>
    %266 = vector.extract_strided_slice %27 {offsets = [10, 0], sizes = [2, 32], strides = [1, 1]} : vector<16x32xf32> to vector<2x32xf32>
    %267 = arith.addf %266, %47 : vector<2x32xf32>
    %cst_118 = arith.constant dense<0.000000e+00> : vector<2x32xf32>
    %268 = tpu.matmul %260, %65, %cst_118 {dimension_numbers = #tpu.dot_dimension_numbers<[1], [0], [0], [1], [0, 0, 1, 1], [], []>} : vector<2x32xf32>, vector<32x32xf32>, vector<2x32xf32> -> vector<2x32xf32>
    %269 = arith.addf %267, %268 : vector<2x32xf32>
    %270 = vector.extract_strided_slice %30 {offsets = [10, 0], sizes = [2, 32], strides = [1, 1]} : vector<16x32xf32> to vector<2x32xf32>
    %271 = arith.addf %270, %54 : vector<2x32xf32>
    %cst_119 = arith.constant dense<0.000000e+00> : vector<2x32xf32>
    %272 = tpu.matmul %260, %67, %cst_119 {dimension_numbers = #tpu.dot_dimension_numbers<[1], [0], [0], [1], [0, 0, 1, 1], [], []>} : vector<2x32xf32>, vector<32x32xf32>, vector<2x32xf32> -> vector<2x32xf32>
    %273 = arith.addf %271, %272 : vector<2x32xf32>
    %274 = vector.extract_strided_slice %33 {offsets = [10, 0], sizes = [2, 32], strides = [1, 1]} : vector<16x32xf32> to vector<2x32xf32>
    %275 = arith.addf %274, %61 : vector<2x32xf32>
    %cst_120 = arith.constant dense<0.000000e+00> : vector<2x32xf32>
    %276 = tpu.matmul %260, %69, %cst_120 {dimension_numbers = #tpu.dot_dimension_numbers<[1], [0], [0], [1], [0, 0, 1, 1], [], []>} : vector<2x32xf32>, vector<32x32xf32>, vector<2x32xf32> -> vector<2x32xf32>
    %277 = arith.addf %275, %276 : vector<2x32xf32>
    %278 = arith.negf %265 : vector<2x32xf32>
    %279 = math.exp %278 : vector<2x32xf32>
    %cst_121 = arith.constant 1.000000e+00 : f32
    %280 = vector.broadcast %cst_121 : f32 to vector<2x32xf32>
    %281 = arith.addf %280, %279 : vector<2x32xf32>
    %282 = arith.divf %280, %281 : vector<2x32xf32>
    %283 = arith.negf %269 : vector<2x32xf32>
    %284 = math.exp %283 : vector<2x32xf32>
    %cst_122 = arith.constant 1.000000e+00 : f32
    %285 = vector.broadcast %cst_122 : f32 to vector<2x32xf32>
    %286 = arith.addf %285, %284 : vector<2x32xf32>
    %287 = arith.divf %285, %286 : vector<2x32xf32>
    %288 = math.tanh %273 : vector<2x32xf32>
    %289 = arith.negf %277 : vector<2x32xf32>
    %290 = math.exp %289 : vector<2x32xf32>
    %cst_123 = arith.constant 1.000000e+00 : f32
    %291 = vector.broadcast %cst_123 : f32 to vector<2x32xf32>
    %292 = arith.addf %291, %290 : vector<2x32xf32>
    %293 = arith.divf %291, %292 : vector<2x32xf32>
    %294 = arith.mulf %287, %258 : vector<2x32xf32>
    %295 = arith.mulf %282, %288 : vector<2x32xf32>
    %296 = arith.addf %294, %295 : vector<2x32xf32>
    %297 = math.tanh %296 : vector<2x32xf32>
    %298 = arith.mulf %293, %297 : vector<2x32xf32>
    %c10 = arith.constant 10 : index
    %c0_124 = arith.constant 0 : index
    %299 = vector.load %arg14[%c10, %c0_124] : memref<16x32xf32, #tpu.memory_space<vmem>>, vector<2x32xf32>
    tpu.vector_store %arg14[%c10, %c0_124], %298 {strides = array<i32>} : memref<16x32xf32, #tpu.memory_space<vmem>>, vector<2x32xf32>,
    %300 = vector.extract_strided_slice %24 {offsets = [12, 0], sizes = [2, 32], strides = [1, 1]} : vector<16x32xf32> to vector<2x32xf32>
    %301 = arith.addf %300, %40 : vector<2x32xf32>
    %cst_125 = arith.constant dense<0.000000e+00> : vector<2x32xf32>
    %302 = tpu.matmul %298, %63, %cst_125 {dimension_numbers = #tpu.dot_dimension_numbers<[1], [0], [0], [1], [0, 0, 1, 1], [], []>} : vector<2x32xf32>, vector<32x32xf32>, vector<2x32xf32> -> vector<2x32xf32>
    %303 = arith.addf %301, %302 : vector<2x32xf32>
    %304 = vector.extract_strided_slice %27 {offsets = [12, 0], sizes = [2, 32], strides = [1, 1]} : vector<16x32xf32> to vector<2x32xf32>
    %305 = arith.addf %304, %47 : vector<2x32xf32>
    %cst_126 = arith.constant dense<0.000000e+00> : vector<2x32xf32>
    %306 = tpu.matmul %298, %65, %cst_126 {dimension_numbers = #tpu.dot_dimension_numbers<[1], [0], [0], [1], [0, 0, 1, 1], [], []>} : vector<2x32xf32>, vector<32x32xf32>, vector<2x32xf32> -> vector<2x32xf32>
    %307 = arith.addf %305, %306 : vector<2x32xf32>
    %308 = vector.extract_strided_slice %30 {offsets = [12, 0], sizes = [2, 32], strides = [1, 1]} : vector<16x32xf32> to vector<2x32xf32>
    %309 = arith.addf %308, %54 : vector<2x32xf32>
    %cst_127 = arith.constant dense<0.000000e+00> : vector<2x32xf32>
    %310 = tpu.matmul %298, %67, %cst_127 {dimension_numbers = #tpu.dot_dimension_numbers<[1], [0], [0], [1], [0, 0, 1, 1], [], []>} : vector<2x32xf32>, vector<32x32xf32>, vector<2x32xf32> -> vector<2x32xf32>
    %311 = arith.addf %309, %310 : vector<2x32xf32>
    %312 = vector.extract_strided_slice %33 {offsets = [12, 0], sizes = [2, 32], strides = [1, 1]} : vector<16x32xf32> to vector<2x32xf32>
    %313 = arith.addf %312, %61 : vector<2x32xf32>
    %cst_128 = arith.constant dense<0.000000e+00> : vector<2x32xf32>
    %314 = tpu.matmul %298, %69, %cst_128 {dimension_numbers = #tpu.dot_dimension_numbers<[1], [0], [0], [1], [0, 0, 1, 1], [], []>} : vector<2x32xf32>, vector<32x32xf32>, vector<2x32xf32> -> vector<2x32xf32>
    %315 = arith.addf %313, %314 : vector<2x32xf32>
    %316 = arith.negf %303 : vector<2x32xf32>
    %317 = math.exp %316 : vector<2x32xf32>
    %cst_129 = arith.constant 1.000000e+00 : f32
    %318 = vector.broadcast %cst_129 : f32 to vector<2x32xf32>
    %319 = arith.addf %318, %317 : vector<2x32xf32>
    %320 = arith.divf %318, %319 : vector<2x32xf32>
    %321 = arith.negf %307 : vector<2x32xf32>
    %322 = math.exp %321 : vector<2x32xf32>
    %cst_130 = arith.constant 1.000000e+00 : f32
    %323 = vector.broadcast %cst_130 : f32 to vector<2x32xf32>
    %324 = arith.addf %323, %322 : vector<2x32xf32>
    %325 = arith.divf %323, %324 : vector<2x32xf32>
    %326 = math.tanh %311 : vector<2x32xf32>
    %327 = arith.negf %315 : vector<2x32xf32>
    %328 = math.exp %327 : vector<2x32xf32>
    %cst_131 = arith.constant 1.000000e+00 : f32
    %329 = vector.broadcast %cst_131 : f32 to vector<2x32xf32>
    %330 = arith.addf %329, %328 : vector<2x32xf32>
    %331 = arith.divf %329, %330 : vector<2x32xf32>
    %332 = arith.mulf %325, %296 : vector<2x32xf32>
    %333 = arith.mulf %320, %326 : vector<2x32xf32>
    %334 = arith.addf %332, %333 : vector<2x32xf32>
    %335 = math.tanh %334 : vector<2x32xf32>
    %336 = arith.mulf %331, %335 : vector<2x32xf32>
    %c12 = arith.constant 12 : index
    %c0_132 = arith.constant 0 : index
    %337 = vector.load %arg14[%c12, %c0_132] : memref<16x32xf32, #tpu.memory_space<vmem>>, vector<2x32xf32>
    tpu.vector_store %arg14[%c12, %c0_132], %336 {strides = array<i32>} : memref<16x32xf32, #tpu.memory_space<vmem>>, vector<2x32xf32>,
    %338 = vector.extract_strided_slice %24 {offsets = [14, 0], sizes = [2, 32], strides = [1, 1]} : vector<16x32xf32> to vector<2x32xf32>
    %339 = arith.addf %338, %40 : vector<2x32xf32>
    %cst_133 = arith.constant dense<0.000000e+00> : vector<2x32xf32>
    %340 = tpu.matmul %336, %63, %cst_133 {dimension_numbers = #tpu.dot_dimension_numbers<[1], [0], [0], [1], [0, 0, 1, 1], [], []>} : vector<2x32xf32>, vector<32x32xf32>, vector<2x32xf32> -> vector<2x32xf32>
    %341 = arith.addf %339, %340 : vector<2x32xf32>
    %342 = vector.extract_strided_slice %27 {offsets = [14, 0], sizes = [2, 32], strides = [1, 1]} : vector<16x32xf32> to vector<2x32xf32>
    %343 = arith.addf %342, %47 : vector<2x32xf32>
    %cst_134 = arith.constant dense<0.000000e+00> : vector<2x32xf32>
    %344 = tpu.matmul %336, %65, %cst_134 {dimension_numbers = #tpu.dot_dimension_numbers<[1], [0], [0], [1], [0, 0, 1, 1], [], []>} : vector<2x32xf32>, vector<32x32xf32>, vector<2x32xf32> -> vector<2x32xf32>
    %345 = arith.addf %343, %344 : vector<2x32xf32>
    %346 = vector.extract_strided_slice %30 {offsets = [14, 0], sizes = [2, 32], strides = [1, 1]} : vector<16x32xf32> to vector<2x32xf32>
    %347 = arith.addf %346, %54 : vector<2x32xf32>
    %cst_135 = arith.constant dense<0.000000e+00> : vector<2x32xf32>
    %348 = tpu.matmul %336, %67, %cst_135 {dimension_numbers = #tpu.dot_dimension_numbers<[1], [0], [0], [1], [0, 0, 1, 1], [], []>} : vector<2x32xf32>, vector<32x32xf32>, vector<2x32xf32> -> vector<2x32xf32>
    %349 = arith.addf %347, %348 : vector<2x32xf32>
    %350 = vector.extract_strided_slice %33 {offsets = [14, 0], sizes = [2, 32], strides = [1, 1]} : vector<16x32xf32> to vector<2x32xf32>
    %351 = arith.addf %350, %61 : vector<2x32xf32>
    %cst_136 = arith.constant dense<0.000000e+00> : vector<2x32xf32>
    %352 = tpu.matmul %336, %69, %cst_136 {dimension_numbers = #tpu.dot_dimension_numbers<[1], [0], [0], [1], [0, 0, 1, 1], [], []>} : vector<2x32xf32>, vector<32x32xf32>, vector<2x32xf32> -> vector<2x32xf32>
    %353 = arith.addf %351, %352 : vector<2x32xf32>
    %354 = arith.negf %341 : vector<2x32xf32>
    %355 = math.exp %354 : vector<2x32xf32>
    %cst_137 = arith.constant 1.000000e+00 : f32
    %356 = vector.broadcast %cst_137 : f32 to vector<2x32xf32>
    %357 = arith.addf %356, %355 : vector<2x32xf32>
    %358 = arith.divf %356, %357 : vector<2x32xf32>
    %359 = arith.negf %345 : vector<2x32xf32>
    %360 = math.exp %359 : vector<2x32xf32>
    %cst_138 = arith.constant 1.000000e+00 : f32
    %361 = vector.broadcast %cst_138 : f32 to vector<2x32xf32>
    %362 = arith.addf %361, %360 : vector<2x32xf32>
    %363 = arith.divf %361, %362 : vector<2x32xf32>
    %364 = math.tanh %349 : vector<2x32xf32>
    %365 = arith.negf %353 : vector<2x32xf32>
    %366 = math.exp %365 : vector<2x32xf32>
    %cst_139 = arith.constant 1.000000e+00 : f32
    %367 = vector.broadcast %cst_139 : f32 to vector<2x32xf32>
    %368 = arith.addf %367, %366 : vector<2x32xf32>
    %369 = arith.divf %367, %368 : vector<2x32xf32>
    %370 = arith.mulf %363, %334 : vector<2x32xf32>
    %371 = arith.mulf %358, %364 : vector<2x32xf32>
    %372 = arith.addf %370, %371 : vector<2x32xf32>
    %373 = math.tanh %372 : vector<2x32xf32>
    %374 = arith.mulf %369, %373 : vector<2x32xf32>
    %c14 = arith.constant 14 : index
    %c0_140 = arith.constant 0 : index
    %375 = vector.load %arg14[%c14, %c0_140] : memref<16x32xf32, #tpu.memory_space<vmem>>, vector<2x32xf32>
    tpu.vector_store %arg14[%c14, %c0_140], %374 {strides = array<i32>} : memref<16x32xf32, #tpu.memory_space<vmem>>, vector<2x32xf32>,
    %c0_141 = arith.constant 0 : index
    %c0_142 = arith.constant 0 : index
    %376 = vector.load %arg14[%c0_141, %c0_142] : memref<16x32xf32, #tpu.memory_space<vmem>>, vector<16x32xf32>
    %c0_143 = arith.constant 0 : index
    %c0_144 = arith.constant 0 : index
    %377 = vector.load %arg11[%c0_143, %c0_144] : memref<32x128xf32, #tpu.memory_space<vmem>>, vector<32x128xf32>
    %cst_145 = arith.constant dense<0.000000e+00> : vector<16x128xf32>
    %378 = tpu.matmul %376, %377, %cst_145 {dimension_numbers = #tpu.dot_dimension_numbers<[1], [0], [0], [1], [0, 0, 1, 1], [], []>} : vector<16x32xf32>, vector<32x128xf32>, vector<16x128xf32> -> vector<16x128xf32>
    %c0_146 = arith.constant 0 : index
    %c0_147 = arith.constant 0 : index
    %379 = vector.load %arg12[%c0_146, %c0_147] : memref<1x128xf32, #tpu.memory_space<vmem>>, vector<1x128xf32>
    %380 = vector.broadcast %379 : vector<1x128xf32> to vector<16x128xf32>
    %381 = arith.addf %378, %380 : vector<16x128xf32>
    %c0_148 = arith.constant 0 : index
    %c0_149 = arith.constant 0 : index
    %382 = vector.load %arg13[%c0_148, %c0_149] : memref<16x128xf32, #tpu.memory_space<vmem>>, vector<16x128xf32>
    tpu.vector_store %arg13[%c0_148, %c0_149], %381 {strides = array<i32>} : memref<16x128xf32, #tpu.memory_space<vmem>>, vector<16x128xf32>,
    return
  }
}

</mosaic_0001>

<llo_original>
// kernel: image_captioning_forward.1
$region0: #{image_captioning_forward.1}
  #allocation0 [shape = 'u32[]', space=smem, size = 0x4, offset = 0x4, fixed_abs, tag = 'smem constant byte address 0x4 - core index']
  #allocation1 [shape = 'u32[144,128]{1,0:T(1,128)}', space=vmem, size = 0x12000, scoped, tag = 'internal scratch']
  #allocation2 [shape = 'f32[16,32]{1,0:T(8,128)}', space=vmem, size = 0x2000, scoped, tag = 'scratch operand']
  %s0 = inlined_call_operand.vmem [shape: f32[2,3,256], index: 0, kind: input, shape index: {}]
  %s1 = inlined_call_operand.vmem [shape: s32[16,1], index: 1, kind: input, shape index: {}]
  %s2 = inlined_call_operand.vmem [shape: f32[3,512], index: 2, kind: input, shape index: {}]
  %s3 = inlined_call_operand.vmem [shape: f32[1,512], index: 3, kind: input, shape index: {}]
  %s4 = inlined_call_operand.vmem [shape: f32[64,32], index: 4, kind: input, shape index: {}]
  %s5 = inlined_call_operand.vmem [shape: f32[512,32], index: 5, kind: input, shape index: {}]
  %s6 = inlined_call_operand.vmem [shape: f32[32,32], index: 6, kind: input, shape index: {}]
  %s7 = inlined_call_operand.vmem [shape: f32[1,32], index: 7, kind: input, shape index: {}]
  %s8 = inlined_call_operand.vmem [shape: f32[4,32,32], index: 8, kind: input, shape index: {}]
  %s9 = inlined_call_operand.vmem [shape: f32[4,32,32], index: 9, kind: input, shape index: {}]
  %s10 = inlined_call_operand.vmem [shape: f32[4,1,32], index: 10, kind: input, shape index: {}]
  %s11 = inlined_call_operand.vmem [shape: f32[32,128], index: 11, kind: input, shape index: {}]
  %s12 = inlined_call_operand.vmem [shape: f32[1,128], index: 12, kind: input, shape index: {}]
  %s13 = inlined_call_operand.vmem [shape: f32[16,128], index: 13, kind: output, shape index: {}]
  %s14 = sld [smem:[#allocation0]]
  $region62: #{image_captioning_forward.1} parent=0
    _
  %s16 = ssub.s32 1, %s14
  %s17 = scalar_select 0, %s16, %s14
  // Predicated region
  $region2: #{image_captioning_forward.1} parent=0 // pred_check
    _
  $region3: #{image_captioning_forward.1} parent=0 // pred_check_branch
    %19 = sbr.rel (0) target = $region5
  $region4: #{image_captioning_forward.1} parent=0 // pred_region
    _
  $region5: #{image_captioning_forward.1} parent=0 // pred_fallthru
    _
  // Predicated region
  $region6: #{image_captioning_forward.1} parent=0 // pred_check
    _
  $region7: #{image_captioning_forward.1} parent=0 // pred_check_branch
    %21 = sbr.rel (0) target = $region9
  $region8: #{image_captioning_forward.1} parent=0 // pred_region
    _
  $region9: #{image_captioning_forward.1} parent=0 // pred_fallthru
    _
  // Predicated region
  $region10: #{image_captioning_forward.1} parent=0 // pred_check
    _
  $region11: #{image_captioning_forward.1} parent=0 // pred_check_branch
    %23 = sbr.rel (0) target = $region13
  $region12: #{image_captioning_forward.1} parent=0 // pred_region
    _
  $region13: #{image_captioning_forward.1} parent=0 // pred_fallthru
    _
  // Predicated region
  $region14: #{image_captioning_forward.1} parent=0 // pred_check
    _
  $region15: #{image_captioning_forward.1} parent=0 // pred_check_branch
    %25 = sbr.rel (0) target = $region17
  $region16: #{image_captioning_forward.1} parent=0 // pred_region
    _
  $region17: #{image_captioning_forward.1} parent=0 // pred_fallthru
    _
  // Predicated region
  $region18: #{image_captioning_forward.1} parent=0 // pred_check
    _
  $region19: #{image_captioning_forward.1} parent=0 // pred_check_branch
    %27 = sbr.rel (0) target = $region21
  $region20: #{image_captioning_forward.1} parent=0 // pred_region
    _
  $region21: #{image_captioning_forward.1} parent=0 // pred_fallthru
    _
  // Predicated region
  $region22: #{image_captioning_forward.1} parent=0 // pred_check
    _
  $region23: #{image_captioning_forward.1} parent=0 // pred_check_branch
    %29 = sbr.rel (0) target = $region25
  $region24: #{image_captioning_forward.1} parent=0 // pred_region
    _
  $region25: #{image_captioning_forward.1} parent=0 // pred_fallthru
    _
  // Predicated region
  $region26: #{image_captioning_forward.1} parent=0 // pred_check
    _
  $region27: #{image_captioning_forward.1} parent=0 // pred_check_branch
    %31 = sbr.rel (0) target = $region29
  $region28: #{image_captioning_forward.1} parent=0 // pred_region
    _
  $region29: #{image_captioning_forward.1} parent=0 // pred_fallthru
    _
  // Predicated region
  $region30: #{image_captioning_forward.1} parent=0 // pred_check
    _
  $region31: #{image_captioning_forward.1} parent=0 // pred_check_branch
    %33 = sbr.rel (0) target = $region33
  $region32: #{image_captioning_forward.1} parent=0 // pred_region
    _
  $region33: #{image_captioning_forward.1} parent=0 // pred_fallthru
    _
  // Predicated region
  $region34: #{image_captioning_forward.1} parent=0 // pred_check
    _
  $region35: #{image_captioning_forward.1} parent=0 // pred_check_branch
    %35 = sbr.rel (0) target = $region37
  $region36: #{image_captioning_forward.1} parent=0 // pred_region
    _
  $region37: #{image_captioning_forward.1} parent=0 // pred_fallthru
    _
  // Predicated region
  $region38: #{image_captioning_forward.1} parent=0 // pred_check
    _
  $region39: #{image_captioning_forward.1} parent=0 // pred_check_branch
    %37 = sbr.rel (0) target = $region41
  $region40: #{image_captioning_forward.1} parent=0 // pred_region
    _
  $region41: #{image_captioning_forward.1} parent=0 // pred_fallthru
    _
  // Predicated region
  $region42: #{image_captioning_forward.1} parent=0 // pred_check
    _
  $region43: #{image_captioning_forward.1} parent=0 // pred_check_branch
    %39 = sbr.rel (0) target = $region45
  $region44: #{image_captioning_forward.1} parent=0 // pred_region
    _
  $region45: #{image_captioning_forward.1} parent=0 // pred_fallthru
    _
  // Predicated region
  $region46: #{image_captioning_forward.1} parent=0 // pred_check
    _
  $region47: #{image_captioning_forward.1} parent=0 // pred_check_branch
    %41 = sbr.rel (0) target = $region49
  $region48: #{image_captioning_forward.1} parent=0 // pred_region
    _
  $region49: #{image_captioning_forward.1} parent=0 // pred_fallthru
    _
  // Predicated region
  $region50: #{image_captioning_forward.1} parent=0 // pred_check
    _
  $region51: #{image_captioning_forward.1} parent=0 // pred_check_branch
    %43 = sbr.rel (0) target = $region53
  $region52: #{image_captioning_forward.1} parent=0 // pred_region
    _
  $region53: #{image_captioning_forward.1} parent=0 // pred_fallthru
    _
  %v44 = vld [vmem:[%s0] sm:$0x77]
  %v45 = vld [vmem:[%s0 + $0x8] sm:$0x77]
  %v48 = vcombine.high %v44, %v44
  %v49 = vcombine.high %v45, %v45
  %vm52 = vcmask 1042432
  %v53 = vsel %vm52, %v44, 0.0
  %v54 = vsel %vm52, %v48, 0.0
  %v55 = vadd.f32 %v53, %v54
  %56 = vadd.xlane.f32.xlu0 %v55
  %v57 = vpop.xlane.xlu0 %56
  %v58 = vsel %vm52, %v45, 0.0
  %v59 = vsel %vm52, %v49, 0.0
  %v60 = vadd.f32 %v58, %v59
  %61 = vadd.xlane.f32.xlu0 %v60
  %v62 = vpop.xlane.xlu0 %61
  %v63 = vld [vmem:[%s2] sm:$0x77]
  %v64 = vld [vmem:[%s2 + $0x8] sm:$0x77]
  %v65 = vld [vmem:[%s3] sm:$0xf]
  %v67 = vlaneseq
  %v68 = vshrl.u32 %v67, 7
  %v69 = vsub.s32 0, %v68
  %v70 = vrot.slane %v65, %v69
  %v71 = vlaneseq
  %v72 = vshrl.u32 %v71, 7
  %v73 = vsub.s32 1, %v72
  %v74 = vrot.slane %v65, %v73
  %v75 = vlaneseq
  %v76 = vshrl.u32 %v75, 7
  %v77 = vsub.s32 2, %v76
  %v78 = vrot.slane %v65, %v77
  %v79 = vlaneseq
  %v80 = vshrl.u32 %v79, 7
  %v81 = vsub.s32 3, %v80
  %v82 = vrot.slane %v65, %v81
  %v89 = vlaneseq
  %v90 = vand.u32 %v89, 127
  %v91 = vlaneseq
  %v92 = vshrl.u32 %v91, 7
  %v93 = vsub.s32 %v90, %v92
  %v94 = vrot.slane %v57, %v93
  %v95 = vlaneseq
  %v96 = vshrl.u32 %v95, 7
  %v97 = vsub.s32 %v90, %v96
  %v98 = vrot.slane %v62, %v97
  %vm99 = vcmask 1041409
  %v100 = vsel %vm99, %v98, %v94
  %v103 = vcombine.high %v63, %v63
  %v104 = vcombine.high %v64, %v64
  %vm105 = vcmask 23552
  %v106 = vsel %vm105, %v100, 0
  %v108 = vsel %vm52, %v63, 0
  %v110 = vsel %vm52, %v103, 0
  %v112 = vsel %vm52, %v64, 0
  %v114 = vsel %vm52, %v104, 0
  %116 = vmatprep.subr.mxu0 0.0
  %117 = vmatpush1.msra.mxu0 0.0
  %118 = vmatprep.subr.mxu0 0.0
  %119 = vmatpush1.msra.mxu0 0.0
  %120 = vmatprep.subr.mxu0 0.0
  %121 = vmatpush1.msra.mxu0 0.0
  %122 = vmatprep.subr.mxu0 0.0
  %123 = vmatpush1.msra.mxu0 0.0
  %124 = vmatprep.subr.mxu0 0.0
  %125 = vmatpush1.msra.mxu0 0.0
  %126 = vmatprep.subr.mxu0 0.0
  %127 = vmatpush1.msra.mxu0 0.0
  %128 = vmatprep.subr.mxu0 0.0
  %129 = vmatpush1.msra.mxu0 0.0
  %130 = vmatprep.subr.mxu0 0.0
  %131 = vmatpush1.msra.mxu0 0.0
  %132 = vmatprep.subr.mxu0 0.0
  %133 = vmatpush1.msra.mxu0 0.0
  %134 = vmatprep.subr.mxu0 0.0
  %135 = vmatpush1.msra.mxu0 0.0
  %136 = vmatprep.subr.mxu0 0.0
  %137 = vmatpush1.msra.mxu0 0.0
  %138 = vmatprep.subr.mxu0 0.0
  %139 = vmatpush1.msra.mxu0 0.0
  %140 = vmatprep.subr.mxu0 0.0
  %141 = vmatpush1.msra.mxu0 0.0
  %142 = vmatprep.subr.mxu0 0.0
  %143 = vmatpush1.msra.mxu0 0.0
  %144 = vmatprep.subr.mxu0 0.0
  %145 = vmatpush1.msra.mxu0 0.0
  %146 = vmatprep.subr.mxu0 %v110
  %147 = vmatpush1.msra.mxu0 %v108
  %148 = vmatprep.subr.mxu0 0.0
  %149 = vmatpush2.msra.mxu0 0.0
  %150 = vmatprep.subr.mxu0 0.0
  %151 = vmatpush2.msra.mxu0 0.0
  %152 = vmatprep.subr.mxu0 0.0
  %153 = vmatpush2.msra.mxu0 0.0
  %154 = vmatprep.subr.mxu0 0.0
  %155 = vmatpush2.msra.mxu0 0.0
  %156 = vmatprep.subr.mxu0 0.0
  %157 = vmatpush2.msra.mxu0 0.0
  %158 = vmatprep.subr.mxu0 0.0
  %159 = vmatpush2.msra.mxu0 0.0
  %160 = vmatprep.subr.mxu0 0.0
  %161 = vmatpush2.msra.mxu0 0.0
  %162 = vmatprep.subr.mxu0 0.0
  %163 = vmatpush2.msra.mxu0 0.0
  %164 = vmatprep.subr.mxu0 0.0
  %165 = vmatpush2.msra.mxu0 0.0
  %166 = vmatprep.subr.mxu0 0.0
  %167 = vmatpush2.msra.mxu0 0.0
  %168 = vmatprep.subr.mxu0 0.0
  %169 = vmatpush2.msra.mxu0 0.0
  %170 = vmatprep.subr.mxu0 0.0
  %171 = vmatpush2.msra.mxu0 0.0
  %172 = vmatprep.subr.mxu0 0.0
  %173 = vmatpush2.msra.mxu0 0.0
  %174 = vmatprep.subr.mxu0 0.0
  %175 = vmatpush2.msra.mxu0 0.0
  %176 = vmatprep.subr.mxu0 0.0
  %177 = vmatpush2.msra.mxu0 0.0
  %178 = vmatprep.subr.mxu0 0.0
  %179 = vmatpush2.msra.mxu0 0.0
  %180 = vmatprep.mubr.f32.mxu0 0.0
  %181 = vmatmul.mubr.f32.gmra.mxu0 %v106
  %v182 = vpop.f32.mrf.mxu0
  %v183 = vadd.f32 %v70, %v182
  %v184 = vpop.f32.mrf.mxu0
  %v185 = vadd.f32 %v74, %v184
  %186 = vdwg.mxu0
  %187 = vmatprep.subr.mxu0 0.0
  %188 = vmatpush1.msra.mxu0 0.0
  %189 = vmatprep.subr.mxu0 0.0
  %190 = vmatpush1.msra.mxu0 0.0
  %191 = vmatprep.subr.mxu0 0.0
  %192 = vmatpush1.msra.mxu0 0.0
  %193 = vmatprep.subr.mxu0 0.0
  %194 = vmatpush1.msra.mxu0 0.0
  %195 = vmatprep.subr.mxu0 0.0
  %196 = vmatpush1.msra.mxu0 0.0
  %197 = vmatprep.subr.mxu0 0.0
  %198 = vmatpush1.msra.mxu0 0.0
  %199 = vmatprep.subr.mxu0 0.0
  %200 = vmatpush1.msra.mxu0 0.0
  %201 = vmatprep.subr.mxu0 0.0
  %202 = vmatpush1.msra.mxu0 0.0
  %203 = vmatprep.subr.mxu0 0.0
  %204 = vmatpush1.msra.mxu0 0.0
  %205 = vmatprep.subr.mxu0 0.0
  %206 = vmatpush1.msra.mxu0 0.0
  %207 = vmatprep.subr.mxu0 0.0
  %208 = vmatpush1.msra.mxu0 0.0
  %209 = vmatprep.subr.mxu0 0.0
  %210 = vmatpush1.msra.mxu0 0.0
  %211 = vmatprep.subr.mxu0 0.0
  %212 = vmatpush1.msra.mxu0 0.0
  %213 = vmatprep.subr.mxu0 0.0
  %214 = vmatpush1.msra.mxu0 0.0
  %215 = vmatprep.subr.mxu0 0.0
  %216 = vmatpush1.msra.mxu0 0.0
  %217 = vmatprep.subr.mxu0 %v114
  %218 = vmatpush1.msra.mxu0 %v112
  %219 = vmatprep.subr.mxu0 0.0
  %220 = vmatpush2.msra.mxu0 0.0
  %221 = vmatprep.subr.mxu0 0.0
  %222 = vmatpush2.msra.mxu0 0.0
  %223 = vmatprep.subr.mxu0 0.0
  %224 = vmatpush2.msra.mxu0 0.0
  %225 = vmatprep.subr.mxu0 0.0
  %226 = vmatpush2.msra.mxu0 0.0
  %227 = vmatprep.subr.mxu0 0.0
  %228 = vmatpush2.msra.mxu0 0.0
  %229 = vmatprep.subr.mxu0 0.0
  %230 = vmatpush2.msra.mxu0 0.0
  %231 = vmatprep.subr.mxu0 0.0
  %232 = vmatpush2.msra.mxu0 0.0
  %233 = vmatprep.subr.mxu0 0.0
  %234 = vmatpush2.msra.mxu0 0.0
  %235 = vmatprep.subr.mxu0 0.0
  %236 = vmatpush2.msra.mxu0 0.0
  %237 = vmatprep.subr.mxu0 0.0
  %238 = vmatpush2.msra.mxu0 0.0
  %239 = vmatprep.subr.mxu0 0.0
  %240 = vmatpush2.msra.mxu0 0.0
  %241 = vmatprep.subr.mxu0 0.0
  %242 = vmatpush2.msra.mxu0 0.0
  %243 = vmatprep.subr.mxu0 0.0
  %244 = vmatpush2.msra.mxu0 0.0
  %245 = vmatprep.subr.mxu0 0.0
  %246 = vmatpush2.msra.mxu0 0.0
  %247 = vmatprep.subr.mxu0 0.0
  %248 = vmatpush2.msra.mxu0 0.0
  %249 = vmatprep.subr.mxu0 0.0
  %250 = vmatpush2.msra.mxu0 0.0
  %251 = vmatprep.mubr.f32.mxu0 0.0
  %252 = vmatmul.mubr.f32.gmra.mxu0 %v106
  %v253 = vpop.f32.mrf.mxu0
  %v254 = vadd.f32 %v78, %v253
  %v255 = vpop.f32.mrf.mxu0
  %v256 = vadd.f32 %v82, %v255
  %257 = vdwg.mxu0
  %v258 = vld [vmem:[%s5] sm:$0xff]
  %v259 = vld [vmem:[%s5 + $0x8] sm:$0xff]
  %v260 = vld [vmem:[%s5 + $0x10] sm:$0xff]
  %v261 = vld [vmem:[%s5 + $0x18] sm:$0xff]
  %v262 = vld [vmem:[%s5 + $0x20] sm:$0xff]
  %v263 = vld [vmem:[%s5 + $0x28] sm:$0xff]
  %v264 = vld [vmem:[%s5 + $0x30] sm:$0xff]
  %v265 = vld [vmem:[%s5 + $0x38] sm:$0xff]
  %v266 = vld [vmem:[%s5 + $0x40] sm:$0xff]
  %v267 = vld [vmem:[%s5 + $0x48] sm:$0xff]
  %v268 = vld [vmem:[%s5 + $0x50] sm:$0xff]
  %v269 = vld [vmem:[%s5 + $0x58] sm:$0xff]
  %v270 = vld [vmem:[%s5 + $0x60] sm:$0xff]
  %v271 = vld [vmem:[%s5 + $0x68] sm:$0xff]
  %v272 = vld [vmem:[%s5 + $0x70] sm:$0xff]
  %v273 = vld [vmem:[%s5 + $0x78] sm:$0xff]
  %v274 = vld [vmem:[%s5 + $0x80] sm:$0xff]
  %v275 = vld [vmem:[%s5 + $0x88] sm:$0xff]
  %v276 = vld [vmem:[%s5 + $0x90] sm:$0xff]
  %v277 = vld [vmem:[%s5 + $0x98] sm:$0xff]
  %v278 = vld [vmem:[%s5 + $0xa0] sm:$0xff]
  %v279 = vld [vmem:[%s5 + $0xa8] sm:$0xff]
  %v280 = vld [vmem:[%s5 + $0xb0] sm:$0xff]
  %v281 = vld [vmem:[%s5 + $0xb8] sm:$0xff]
  %v282 = vld [vmem:[%s5 + $0xc0] sm:$0xff]
  %v283 = vld [vmem:[%s5 + $0xc8] sm:$0xff]
  %v284 = vld [vmem:[%s5 + $0xd0] sm:$0xff]
  %v285 = vld [vmem:[%s5 + $0xd8] sm:$0xff]
  %v286 = vld [vmem:[%s5 + $0xe0] sm:$0xff]
  %v287 = vld [vmem:[%s5 + $0xe8] sm:$0xff]
  %v288 = vld [vmem:[%s5 + $0xf0] sm:$0xff]
  %v289 = vld [vmem:[%s5 + $0xf8] sm:$0xff]
  %v290 = vld [vmem:[%s5 + $0x100] sm:$0xff]
  %v291 = vld [vmem:[%s5 + $0x108] sm:$0xff]
  %v292 = vld [vmem:[%s5 + $0x110] sm:$0xff]
  %v293 = vld [vmem:[%s5 + $0x118] sm:$0xff]
  %v294 = vld [vmem:[%s5 + $0x120] sm:$0xff]
  %v295 = vld [vmem:[%s5 + $0x128] sm:$0xff]
  %v296 = vld [vmem:[%s5 + $0x130] sm:$0xff]
  %v297 = vld [vmem:[%s5 + $0x138] sm:$0xff]
  %v298 = vld [vmem:[%s5 + $0x140] sm:$0xff]
  %v299 = vld [vmem:[%s5 + $0x148] sm:$0xff]
  %v300 = vld [vmem:[%s5 + $0x150] sm:$0xff]
  %v301 = vld [vmem:[%s5 + $0x158] sm:$0xff]
  %v302 = vld [vmem:[%s5 + $0x160] sm:$0xff]
  %v303 = vld [vmem:[%s5 + $0x168] sm:$0xff]
  %v304 = vld [vmem:[%s5 + $0x170] sm:$0xff]
  %v305 = vld [vmem:[%s5 + $0x178] sm:$0xff]
  %v306 = vld [vmem:[%s5 + $0x180] sm:$0xff]
  %v307 = vld [vmem:[%s5 + $0x188] sm:$0xff]
  %v308 = vld [vmem:[%s5 + $0x190] sm:$0xff]
  %v309 = vld [vmem:[%s5 + $0x198] sm:$0xff]
  %v310 = vld [vmem:[%s5 + $0x1a0] sm:$0xff]
  %v311 = vld [vmem:[%s5 + $0x1a8] sm:$0xff]
  %v312 = vld [vmem:[%s5 + $0x1b0] sm:$0xff]
  %v313 = vld [vmem:[%s5 + $0x1b8] sm:$0xff]
  %v314 = vld [vmem:[%s5 + $0x1c0] sm:$0xff]
  %v315 = vld [vmem:[%s5 + $0x1c8] sm:$0xff]
  %v316 = vld [vmem:[%s5 + $0x1d0] sm:$0xff]
  %v317 = vld [vmem:[%s5 + $0x1d8] sm:$0xff]
  %v318 = vld [vmem:[%s5 + $0x1e0] sm:$0xff]
  %v319 = vld [vmem:[%s5 + $0x1e8] sm:$0xff]
  %v320 = vld [vmem:[%s5 + $0x1f0] sm:$0xff]
  %v321 = vld [vmem:[%s5 + $0x1f8] sm:$0xff]
  %v322 = vld [vmem:[%s7] sm:$0x1]
  %v324 = vlaneseq
  %v325 = vshrl.u32 %v324, 7
  %v326 = vsub.s32 0, %v325
  %v327 = vrot.slane %v322, %v326
  %329 = vmatprep.subr.mxu0 0.0
  %330 = vmatpush1.msra.mxu0 %v273
  %331 = vmatprep.subr.mxu0 0.0
  %332 = vmatpush1.msra.mxu0 %v272
  %333 = vmatprep.subr.mxu0 0.0
  %334 = vmatpush1.msra.mxu0 %v271
  %335 = vmatprep.subr.mxu0 0.0
  %336 = vmatpush1.msra.mxu0 %v270
  %337 = vmatprep.subr.mxu0 0.0
  %338 = vmatpush1.msra.mxu0 %v269
  %339 = vmatprep.subr.mxu0 0.0
  %340 = vmatpush1.msra.mxu0 %v268
  %341 = vmatprep.subr.mxu0 0.0
  %342 = vmatpush1.msra.mxu0 %v267
  %343 = vmatprep.subr.mxu0 0.0
  %344 = vmatpush1.msra.mxu0 %v266
  %345 = vmatprep.subr.mxu0 0.0
  %346 = vmatpush1.msra.mxu0 %v265
  %347 = vmatprep.subr.mxu0 0.0
  %348 = vmatpush1.msra.mxu0 %v264
  %349 = vmatprep.subr.mxu0 0.0
  %350 = vmatpush1.msra.mxu0 %v263
  %351 = vmatprep.subr.mxu0 0.0
  %352 = vmatpush1.msra.mxu0 %v262
  %353 = vmatprep.subr.mxu0 0.0
  %354 = vmatpush1.msra.mxu0 %v261
  %355 = vmatprep.subr.mxu0 0.0
  %356 = vmatpush1.msra.mxu0 %v260
  %357 = vmatprep.subr.mxu0 0.0
  %358 = vmatpush1.msra.mxu0 %v259
  %359 = vmatprep.subr.mxu0 0.0
  %360 = vmatpush1.msra.mxu0 %v258
  %361 = vmatprep.subr.mxu0 0.0
  %362 = vmatpush2.msra.mxu0 %v289
  %363 = vmatprep.subr.mxu0 0.0
  %364 = vmatpush2.msra.mxu0 %v288
  %365 = vmatprep.subr.mxu0 0.0
  %366 = vmatpush2.msra.mxu0 %v287
  %367 = vmatprep.subr.mxu0 0.0
  %368 = vmatpush2.msra.mxu0 %v286
  %369 = vmatprep.subr.mxu0 0.0
  %370 = vmatpush2.msra.mxu0 %v285
  %371 = vmatprep.subr.mxu0 0.0
  %372 = vmatpush2.msra.mxu0 %v284
  %373 = vmatprep.subr.mxu0 0.0
  %374 = vmatpush2.msra.mxu0 %v283
  %375 = vmatprep.subr.mxu0 0.0
  %376 = vmatpush2.msra.mxu0 %v282
  %377 = vmatprep.subr.mxu0 0.0
  %378 = vmatpush2.msra.mxu0 %v281
  %379 = vmatprep.subr.mxu0 0.0
  %380 = vmatpush2.msra.mxu0 %v280
  %381 = vmatprep.subr.mxu0 0.0
  %382 = vmatpush2.msra.mxu0 %v279
  %383 = vmatprep.subr.mxu0 0.0
  %384 = vmatpush2.msra.mxu0 %v278
  %385 = vmatprep.subr.mxu0 0.0
  %386 = vmatpush2.msra.mxu0 %v277
  %387 = vmatprep.subr.mxu0 0.0
  %388 = vmatpush2.msra.mxu0 %v276
  %389 = vmatprep.subr.mxu0 0.0
  %390 = vmatpush2.msra.mxu0 %v275
  %391 = vmatprep.subr.mxu0 0.0
  %392 = vmatpush2.msra.mxu0 %v274
  %393 = vmatprep.mubr.f32.mxu0 %v185
  %394 = vmatmul.mubr.f32.gmra.mxu0 %v183
  %v395 = vpop.f32.mrf.mxu0
  %v396 = vadd.f32 %v327, %v395
  %v397 = vpop.f32.mrf.mxu0
  %398 = vdwg.mxu0
  %399 = vmatprep.subr.mxu0 0.0
  %400 = vmatpush1.msra.mxu0 %v305
  %401 = vmatprep.subr.mxu0 0.0
  %402 = vmatpush1.msra.mxu0 %v304
  %403 = vmatprep.subr.mxu0 0.0
  %404 = vmatpush1.msra.mxu0 %v303
  %405 = vmatprep.subr.mxu0 0.0
  %406 = vmatpush1.msra.mxu0 %v302
  %407 = vmatprep.subr.mxu0 0.0
  %408 = vmatpush1.msra.mxu0 %v301
  %409 = vmatprep.subr.mxu0 0.0
  %410 = vmatpush1.msra.mxu0 %v300
  %411 = vmatprep.subr.mxu0 0.0
  %412 = vmatpush1.msra.mxu0 %v299
  %413 = vmatprep.subr.mxu0 0.0
  %414 = vmatpush1.msra.mxu0 %v298
  %415 = vmatprep.subr.mxu0 0.0
  %416 = vmatpush1.msra.mxu0 %v297
  %417 = vmatprep.subr.mxu0 0.0
  %418 = vmatpush1.msra.mxu0 %v296
  %419 = vmatprep.subr.mxu0 0.0
  %420 = vmatpush1.msra.mxu0 %v295
  %421 = vmatprep.subr.mxu0 0.0
  %422 = vmatpush1.msra.mxu0 %v294
  %423 = vmatprep.subr.mxu0 0.0
  %424 = vmatpush1.msra.mxu0 %v293
  %425 = vmatprep.subr.mxu0 0.0
  %426 = vmatpush1.msra.mxu0 %v292
  %427 = vmatprep.subr.mxu0 0.0
  %428 = vmatpush1.msra.mxu0 %v291
  %429 = vmatprep.subr.mxu0 0.0
  %430 = vmatpush1.msra.mxu0 %v290
  %431 = vmatprep.subr.mxu0 0.0
  %432 = vmatpush2.msra.mxu0 %v321
  %433 = vmatprep.subr.mxu0 0.0
  %434 = vmatpush2.msra.mxu0 %v320
  %435 = vmatprep.subr.mxu0 0.0
  %436 = vmatpush2.msra.mxu0 %v319
  %437 = vmatprep.subr.mxu0 0.0
  %438 = vmatpush2.msra.mxu0 %v318
  %439 = vmatprep.subr.mxu0 0.0
  %440 = vmatpush2.msra.mxu0 %v317
  %441 = vmatprep.subr.mxu0 0.0
  %442 = vmatpush2.msra.mxu0 %v316
  %443 = vmatprep.subr.mxu0 0.0
  %444 = vmatpush2.msra.mxu0 %v315
  %445 = vmatprep.subr.mxu0 0.0
  %446 = vmatpush2.msra.mxu0 %v314
  %447 = vmatprep.subr.mxu0 0.0
  %448 = vmatpush2.msra.mxu0 %v313
  %449 = vmatprep.subr.mxu0 0.0
  %450 = vmatpush2.msra.mxu0 %v312
  %451 = vmatprep.subr.mxu0 0.0
  %452 = vmatpush2.msra.mxu0 %v311
  %453 = vmatprep.subr.mxu0 0.0
  %454 = vmatpush2.msra.mxu0 %v310
  %455 = vmatprep.subr.mxu0 0.0
  %456 = vmatpush2.msra.mxu0 %v309
  %457 = vmatprep.subr.mxu0 0.0
  %458 = vmatpush2.msra.mxu0 %v308
  %459 = vmatprep.subr.mxu0 0.0
  %460 = vmatpush2.msra.mxu0 %v307
  %461 = vmatprep.subr.mxu0 0.0
  %462 = vmatpush2.msra.mxu0 %v306
  %463 = vmatprep.mubr.f32.mxu0 %v256
  %464 = vmatmul.mubr.f32.gmra.mxu0 %v254
  %v465 = vpop.f32.mrf.mxu0
  %v466 = vadd.f32 %v396, %v465
  %v467 = vpop.f32.mrf.mxu0
  %468 = vdwg.mxu0
  %v469 = vld [vmem:[%s1] sm:$0xff]
  %v470 = vld [vmem:[%s1 + $0x8] sm:$0xff]
  %471 = vset.pattern.permute.xlu0 0
  %472 = vperm.xlu0 %471, %v469
  %v473 = vpop.permute.xlu0 %472
  %474 = vset.pattern.permute.xlu0 0
  %475 = vperm.xlu0 %474, %v470
  %v476 = vpop.permute.xlu0 %475
  %vm477 = vcmp.eq.s32.totalorder %v473, %v90
  %vm478 = vcmp.eq.s32.totalorder %v476, %v90
  %v479 = vsel %vm477, 1, 0
  %v480 = vsel %vm478, 1, 0
  %v481 = vcvt.s32.f32 %v479
  %v482 = vcvt.s32.f32 %v480
  %v483 = vld [vmem:[%s4] sm:$0xff]
  %v484 = vld [vmem:[%s4 + $0x8] sm:$0xff]
  %v485 = vld [vmem:[%s4 + $0x10] sm:$0xff]
  %v486 = vld [vmem:[%s4 + $0x18] sm:$0xff]
  %v487 = vld [vmem:[%s4 + $0x20] sm:$0xff]
  %v488 = vld [vmem:[%s4 + $0x28] sm:$0xff]
  %v489 = vld [vmem:[%s4 + $0x30] sm:$0xff]
  %v490 = vld [vmem:[%s4 + $0x38] sm:$0xff]
  %vm491 = vcmask 523264
  %v493 = vsel %vm491, %v481, 0
  %v496 = vsel %vm491, %v482, 0
  %498 = vmatprep.subr.mxu0 0.0
  %499 = vmatpush1.msra.mxu0 0.0
  %500 = vmatprep.subr.mxu0 0.0
  %501 = vmatpush1.msra.mxu0 0.0
  %502 = vmatprep.subr.mxu0 0.0
  %503 = vmatpush1.msra.mxu0 0.0
  %504 = vmatprep.subr.mxu0 0.0
  %505 = vmatpush1.msra.mxu0 0.0
  %506 = vmatprep.subr.mxu0 0.0
  %507 = vmatpush1.msra.mxu0 0.0
  %508 = vmatprep.subr.mxu0 0.0
  %509 = vmatpush1.msra.mxu0 0.0
  %510 = vmatprep.subr.mxu0 0.0
  %511 = vmatpush1.msra.mxu0 0.0
  %512 = vmatprep.subr.mxu0 0.0
  %513 = vmatpush1.msra.mxu0 0.0
  %514 = vmatprep.subr.mxu0 0.0
  %515 = vmatpush1.msra.mxu0 %v490
  %516 = vmatprep.subr.mxu0 0.0
  %517 = vmatpush1.msra.mxu0 %v489
  %518 = vmatprep.subr.mxu0 0.0
  %519 = vmatpush1.msra.mxu0 %v488
  %520 = vmatprep.subr.mxu0 0.0
  %521 = vmatpush1.msra.mxu0 %v487
  %522 = vmatprep.subr.mxu0 0.0
  %523 = vmatpush1.msra.mxu0 %v486
  %524 = vmatprep.subr.mxu0 0.0
  %525 = vmatpush1.msra.mxu0 %v485
  %526 = vmatprep.subr.mxu0 0.0
  %527 = vmatpush1.msra.mxu0 %v484
  %528 = vmatprep.subr.mxu0 0.0
  %529 = vmatpush1.msra.mxu0 %v483
  %530 = vmatprep.subr.mxu0 0.0
  %531 = vmatpush2.msra.mxu0 0.0
  %532 = vmatprep.subr.mxu0 0.0
  %533 = vmatpush2.msra.mxu0 0.0
  %534 = vmatprep.subr.mxu0 0.0
  %535 = vmatpush2.msra.mxu0 0.0
  %536 = vmatprep.subr.mxu0 0.0
  %537 = vmatpush2.msra.mxu0 0.0
  %538 = vmatprep.subr.mxu0 0.0
  %539 = vmatpush2.msra.mxu0 0.0
  %540 = vmatprep.subr.mxu0 0.0
  %541 = vmatpush2.msra.mxu0 0.0
  %542 = vmatprep.subr.mxu0 0.0
  %543 = vmatpush2.msra.mxu0 0.0
  %544 = vmatprep.subr.mxu0 0.0
  %545 = vmatpush2.msra.mxu0 0.0
  %546 = vmatprep.subr.mxu0 0.0
  %547 = vmatpush2.msra.mxu0 0.0
  %548 = vmatprep.subr.mxu0 0.0
  %549 = vmatpush2.msra.mxu0 0.0
  %550 = vmatprep.subr.mxu0 0.0
  %551 = vmatpush2.msra.mxu0 0.0
  %552 = vmatprep.subr.mxu0 0.0
  %553 = vmatpush2.msra.mxu0 0.0
  %554 = vmatprep.subr.mxu0 0.0
  %555 = vmatpush2.msra.mxu0 0.0
  %556 = vmatprep.subr.mxu0 0.0
  %557 = vmatpush2.msra.mxu0 0.0
  %558 = vmatprep.subr.mxu0 0.0
  %559 = vmatpush2.msra.mxu0 0.0
  %560 = vmatprep.subr.mxu0 0.0
  %561 = vmatpush2.msra.mxu0 0.0
  %562 = vmatprep.mubr.f32.mxu0 0.0
  %563 = vmatmul.mubr.f32.gmra.mxu0 %v493
  %v564 = vpop.f32.mrf.mxu0
  %v565 = vadd.f32 0.0, %v564
  %v566 = vpop.f32.mrf.mxu0
  %567 = vmatprep.mubr.f32.mxu0 0.0
  %568 = vmatmul.mubr.f32.gmra.mxu0 %v496
  %v569 = vpop.f32.mrf.mxu0
  %v570 = vadd.f32 0.0, %v569
  %v571 = vpop.f32.mrf.mxu0
  %572 = vdwg.mxu0
  %v573 = vld [vmem:[%s6] sm:$0xff]
  %v574 = vld [vmem:[%s6 + $0x8] sm:$0xff]
  %v575 = vld [vmem:[%s6 + $0x10] sm:$0xff]
  %v576 = vld [vmem:[%s6 + $0x18] sm:$0xff]
  %vm577 = vcmask 261120
  %v579 = vsel %vm577, %v565, 0
  %v582 = vsel %vm577, %v570, 0
  %584 = vmatprep.subr.mxu0 0.0
  %585 = vmatpush1.msra.mxu0 0.0
  %586 = vmatprep.subr.mxu0 0.0
  %587 = vmatpush1.msra.mxu0 0.0
  %588 = vmatprep.subr.mxu0 0.0
  %589 = vmatpush1.msra.mxu0 0.0
  %590 = vmatprep.subr.mxu0 0.0
  %591 = vmatpush1.msra.mxu0 0.0
  %592 = vmatprep.subr.mxu0 0.0
  %593 = vmatpush1.msra.mxu0 0.0
  %594 = vmatprep.subr.mxu0 0.0
  %595 = vmatpush1.msra.mxu0 0.0
  %596 = vmatprep.subr.mxu0 0.0
  %597 = vmatpush1.msra.mxu0 0.0
  %598 = vmatprep.subr.mxu0 0.0
  %599 = vmatpush1.msra.mxu0 0.0
  %600 = vmatprep.subr.mxu0 0.0
  %601 = vmatpush1.msra.mxu0 0.0
  %602 = vmatprep.subr.mxu0 0.0
  %603 = vmatpush1.msra.mxu0 0.0
  %604 = vmatprep.subr.mxu0 0.0
  %605 = vmatpush1.msra.mxu0 0.0
  %606 = vmatprep.subr.mxu0 0.0
  %607 = vmatpush1.msra.mxu0 0.0
  %608 = vmatprep.subr.mxu0 0.0
  %609 = vmatpush1.msra.mxu0 %v576
  %610 = vmatprep.subr.mxu0 0.0
  %611 = vmatpush1.msra.mxu0 %v575
  %612 = vmatprep.subr.mxu0 0.0
  %613 = vmatpush1.msra.mxu0 %v574
  %614 = vmatprep.subr.mxu0 0.0
  %615 = vmatpush1.msra.mxu0 %v573
  %616 = vmatprep.subr.mxu0 0.0
  %617 = vmatpush2.msra.mxu0 0.0
  %618 = vmatprep.subr.mxu0 0.0
  %619 = vmatpush2.msra.mxu0 0.0
  %620 = vmatprep.subr.mxu0 0.0
  %621 = vmatpush2.msra.mxu0 0.0
  %622 = vmatprep.subr.mxu0 0.0
  %623 = vmatpush2.msra.mxu0 0.0
  %624 = vmatprep.subr.mxu0 0.0
  %625 = vmatpush2.msra.mxu0 0.0
  %626 = vmatprep.subr.mxu0 0.0
  %627 = vmatpush2.msra.mxu0 0.0
  %628 = vmatprep.subr.mxu0 0.0
  %629 = vmatpush2.msra.mxu0 0.0
  %630 = vmatprep.subr.mxu0 0.0
  %631 = vmatpush2.msra.mxu0 0.0
  %632 = vmatprep.subr.mxu0 0.0
  %633 = vmatpush2.msra.mxu0 0.0
  %634 = vmatprep.subr.mxu0 0.0
  %635 = vmatpush2.msra.mxu0 0.0
  %636 = vmatprep.subr.mxu0 0.0
  %637 = vmatpush2.msra.mxu0 0.0
  %638 = vmatprep.subr.mxu0 0.0
  %639 = vmatpush2.msra.mxu0 0.0
  %640 = vmatprep.subr.mxu0 0.0
  %641 = vmatpush2.msra.mxu0 0.0
  %642 = vmatprep.subr.mxu0 0.0
  %643 = vmatpush2.msra.mxu0 0.0
  %644 = vmatprep.subr.mxu0 0.0
  %645 = vmatpush2.msra.mxu0 0.0
  %646 = vmatprep.subr.mxu0 0.0
  %647 = vmatpush2.msra.mxu0 0.0
  %648 = vmatprep.mubr.f32.mxu0 0.0
  %649 = vmatmul.mubr.f32.gmra.mxu0 %v579
  %v650 = vpop.f32.mrf.mxu0
  %v651 = vadd.f32 0.0, %v650
  %v652 = vpop.f32.mrf.mxu0
  %653 = vmatprep.mubr.f32.mxu0 0.0
  %654 = vmatmul.mubr.f32.gmra.mxu0 %v582
  %v655 = vpop.f32.mrf.mxu0
  %v656 = vadd.f32 0.0, %v655
  %v657 = vpop.f32.mrf.mxu0
  %658 = vdwg.mxu0
  %v659 = vld [vmem:[%s8] sm:$0xff]
  %v660 = vld [vmem:[%s8 + $0x8] sm:$0xff]
  %v661 = vld [vmem:[%s8 + $0x10] sm:$0xff]
  %v662 = vld [vmem:[%s8 + $0x18] sm:$0xff]
  %v664 = vsel %vm577, %v651, 0
  %v667 = vsel %vm577, %v656, 0
  %669 = vmatprep.subr.mxu0 0.0
  %670 = vmatpush1.msra.mxu0 0.0
  %671 = vmatprep.subr.mxu0 0.0
  %672 = vmatpush1.msra.mxu0 0.0
  %673 = vmatprep.subr.mxu0 0.0
  %674 = vmatpush1.msra.mxu0 0.0
  %675 = vmatprep.subr.mxu0 0.0
  %676 = vmatpush1.msra.mxu0 0.0
  %677 = vmatprep.subr.mxu0 0.0
  %678 = vmatpush1.msra.mxu0 0.0
  %679 = vmatprep.subr.mxu0 0.0
  %680 = vmatpush1.msra.mxu0 0.0
  %681 = vmatprep.subr.mxu0 0.0
  %682 = vmatpush1.msra.mxu0 0.0
  %683 = vmatprep.subr.mxu0 0.0
  %684 = vmatpush1.msra.mxu0 0.0
  %685 = vmatprep.subr.mxu0 0.0
  %686 = vmatpush1.msra.mxu0 0.0
  %687 = vmatprep.subr.mxu0 0.0
  %688 = vmatpush1.msra.mxu0 0.0
  %689 = vmatprep.subr.mxu0 0.0
  %690 = vmatpush1.msra.mxu0 0.0
  %691 = vmatprep.subr.mxu0 0.0
  %692 = vmatpush1.msra.mxu0 0.0
  %693 = vmatprep.subr.mxu0 0.0
  %694 = vmatpush1.msra.mxu0 %v662
  %695 = vmatprep.subr.mxu0 0.0
  %696 = vmatpush1.msra.mxu0 %v661
  %697 = vmatprep.subr.mxu0 0.0
  %698 = vmatpush1.msra.mxu0 %v660
  %699 = vmatprep.subr.mxu0 0.0
  %700 = vmatpush1.msra.mxu0 %v659
  %701 = vmatprep.subr.mxu0 0.0
  %702 = vmatpush2.msra.mxu0 0.0
  %703 = vmatprep.subr.mxu0 0.0
  %704 = vmatpush2.msra.mxu0 0.0
  %705 = vmatprep.subr.mxu0 0.0
  %706 = vmatpush2.msra.mxu0 0.0
  %707 = vmatprep.subr.mxu0 0.0
  %708 = vmatpush2.msra.mxu0 0.0
  %709 = vmatprep.subr.mxu0 0.0
  %710 = vmatpush2.msra.mxu0 0.0
  %711 = vmatprep.subr.mxu0 0.0
  %712 = vmatpush2.msra.mxu0 0.0
  %713 = vmatprep.subr.mxu0 0.0
  %714 = vmatpush2.msra.mxu0 0.0
  %715 = vmatprep.subr.mxu0 0.0
  %716 = vmatpush2.msra.mxu0 0.0
  %717 = vmatprep.subr.mxu0 0.0
  %718 = vmatpush2.msra.mxu0 0.0
  %719 = vmatprep.subr.mxu0 0.0
  %720 = vmatpush2.msra.mxu0 0.0
  %721 = vmatprep.subr.mxu0 0.0
  %722 = vmatpush2.msra.mxu0 0.0
  %723 = vmatprep.subr.mxu0 0.0
  %724 = vmatpush2.msra.mxu0 0.0
  %725 = vmatprep.subr.mxu0 0.0
  %726 = vmatpush2.msra.mxu0 0.0
  %727 = vmatprep.subr.mxu0 0.0
  %728 = vmatpush2.msra.mxu0 0.0
  %729 = vmatprep.subr.mxu0 0.0
  %730 = vmatpush2.msra.mxu0 0.0
  %731 = vmatprep.subr.mxu0 0.0
  %732 = vmatpush2.msra.mxu0 0.0
  %733 = vmatprep.mubr.f32.mxu0 0.0
  %734 = vmatmul.mubr.f32.gmra.mxu0 %v664
  %v735 = vpop.f32.mrf.mxu0
  %v736 = vadd.f32 0.0, %v735
  %v737 = vpop.f32.mrf.mxu0
  %738 = vmatprep.mubr.f32.mxu0 0.0
  %739 = vmatmul.mubr.f32.gmra.mxu0 %v667
  %v740 = vpop.f32.mrf.mxu0
  %v741 = vadd.f32 0.0, %v740
  %v742 = vpop.f32.mrf.mxu0
  %743 = vdwg.mxu0
  %s744 = scalar_lea.vmem %s8, 32
  %v745 = vld [vmem:[%s744] sm:$0xff]
  %v746 = vld [vmem:[%s744 + $0x8] sm:$0xff]
  %v747 = vld [vmem:[%s744 + $0x10] sm:$0xff]
  %v748 = vld [vmem:[%s744 + $0x18] sm:$0xff]
  %749 = vmatprep.subr.mxu0 0.0
  %750 = vmatpush1.msra.mxu0 0.0
  %751 = vmatprep.subr.mxu0 0.0
  %752 = vmatpush1.msra.mxu0 0.0
  %753 = vmatprep.subr.mxu0 0.0
  %754 = vmatpush1.msra.mxu0 0.0
  %755 = vmatprep.subr.mxu0 0.0
  %756 = vmatpush1.msra.mxu0 0.0
  %757 = vmatprep.subr.mxu0 0.0
  %758 = vmatpush1.msra.mxu0 0.0
  %759 = vmatprep.subr.mxu0 0.0
  %760 = vmatpush1.msra.mxu0 0.0
  %761 = vmatprep.subr.mxu0 0.0
  %762 = vmatpush1.msra.mxu0 0.0
  %763 = vmatprep.subr.mxu0 0.0
  %764 = vmatpush1.msra.mxu0 0.0
  %765 = vmatprep.subr.mxu0 0.0
  %766 = vmatpush1.msra.mxu0 0.0
  %767 = vmatprep.subr.mxu0 0.0
  %768 = vmatpush1.msra.mxu0 0.0
  %769 = vmatprep.subr.mxu0 0.0
  %770 = vmatpush1.msra.mxu0 0.0
  %771 = vmatprep.subr.mxu0 0.0
  %772 = vmatpush1.msra.mxu0 0.0
  %773 = vmatprep.subr.mxu0 0.0
  %774 = vmatpush1.msra.mxu0 %v748
  %775 = vmatprep.subr.mxu0 0.0
  %776 = vmatpush1.msra.mxu0 %v747
  %777 = vmatprep.subr.mxu0 0.0
  %778 = vmatpush1.msra.mxu0 %v746
  %779 = vmatprep.subr.mxu0 0.0
  %780 = vmatpush1.msra.mxu0 %v745
  %781 = vmatprep.subr.mxu0 0.0
  %782 = vmatpush2.msra.mxu0 0.0
  %783 = vmatprep.subr.mxu0 0.0
  %784 = vmatpush2.msra.mxu0 0.0
  %785 = vmatprep.subr.mxu0 0.0
  %786 = vmatpush2.msra.mxu0 0.0
  %787 = vmatprep.subr.mxu0 0.0
  %788 = vmatpush2.msra.mxu0 0.0
  %789 = vmatprep.subr.mxu0 0.0
  %790 = vmatpush2.msra.mxu0 0.0
  %791 = vmatprep.subr.mxu0 0.0
  %792 = vmatpush2.msra.mxu0 0.0
  %793 = vmatprep.subr.mxu0 0.0
  %794 = vmatpush2.msra.mxu0 0.0
  %795 = vmatprep.subr.mxu0 0.0
  %796 = vmatpush2.msra.mxu0 0.0
  %797 = vmatprep.subr.mxu0 0.0
  %798 = vmatpush2.msra.mxu0 0.0
  %799 = vmatprep.subr.mxu0 0.0
  %800 = vmatpush2.msra.mxu0 0.0
  %801 = vmatprep.subr.mxu0 0.0
  %802 = vmatpush2.msra.mxu0 0.0
  %803 = vmatprep.subr.mxu0 0.0
  %804 = vmatpush2.msra.mxu0 0.0
  %805 = vmatprep.subr.mxu0 0.0
  %806 = vmatpush2.msra.mxu0 0.0
  %807 = vmatprep.subr.mxu0 0.0
  %808 = vmatpush2.msra.mxu0 0.0
  %809 = vmatprep.subr.mxu0 0.0
  %810 = vmatpush2.msra.mxu0 0.0
  %811 = vmatprep.subr.mxu0 0.0
  %812 = vmatpush2.msra.mxu0 0.0
  %813 = vmatprep.mubr.f32.mxu0 0.0
  %814 = vmatmul.mubr.f32.gmra.mxu0 %v664
  %v815 = vpop.f32.mrf.mxu0
  %v816 = vadd.f32 0.0, %v815
  %v817 = vpop.f32.mrf.mxu0
  %818 = vmatprep.mubr.f32.mxu0 0.0
  %819 = vmatmul.mubr.f32.gmra.mxu0 %v667
  %v820 = vpop.f32.mrf.mxu0
  %v821 = vadd.f32 0.0, %v820
  %v822 = vpop.f32.mrf.mxu0
  %823 = vdwg.mxu0
  %s824 = scalar_lea.vmem %s8, 64
  %v825 = vld [vmem:[%s824] sm:$0xff]
  %v826 = vld [vmem:[%s824 + $0x8] sm:$0xff]
  %v827 = vld [vmem:[%s824 + $0x10] sm:$0xff]
  %v828 = vld [vmem:[%s824 + $0x18] sm:$0xff]
  %829 = vmatprep.subr.mxu0 0.0
  %830 = vmatpush1.msra.mxu0 0.0
  %831 = vmatprep.subr.mxu0 0.0
  %832 = vmatpush1.msra.mxu0 0.0
  %833 = vmatprep.subr.mxu0 0.0
  %834 = vmatpush1.msra.mxu0 0.0
  %835 = vmatprep.subr.mxu0 0.0
  %836 = vmatpush1.msra.mxu0 0.0
  %837 = vmatprep.subr.mxu0 0.0
  %838 = vmatpush1.msra.mxu0 0.0
  %839 = vmatprep.subr.mxu0 0.0
  %840 = vmatpush1.msra.mxu0 0.0
  %841 = vmatprep.subr.mxu0 0.0
  %842 = vmatpush1.msra.mxu0 0.0
  %843 = vmatprep.subr.mxu0 0.0
  %844 = vmatpush1.msra.mxu0 0.0
  %845 = vmatprep.subr.mxu0 0.0
  %846 = vmatpush1.msra.mxu0 0.0
  %847 = vmatprep.subr.mxu0 0.0
  %848 = vmatpush1.msra.mxu0 0.0
  %849 = vmatprep.subr.mxu0 0.0
  %850 = vmatpush1.msra.mxu0 0.0
  %851 = vmatprep.subr.mxu0 0.0
  %852 = vmatpush1.msra.mxu0 0.0
  %853 = vmatprep.subr.mxu0 0.0
  %854 = vmatpush1.msra.mxu0 %v828
  %855 = vmatprep.subr.mxu0 0.0
  %856 = vmatpush1.msra.mxu0 %v827
  %857 = vmatprep.subr.mxu0 0.0
  %858 = vmatpush1.msra.mxu0 %v826
  %859 = vmatprep.subr.mxu0 0.0
  %860 = vmatpush1.msra.mxu0 %v825
  %861 = vmatprep.subr.mxu0 0.0
  %862 = vmatpush2.msra.mxu0 0.0
  %863 = vmatprep.subr.mxu0 0.0
  %864 = vmatpush2.msra.mxu0 0.0
  %865 = vmatprep.subr.mxu0 0.0
  %866 = vmatpush2.msra.mxu0 0.0
  %867 = vmatprep.subr.mxu0 0.0
  %868 = vmatpush2.msra.mxu0 0.0
  %869 = vmatprep.subr.mxu0 0.0
  %870 = vmatpush2.msra.mxu0 0.0
  %871 = vmatprep.subr.mxu0 0.0
  %872 = vmatpush2.msra.mxu0 0.0
  %873 = vmatprep.subr.mxu0 0.0
  %874 = vmatpush2.msra.mxu0 0.0
  %875 = vmatprep.subr.mxu0 0.0
  %876 = vmatpush2.msra.mxu0 0.0
  %877 = vmatprep.subr.mxu0 0.0
  %878 = vmatpush2.msra.mxu0 0.0
  %879 = vmatprep.subr.mxu0 0.0
  %880 = vmatpush2.msra.mxu0 0.0
  %881 = vmatprep.subr.mxu0 0.0
  %882 = vmatpush2.msra.mxu0 0.0
  %883 = vmatprep.subr.mxu0 0.0
  %884 = vmatpush2.msra.mxu0 0.0
  %885 = vmatprep.subr.mxu0 0.0
  %886 = vmatpush2.msra.mxu0 0.0
  %887 = vmatprep.subr.mxu0 0.0
  %888 = vmatpush2.msra.mxu0 0.0
  %889 = vmatprep.subr.mxu0 0.0
  %890 = vmatpush2.msra.mxu0 0.0
  %891 = vmatprep.subr.mxu0 0.0
  %892 = vmatpush2.msra.mxu0 0.0
  %893 = vmatprep.mubr.f32.mxu0 0.0
  %894 = vmatmul.mubr.f32.gmra.mxu0 %v664
  %v895 = vpop.f32.mrf.mxu0
  %v896 = vadd.f32 0.0, %v895
  %v897 = vpop.f32.mrf.mxu0
  %898 = vmatprep.mubr.f32.mxu0 0.0
  %899 = vmatmul.mubr.f32.gmra.mxu0 %v667
  %v900 = vpop.f32.mrf.mxu0
  %v901 = vadd.f32 0.0, %v900
  %v902 = vpop.f32.mrf.mxu0
  %903 = vdwg.mxu0
  %s904 = scalar_lea.vmem %s8, 96
  %v905 = vld [vmem:[%s904] sm:$0xff]
  %v906 = vld [vmem:[%s904 + $0x8] sm:$0xff]
  %v907 = vld [vmem:[%s904 + $0x10] sm:$0xff]
  %v908 = vld [vmem:[%s904 + $0x18] sm:$0xff]
  %909 = vmatprep.subr.mxu0 0.0
  %910 = vmatpush1.msra.mxu0 0.0
  %911 = vmatprep.subr.mxu0 0.0
  %912 = vmatpush1.msra.mxu0 0.0
  %913 = vmatprep.subr.mxu0 0.0
  %914 = vmatpush1.msra.mxu0 0.0
  %915 = vmatprep.subr.mxu0 0.0
  %916 = vmatpush1.msra.mxu0 0.0
  %917 = vmatprep.subr.mxu0 0.0
  %918 = vmatpush1.msra.mxu0 0.0
  %919 = vmatprep.subr.mxu0 0.0
  %920 = vmatpush1.msra.mxu0 0.0
  %921 = vmatprep.subr.mxu0 0.0
  %922 = vmatpush1.msra.mxu0 0.0
  %923 = vmatprep.subr.mxu0 0.0
  %924 = vmatpush1.msra.mxu0 0.0
  %925 = vmatprep.subr.mxu0 0.0
  %926 = vmatpush1.msra.mxu0 0.0
  %927 = vmatprep.subr.mxu0 0.0
  %928 = vmatpush1.msra.mxu0 0.0
  %929 = vmatprep.subr.mxu0 0.0
  %930 = vmatpush1.msra.mxu0 0.0
  %931 = vmatprep.subr.mxu0 0.0
  %932 = vmatpush1.msra.mxu0 0.0
  %933 = vmatprep.subr.mxu0 0.0
  %934 = vmatpush1.msra.mxu0 %v908
  %935 = vmatprep.subr.mxu0 0.0
  %936 = vmatpush1.msra.mxu0 %v907
  %937 = vmatprep.subr.mxu0 0.0
  %938 = vmatpush1.msra.mxu0 %v906
  %939 = vmatprep.subr.mxu0 0.0
  %940 = vmatpush1.msra.mxu0 %v905
  %941 = vmatprep.subr.mxu0 0.0
  %942 = vmatpush2.msra.mxu0 0.0
  %943 = vmatprep.subr.mxu0 0.0
  %944 = vmatpush2.msra.mxu0 0.0
  %945 = vmatprep.subr.mxu0 0.0
  %946 = vmatpush2.msra.mxu0 0.0
  %947 = vmatprep.subr.mxu0 0.0
  %948 = vmatpush2.msra.mxu0 0.0
  %949 = vmatprep.subr.mxu0 0.0
  %950 = vmatpush2.msra.mxu0 0.0
  %951 = vmatprep.subr.mxu0 0.0
  %952 = vmatpush2.msra.mxu0 0.0
  %953 = vmatprep.subr.mxu0 0.0
  %954 = vmatpush2.msra.mxu0 0.0
  %955 = vmatprep.subr.mxu0 0.0
  %956 = vmatpush2.msra.mxu0 0.0
  %957 = vmatprep.subr.mxu0 0.0
  %958 = vmatpush2.msra.mxu0 0.0
  %959 = vmatprep.subr.mxu0 0.0
  %960 = vmatpush2.msra.mxu0 0.0
  %961 = vmatprep.subr.mxu0 0.0
  %962 = vmatpush2.msra.mxu0 0.0
  %963 = vmatprep.subr.mxu0 0.0
  %964 = vmatpush2.msra.mxu0 0.0
  %965 = vmatprep.subr.mxu0 0.0
  %966 = vmatpush2.msra.mxu0 0.0
  %967 = vmatprep.subr.mxu0 0.0
  %968 = vmatpush2.msra.mxu0 0.0
  %969 = vmatprep.subr.mxu0 0.0
  %970 = vmatpush2.msra.mxu0 0.0
  %971 = vmatprep.subr.mxu0 0.0
  %972 = vmatpush2.msra.mxu0 0.0
  %973 = vmatprep.mubr.f32.mxu0 0.0
  %974 = vmatmul.mubr.f32.gmra.mxu0 %v664
  %v975 = vpop.f32.mrf.mxu0
  %v976 = vadd.f32 0.0, %v975
  %v977 = vpop.f32.mrf.mxu0
  %978 = vmatprep.mubr.f32.mxu0 0.0
  %979 = vmatmul.mubr.f32.gmra.mxu0 %v667
  %v980 = vpop.f32.mrf.mxu0
  %v981 = vadd.f32 0.0, %v980
  %v982 = vpop.f32.mrf.mxu0
  %983 = vdwg.mxu0
  %v984 = vld [vmem:[%s10] sm:$0x1]
  %v986 = vlaneseq
  %v987 = vshrl.u32 %v986, 7
  %v988 = vsub.s32 0, %v987
  %v989 = vrot.slane %v984, %v988
  %v992 = vsel %vm577, %v466, 0
  %994 = vmatprep.subr.mxu0 0.0
  %995 = vmatpush1.msra.mxu0 0.0
  %996 = vmatprep.subr.mxu0 0.0
  %997 = vmatpush1.msra.mxu0 0.0
  %998 = vmatprep.subr.mxu0 0.0
  %999 = vmatpush1.msra.mxu0 0.0
  %1000 = vmatprep.subr.mxu0 0.0
  %1001 = vmatpush1.msra.mxu0 0.0
  %1002 = vmatprep.subr.mxu0 0.0
  %1003 = vmatpush1.msra.mxu0 0.0
  %1004 = vmatprep.subr.mxu0 0.0
  %1005 = vmatpush1.msra.mxu0 0.0
  %1006 = vmatprep.subr.mxu0 0.0
  %1007 = vmatpush1.msra.mxu0 0.0
  %1008 = vmatprep.subr.mxu0 0.0
  %1009 = vmatpush1.msra.mxu0 0.0
  %1010 = vmatprep.subr.mxu0 0.0
  %1011 = vmatpush1.msra.mxu0 0.0
  %1012 = vmatprep.subr.mxu0 0.0
  %1013 = vmatpush1.msra.mxu0 0.0
  %1014 = vmatprep.subr.mxu0 0.0
  %1015 = vmatpush1.msra.mxu0 0.0
  %1016 = vmatprep.subr.mxu0 0.0
  %1017 = vmatpush1.msra.mxu0 0.0
  %1018 = vmatprep.subr.mxu0 0.0
  %1019 = vmatpush1.msra.mxu0 %v662
  %1020 = vmatprep.subr.mxu0 0.0
  %1021 = vmatpush1.msra.mxu0 %v661
  %1022 = vmatprep.subr.mxu0 0.0
  %1023 = vmatpush1.msra.mxu0 %v660
  %1024 = vmatprep.subr.mxu0 0.0
  %1025 = vmatpush1.msra.mxu0 %v659
  %1026 = vmatprep.subr.mxu0 0.0
  %1027 = vmatpush2.msra.mxu0 0.0
  %1028 = vmatprep.subr.mxu0 0.0
  %1029 = vmatpush2.msra.mxu0 0.0
  %1030 = vmatprep.subr.mxu0 0.0
  %1031 = vmatpush2.msra.mxu0 0.0
  %1032 = vmatprep.subr.mxu0 0.0
  %1033 = vmatpush2.msra.mxu0 0.0
  %1034 = vmatprep.subr.mxu0 0.0
  %1035 = vmatpush2.msra.mxu0 0.0
  %1036 = vmatprep.subr.mxu0 0.0
  %1037 = vmatpush2.msra.mxu0 0.0
  %1038 = vmatprep.subr.mxu0 0.0
  %1039 = vmatpush2.msra.mxu0 0.0
  %1040 = vmatprep.subr.mxu0 0.0
  %1041 = vmatpush2.msra.mxu0 0.0
  %1042 = vmatprep.subr.mxu0 0.0
  %1043 = vmatpush2.msra.mxu0 0.0
  %1044 = vmatprep.subr.mxu0 0.0
  %1045 = vmatpush2.msra.mxu0 0.0
  %1046 = vmatprep.subr.mxu0 0.0
  %1047 = vmatpush2.msra.mxu0 0.0
  %1048 = vmatprep.subr.mxu0 0.0
  %1049 = vmatpush2.msra.mxu0 0.0
  %1050 = vmatprep.subr.mxu0 0.0
  %1051 = vmatpush2.msra.mxu0 0.0
  %1052 = vmatprep.subr.mxu0 0.0
  %1053 = vmatpush2.msra.mxu0 0.0
  %1054 = vmatprep.subr.mxu0 0.0
  %1055 = vmatpush2.msra.mxu0 0.0
  %1056 = vmatprep.subr.mxu0 0.0
  %1057 = vmatpush2.msra.mxu0 0.0
  %1058 = vmatprep.mubr.f32.mxu0 0.0
  %1059 = vmatmul.mubr.f32.gmra.mxu0 %v992
  %v1060 = vpop.f32.mrf.mxu0
  %v1061 = vadd.f32 %v989, %v1060
  %v1062 = vpop.f32.mrf.mxu0
  %1063 = vdwg.mxu0
  %s1064 = scalar_lea.vmem %s10, 1
  %v1065 = vld [vmem:[%s1064] sm:$0x1]
  %v1067 = vlaneseq
  %v1068 = vshrl.u32 %v1067, 7
  %v1069 = vsub.s32 0, %v1068
  %v1070 = vrot.slane %v1065, %v1069
  %1072 = vmatprep.subr.mxu0 0.0
  %1073 = vmatpush1.msra.mxu0 0.0
  %1074 = vmatprep.subr.mxu0 0.0
  %1075 = vmatpush1.msra.mxu0 0.0
  %1076 = vmatprep.subr.mxu0 0.0
  %1077 = vmatpush1.msra.mxu0 0.0
  %1078 = vmatprep.subr.mxu0 0.0
  %1079 = vmatpush1.msra.mxu0 0.0
  %1080 = vmatprep.subr.mxu0 0.0
  %1081 = vmatpush1.msra.mxu0 0.0
  %1082 = vmatprep.subr.mxu0 0.0
  %1083 = vmatpush1.msra.mxu0 0.0
  %1084 = vmatprep.subr.mxu0 0.0
  %1085 = vmatpush1.msra.mxu0 0.0
  %1086 = vmatprep.subr.mxu0 0.0
  %1087 = vmatpush1.msra.mxu0 0.0
  %1088 = vmatprep.subr.mxu0 0.0
  %1089 = vmatpush1.msra.mxu0 0.0
  %1090 = vmatprep.subr.mxu0 0.0
  %1091 = vmatpush1.msra.mxu0 0.0
  %1092 = vmatprep.subr.mxu0 0.0
  %1093 = vmatpush1.msra.mxu0 0.0
  %1094 = vmatprep.subr.mxu0 0.0
  %1095 = vmatpush1.msra.mxu0 0.0
  %1096 = vmatprep.subr.mxu0 0.0
  %1097 = vmatpush1.msra.mxu0 %v748
  %1098 = vmatprep.subr.mxu0 0.0
  %1099 = vmatpush1.msra.mxu0 %v747
  %1100 = vmatprep.subr.mxu0 0.0
  %1101 = vmatpush1.msra.mxu0 %v746
  %1102 = vmatprep.subr.mxu0 0.0
  %1103 = vmatpush1.msra.mxu0 %v745
  %1104 = vmatprep.subr.mxu0 0.0
  %1105 = vmatpush2.msra.mxu0 0.0
  %1106 = vmatprep.subr.mxu0 0.0
  %1107 = vmatpush2.msra.mxu0 0.0
  %1108 = vmatprep.subr.mxu0 0.0
  %1109 = vmatpush2.msra.mxu0 0.0
  %1110 = vmatprep.subr.mxu0 0.0
  %1111 = vmatpush2.msra.mxu0 0.0
  %1112 = vmatprep.subr.mxu0 0.0
  %1113 = vmatpush2.msra.mxu0 0.0
  %1114 = vmatprep.subr.mxu0 0.0
  %1115 = vmatpush2.msra.mxu0 0.0
  %1116 = vmatprep.subr.mxu0 0.0
  %1117 = vmatpush2.msra.mxu0 0.0
  %1118 = vmatprep.subr.mxu0 0.0
  %1119 = vmatpush2.msra.mxu0 0.0
  %1120 = vmatprep.subr.mxu0 0.0
  %1121 = vmatpush2.msra.mxu0 0.0
  %1122 = vmatprep.subr.mxu0 0.0
  %1123 = vmatpush2.msra.mxu0 0.0
  %1124 = vmatprep.subr.mxu0 0.0
  %1125 = vmatpush2.msra.mxu0 0.0
  %1126 = vmatprep.subr.mxu0 0.0
  %1127 = vmatpush2.msra.mxu0 0.0
  %1128 = vmatprep.subr.mxu0 0.0
  %1129 = vmatpush2.msra.mxu0 0.0
  %1130 = vmatprep.subr.mxu0 0.0
  %1131 = vmatpush2.msra.mxu0 0.0
  %1132 = vmatprep.subr.mxu0 0.0
  %1133 = vmatpush2.msra.mxu0 0.0
  %1134 = vmatprep.subr.mxu0 0.0
  %1135 = vmatpush2.msra.mxu0 0.0
  %1136 = vmatprep.mubr.f32.mxu0 0.0
  %1137 = vmatmul.mubr.f32.gmra.mxu0 %v992
  %v1138 = vpop.f32.mrf.mxu0
  %v1139 = vadd.f32 %v1070, %v1138
  %v1140 = vpop.f32.mrf.mxu0
  %1141 = vdwg.mxu0
  %s1142 = scalar_lea.vmem %s10, 2
  %v1143 = vld [vmem:[%s1142] sm:$0x1]
  %v1145 = vlaneseq
  %v1146 = vshrl.u32 %v1145, 7
  %v1147 = vsub.s32 0, %v1146
  %v1148 = vrot.slane %v1143, %v1147
  %1150 = vmatprep.subr.mxu0 0.0
  %1151 = vmatpush1.msra.mxu0 0.0
  %1152 = vmatprep.subr.mxu0 0.0
  %1153 = vmatpush1.msra.mxu0 0.0
  %1154 = vmatprep.subr.mxu0 0.0
  %1155 = vmatpush1.msra.mxu0 0.0
  %1156 = vmatprep.subr.mxu0 0.0
  %1157 = vmatpush1.msra.mxu0 0.0
  %1158 = vmatprep.subr.mxu0 0.0
  %1159 = vmatpush1.msra.mxu0 0.0
  %1160 = vmatprep.subr.mxu0 0.0
  %1161 = vmatpush1.msra.mxu0 0.0
  %1162 = vmatprep.subr.mxu0 0.0
  %1163 = vmatpush1.msra.mxu0 0.0
  %1164 = vmatprep.subr.mxu0 0.0
  %1165 = vmatpush1.msra.mxu0 0.0
  %1166 = vmatprep.subr.mxu0 0.0
  %1167 = vmatpush1.msra.mxu0 0.0
  %1168 = vmatprep.subr.mxu0 0.0
  %1169 = vmatpush1.msra.mxu0 0.0
  %1170 = vmatprep.subr.mxu0 0.0
  %1171 = vmatpush1.msra.mxu0 0.0
  %1172 = vmatprep.subr.mxu0 0.0
  %1173 = vmatpush1.msra.mxu0 0.0
  %1174 = vmatprep.subr.mxu0 0.0
  %1175 = vmatpush1.msra.mxu0 %v828
  %1176 = vmatprep.subr.mxu0 0.0
  %1177 = vmatpush1.msra.mxu0 %v827
  %1178 = vmatprep.subr.mxu0 0.0
  %1179 = vmatpush1.msra.mxu0 %v826
  %1180 = vmatprep.subr.mxu0 0.0
  %1181 = vmatpush1.msra.mxu0 %v825
  %1182 = vmatprep.subr.mxu0 0.0
  %1183 = vmatpush2.msra.mxu0 0.0
  %1184 = vmatprep.subr.mxu0 0.0
  %1185 = vmatpush2.msra.mxu0 0.0
  %1186 = vmatprep.subr.mxu0 0.0
  %1187 = vmatpush2.msra.mxu0 0.0
  %1188 = vmatprep.subr.mxu0 0.0
  %1189 = vmatpush2.msra.mxu0 0.0
  %1190 = vmatprep.subr.mxu0 0.0
  %1191 = vmatpush2.msra.mxu0 0.0
  %1192 = vmatprep.subr.mxu0 0.0
  %1193 = vmatpush2.msra.mxu0 0.0
  %1194 = vmatprep.subr.mxu0 0.0
  %1195 = vmatpush2.msra.mxu0 0.0
  %1196 = vmatprep.subr.mxu0 0.0
  %1197 = vmatpush2.msra.mxu0 0.0
  %1198 = vmatprep.subr.mxu0 0.0
  %1199 = vmatpush2.msra.mxu0 0.0
  %1200 = vmatprep.subr.mxu0 0.0
  %1201 = vmatpush2.msra.mxu0 0.0
  %1202 = vmatprep.subr.mxu0 0.0
  %1203 = vmatpush2.msra.mxu0 0.0
  %1204 = vmatprep.subr.mxu0 0.0
  %1205 = vmatpush2.msra.mxu0 0.0
  %1206 = vmatprep.subr.mxu0 0.0
  %1207 = vmatpush2.msra.mxu0 0.0
  %1208 = vmatprep.subr.mxu0 0.0
  %1209 = vmatpush2.msra.mxu0 0.0
  %1210 = vmatprep.subr.mxu0 0.0
  %1211 = vmatpush2.msra.mxu0 0.0
  %1212 = vmatprep.subr.mxu0 0.0
  %1213 = vmatpush2.msra.mxu0 0.0
  %1214 = vmatprep.mubr.f32.mxu0 0.0
  %1215 = vmatmul.mubr.f32.gmra.mxu0 %v992
  %v1216 = vpop.f32.mrf.mxu0
  %v1217 = vadd.f32 %v1148, %v1216
  %v1218 = vpop.f32.mrf.mxu0
  %1219 = vdwg.mxu0
  %s1220 = scalar_lea.vmem %s10, 3
  %v1221 = vld [vmem:[%s1220] sm:$0x1]
  %v1223 = vlaneseq
  %v1224 = vshrl.u32 %v1223, 7
  %v1225 = vsub.s32 0, %v1224
  %v1226 = vrot.slane %v1221, %v1225
  %1228 = vmatprep.subr.mxu0 0.0
  %1229 = vmatpush1.msra.mxu0 0.0
  %1230 = vmatprep.subr.mxu0 0.0
  %1231 = vmatpush1.msra.mxu0 0.0
  %1232 = vmatprep.subr.mxu0 0.0
  %1233 = vmatpush1.msra.mxu0 0.0
  %1234 = vmatprep.subr.mxu0 0.0
  %1235 = vmatpush1.msra.mxu0 0.0
  %1236 = vmatprep.subr.mxu0 0.0
  %1237 = vmatpush1.msra.mxu0 0.0
  %1238 = vmatprep.subr.mxu0 0.0
  %1239 = vmatpush1.msra.mxu0 0.0
  %1240 = vmatprep.subr.mxu0 0.0
  %1241 = vmatpush1.msra.mxu0 0.0
  %1242 = vmatprep.subr.mxu0 0.0
  %1243 = vmatpush1.msra.mxu0 0.0
  %1244 = vmatprep.subr.mxu0 0.0
  %1245 = vmatpush1.msra.mxu0 0.0
  %1246 = vmatprep.subr.mxu0 0.0
  %1247 = vmatpush1.msra.mxu0 0.0
  %1248 = vmatprep.subr.mxu0 0.0
  %1249 = vmatpush1.msra.mxu0 0.0
  %1250 = vmatprep.subr.mxu0 0.0
  %1251 = vmatpush1.msra.mxu0 0.0
  %1252 = vmatprep.subr.mxu0 0.0
  %1253 = vmatpush1.msra.mxu0 %v908
  %1254 = vmatprep.subr.mxu0 0.0
  %1255 = vmatpush1.msra.mxu0 %v907
  %1256 = vmatprep.subr.mxu0 0.0
  %1257 = vmatpush1.msra.mxu0 %v906
  %1258 = vmatprep.subr.mxu0 0.0
  %1259 = vmatpush1.msra.mxu0 %v905
  %1260 = vmatprep.subr.mxu0 0.0
  %1261 = vmatpush2.msra.mxu0 0.0
  %1262 = vmatprep.subr.mxu0 0.0
  %1263 = vmatpush2.msra.mxu0 0.0
  %1264 = vmatprep.subr.mxu0 0.0
  %1265 = vmatpush2.msra.mxu0 0.0
  %1266 = vmatprep.subr.mxu0 0.0
  %1267 = vmatpush2.msra.mxu0 0.0
  %1268 = vmatprep.subr.mxu0 0.0
  %1269 = vmatpush2.msra.mxu0 0.0
  %1270 = vmatprep.subr.mxu0 0.0
  %1271 = vmatpush2.msra.mxu0 0.0
  %1272 = vmatprep.subr.mxu0 0.0
  %1273 = vmatpush2.msra.mxu0 0.0
  %1274 = vmatprep.subr.mxu0 0.0
  %1275 = vmatpush2.msra.mxu0 0.0
  %1276 = vmatprep.subr.mxu0 0.0
  %1277 = vmatpush2.msra.mxu0 0.0
  %1278 = vmatprep.subr.mxu0 0.0
  %1279 = vmatpush2.msra.mxu0 0.0
  %1280 = vmatprep.subr.mxu0 0.0
  %1281 = vmatpush2.msra.mxu0 0.0
  %1282 = vmatprep.subr.mxu0 0.0
  %1283 = vmatpush2.msra.mxu0 0.0
  %1284 = vmatprep.subr.mxu0 0.0
  %1285 = vmatpush2.msra.mxu0 0.0
  %1286 = vmatprep.subr.mxu0 0.0
  %1287 = vmatpush2.msra.mxu0 0.0
  %1288 = vmatprep.subr.mxu0 0.0
  %1289 = vmatpush2.msra.mxu0 0.0
  %1290 = vmatprep.subr.mxu0 0.0
  %1291 = vmatpush2.msra.mxu0 0.0
  %1292 = vmatprep.mubr.f32.mxu0 0.0
  %1293 = vmatmul.mubr.f32.gmra.mxu0 %v992
  %v1294 = vpop.f32.mrf.mxu0
  %v1295 = vadd.f32 %v1226, %v1294
  %v1296 = vpop.f32.mrf.mxu0
  %1297 = vdwg.mxu0
  %v1298 = vld [vmem:[%s9] sm:$0xff]
  %v1299 = vld [vmem:[%s9 + $0x8] sm:$0xff]
  %v1300 = vld [vmem:[%s9 + $0x10] sm:$0xff]
  %v1301 = vld [vmem:[%s9 + $0x18] sm:$0xff]
  %s1302 = scalar_lea.vmem %s9, 32
  %v1303 = vld [vmem:[%s1302] sm:$0xff]
  %v1304 = vld [vmem:[%s1302 + $0x8] sm:$0xff]
  %v1305 = vld [vmem:[%s1302 + $0x10] sm:$0xff]
  %v1306 = vld [vmem:[%s1302 + $0x18] sm:$0xff]
  %s1307 = scalar_lea.vmem %s9, 64
  %v1308 = vld [vmem:[%s1307] sm:$0xff]
  %v1309 = vld [vmem:[%s1307 + $0x8] sm:$0xff]
  %v1310 = vld [vmem:[%s1307 + $0x10] sm:$0xff]
  %v1311 = vld [vmem:[%s1307 + $0x18] sm:$0xff]
  %s1312 = scalar_lea.vmem %s9, 96
  %v1313 = vld [vmem:[%s1312] sm:$0xff]
  %v1314 = vld [vmem:[%s1312 + $0x8] sm:$0xff]
  %v1315 = vld [vmem:[%s1312 + $0x10] sm:$0xff]
  %v1316 = vld [vmem:[%s1312 + $0x18] sm:$0xff]
  %v1317 = vadd.f32 %v736, %v1061
  %v1319 = vsel %vm577, 0.0, 0
  %1321 = vmatprep.subr.mxu0 0.0
  %1322 = vmatpush1.msra.mxu0 0.0
  %1323 = vmatprep.subr.mxu0 0.0
  %1324 = vmatpush1.msra.mxu0 0.0
  %1325 = vmatprep.subr.mxu0 0.0
  %1326 = vmatpush1.msra.mxu0 0.0
  %1327 = vmatprep.subr.mxu0 0.0
  %1328 = vmatpush1.msra.mxu0 0.0
  %1329 = vmatprep.subr.mxu0 0.0
  %1330 = vmatpush1.msra.mxu0 0.0
  %1331 = vmatprep.subr.mxu0 0.0
  %1332 = vmatpush1.msra.mxu0 0.0
  %1333 = vmatprep.subr.mxu0 0.0
  %1334 = vmatpush1.msra.mxu0 0.0
  %1335 = vmatprep.subr.mxu0 0.0
  %1336 = vmatpush1.msra.mxu0 0.0
  %1337 = vmatprep.subr.mxu0 0.0
  %1338 = vmatpush1.msra.mxu0 0.0
  %1339 = vmatprep.subr.mxu0 0.0
  %1340 = vmatpush1.msra.mxu0 0.0
  %1341 = vmatprep.subr.mxu0 0.0
  %1342 = vmatpush1.msra.mxu0 0.0
  %1343 = vmatprep.subr.mxu0 0.0
  %1344 = vmatpush1.msra.mxu0 0.0
  %1345 = vmatprep.subr.mxu0 0.0
  %1346 = vmatpush1.msra.mxu0 %v1301
  %1347 = vmatprep.subr.mxu0 0.0
  %1348 = vmatpush1.msra.mxu0 %v1300
  %1349 = vmatprep.subr.mxu0 0.0
  %1350 = vmatpush1.msra.mxu0 %v1299
  %1351 = vmatprep.subr.mxu0 0.0
  %1352 = vmatpush1.msra.mxu0 %v1298
  %1353 = vmatprep.subr.mxu0 0.0
  %1354 = vmatpush2.msra.mxu0 0.0
  %1355 = vmatprep.subr.mxu0 0.0
  %1356 = vmatpush2.msra.mxu0 0.0
  %1357 = vmatprep.subr.mxu0 0.0
  %1358 = vmatpush2.msra.mxu0 0.0
  %1359 = vmatprep.subr.mxu0 0.0
  %1360 = vmatpush2.msra.mxu0 0.0
  %1361 = vmatprep.subr.mxu0 0.0
  %1362 = vmatpush2.msra.mxu0 0.0
  %1363 = vmatprep.subr.mxu0 0.0
  %1364 = vmatpush2.msra.mxu0 0.0
  %1365 = vmatprep.subr.mxu0 0.0
  %1366 = vmatpush2.msra.mxu0 0.0
  %1367 = vmatprep.subr.mxu0 0.0
  %1368 = vmatpush2.msra.mxu0 0.0
  %1369 = vmatprep.subr.mxu0 0.0
  %1370 = vmatpush2.msra.mxu0 0.0
  %1371 = vmatprep.subr.mxu0 0.0
  %1372 = vmatpush2.msra.mxu0 0.0
  %1373 = vmatprep.subr.mxu0 0.0
  %1374 = vmatpush2.msra.mxu0 0.0
  %1375 = vmatprep.subr.mxu0 0.0
  %1376 = vmatpush2.msra.mxu0 0.0
  %1377 = vmatprep.subr.mxu0 0.0
  %1378 = vmatpush2.msra.mxu0 0.0
  %1379 = vmatprep.subr.mxu0 0.0
  %1380 = vmatpush2.msra.mxu0 0.0
  %1381 = vmatprep.subr.mxu0 0.0
  %1382 = vmatpush2.msra.mxu0 0.0
  %1383 = vmatprep.subr.mxu0 0.0
  %1384 = vmatpush2.msra.mxu0 0.0
  %1385 = vmatprep.mubr.f32.mxu0 0.0
  %1386 = vmatmul.mubr.f32.gmra.mxu0 %v1319
  %v1387 = vpop.f32.mrf.mxu0
  %v1388 = vadd.f32 0.0, %v1387
  %v1389 = vpop.f32.mrf.mxu0
  %1390 = vdwg.mxu0
  %v1391 = vadd.f32 %v1317, %v1388
  %v1392 = vadd.f32 %v816, %v1139
  %1393 = vmatprep.subr.mxu0 0.0
  %1394 = vmatpush1.msra.mxu0 0.0
  %1395 = vmatprep.subr.mxu0 0.0
  %1396 = vmatpush1.msra.mxu0 0.0
  %1397 = vmatprep.subr.mxu0 0.0
  %1398 = vmatpush1.msra.mxu0 0.0
  %1399 = vmatprep.subr.mxu0 0.0
  %1400 = vmatpush1.msra.mxu0 0.0
  %1401 = vmatprep.subr.mxu0 0.0
  %1402 = vmatpush1.msra.mxu0 0.0
  %1403 = vmatprep.subr.mxu0 0.0
  %1404 = vmatpush1.msra.mxu0 0.0
  %1405 = vmatprep.subr.mxu0 0.0
  %1406 = vmatpush1.msra.mxu0 0.0
  %1407 = vmatprep.subr.mxu0 0.0
  %1408 = vmatpush1.msra.mxu0 0.0
  %1409 = vmatprep.subr.mxu0 0.0
  %1410 = vmatpush1.msra.mxu0 0.0
  %1411 = vmatprep.subr.mxu0 0.0
  %1412 = vmatpush1.msra.mxu0 0.0
  %1413 = vmatprep.subr.mxu0 0.0
  %1414 = vmatpush1.msra.mxu0 0.0
  %1415 = vmatprep.subr.mxu0 0.0
  %1416 = vmatpush1.msra.mxu0 0.0
  %1417 = vmatprep.subr.mxu0 0.0
  %1418 = vmatpush1.msra.mxu0 %v1306
  %1419 = vmatprep.subr.mxu0 0.0
  %1420 = vmatpush1.msra.mxu0 %v1305
  %1421 = vmatprep.subr.mxu0 0.0
  %1422 = vmatpush1.msra.mxu0 %v1304
  %1423 = vmatprep.subr.mxu0 0.0
  %1424 = vmatpush1.msra.mxu0 %v1303
  %1425 = vmatprep.subr.mxu0 0.0
  %1426 = vmatpush2.msra.mxu0 0.0
  %1427 = vmatprep.subr.mxu0 0.0
  %1428 = vmatpush2.msra.mxu0 0.0
  %1429 = vmatprep.subr.mxu0 0.0
  %1430 = vmatpush2.msra.mxu0 0.0
  %1431 = vmatprep.subr.mxu0 0.0
  %1432 = vmatpush2.msra.mxu0 0.0
  %1433 = vmatprep.subr.mxu0 0.0
  %1434 = vmatpush2.msra.mxu0 0.0
  %1435 = vmatprep.subr.mxu0 0.0
  %1436 = vmatpush2.msra.mxu0 0.0
  %1437 = vmatprep.subr.mxu0 0.0
  %1438 = vmatpush2.msra.mxu0 0.0
  %1439 = vmatprep.subr.mxu0 0.0
  %1440 = vmatpush2.msra.mxu0 0.0
  %1441 = vmatprep.subr.mxu0 0.0
  %1442 = vmatpush2.msra.mxu0 0.0
  %1443 = vmatprep.subr.mxu0 0.0
  %1444 = vmatpush2.msra.mxu0 0.0
  %1445 = vmatprep.subr.mxu0 0.0
  %1446 = vmatpush2.msra.mxu0 0.0
  %1447 = vmatprep.subr.mxu0 0.0
  %1448 = vmatpush2.msra.mxu0 0.0
  %1449 = vmatprep.subr.mxu0 0.0
  %1450 = vmatpush2.msra.mxu0 0.0
  %1451 = vmatprep.subr.mxu0 0.0
  %1452 = vmatpush2.msra.mxu0 0.0
  %1453 = vmatprep.subr.mxu0 0.0
  %1454 = vmatpush2.msra.mxu0 0.0
  %1455 = vmatprep.subr.mxu0 0.0
  %1456 = vmatpush2.msra.mxu0 0.0
  %1457 = vmatprep.mubr.f32.mxu0 0.0
  %1458 = vmatmul.mubr.f32.gmra.mxu0 %v1319
  %v1459 = vpop.f32.mrf.mxu0
  %v1460 = vadd.f32 0.0, %v1459
  %v1461 = vpop.f32.mrf.mxu0
  %1462 = vdwg.mxu0
  %v1463 = vadd.f32 %v1392, %v1460
  %v1464 = vadd.f32 %v896, %v1217
  %1465 = vmatprep.subr.mxu0 0.0
  %1466 = vmatpush1.msra.mxu0 0.0
  %1467 = vmatprep.subr.mxu0 0.0
  %1468 = vmatpush1.msra.mxu0 0.0
  %1469 = vmatprep.subr.mxu0 0.0
  %1470 = vmatpush1.msra.mxu0 0.0
  %1471 = vmatprep.subr.mxu0 0.0
  %1472 = vmatpush1.msra.mxu0 0.0
  %1473 = vmatprep.subr.mxu0 0.0
  %1474 = vmatpush1.msra.mxu0 0.0
  %1475 = vmatprep.subr.mxu0 0.0
  %1476 = vmatpush1.msra.mxu0 0.0
  %1477 = vmatprep.subr.mxu0 0.0
  %1478 = vmatpush1.msra.mxu0 0.0
  %1479 = vmatprep.subr.mxu0 0.0
  %1480 = vmatpush1.msra.mxu0 0.0
  %1481 = vmatprep.subr.mxu0 0.0
  %1482 = vmatpush1.msra.mxu0 0.0
  %1483 = vmatprep.subr.mxu0 0.0
  %1484 = vmatpush1.msra.mxu0 0.0
  %1485 = vmatprep.subr.mxu0 0.0
  %1486 = vmatpush1.msra.mxu0 0.0
  %1487 = vmatprep.subr.mxu0 0.0
  %1488 = vmatpush1.msra.mxu0 0.0
  %1489 = vmatprep.subr.mxu0 0.0
  %1490 = vmatpush1.msra.mxu0 %v1311
  %1491 = vmatprep.subr.mxu0 0.0
  %1492 = vmatpush1.msra.mxu0 %v1310
  %1493 = vmatprep.subr.mxu0 0.0
  %1494 = vmatpush1.msra.mxu0 %v1309
  %1495 = vmatprep.subr.mxu0 0.0
  %1496 = vmatpush1.msra.mxu0 %v1308
  %1497 = vmatprep.subr.mxu0 0.0
  %1498 = vmatpush2.msra.mxu0 0.0
  %1499 = vmatprep.subr.mxu0 0.0
  %1500 = vmatpush2.msra.mxu0 0.0
  %1501 = vmatprep.subr.mxu0 0.0
  %1502 = vmatpush2.msra.mxu0 0.0
  %1503 = vmatprep.subr.mxu0 0.0
  %1504 = vmatpush2.msra.mxu0 0.0
  %1505 = vmatprep.subr.mxu0 0.0
  %1506 = vmatpush2.msra.mxu0 0.0
  %1507 = vmatprep.subr.mxu0 0.0
  %1508 = vmatpush2.msra.mxu0 0.0
  %1509 = vmatprep.subr.mxu0 0.0
  %1510 = vmatpush2.msra.mxu0 0.0
  %1511 = vmatprep.subr.mxu0 0.0
  %1512 = vmatpush2.msra.mxu0 0.0
  %1513 = vmatprep.subr.mxu0 0.0
  %1514 = vmatpush2.msra.mxu0 0.0
  %1515 = vmatprep.subr.mxu0 0.0
  %1516 = vmatpush2.msra.mxu0 0.0
  %1517 = vmatprep.subr.mxu0 0.0
  %1518 = vmatpush2.msra.mxu0 0.0
  %1519 = vmatprep.subr.mxu0 0.0
  %1520 = vmatpush2.msra.mxu0 0.0
  %1521 = vmatprep.subr.mxu0 0.0
  %1522 = vmatpush2.msra.mxu0 0.0
  %1523 = vmatprep.subr.mxu0 0.0
  %1524 = vmatpush2.msra.mxu0 0.0
  %1525 = vmatprep.subr.mxu0 0.0
  %1526 = vmatpush2.msra.mxu0 0.0
  %1527 = vmatprep.subr.mxu0 0.0
  %1528 = vmatpush2.msra.mxu0 0.0
  %1529 = vmatprep.mubr.f32.mxu0 0.0
  %1530 = vmatmul.mubr.f32.gmra.mxu0 %v1319
  %v1531 = vpop.f32.mrf.mxu0
  %v1532 = vadd.f32 0.0, %v1531
  %v1533 = vpop.f32.mrf.mxu0
  %1534 = vdwg.mxu0
  %v1535 = vadd.f32 %v1464, %v1532
  %v1536 = vadd.f32 %v976, %v1295
  %1537 = vmatprep.subr.mxu0 0.0
  %1538 = vmatpush1.msra.mxu0 0.0
  %1539 = vmatprep.subr.mxu0 0.0
  %1540 = vmatpush1.msra.mxu0 0.0
  %1541 = vmatprep.subr.mxu0 0.0
  %1542 = vmatpush1.msra.mxu0 0.0
  %1543 = vmatprep.subr.mxu0 0.0
  %1544 = vmatpush1.msra.mxu0 0.0
  %1545 = vmatprep.subr.mxu0 0.0
  %1546 = vmatpush1.msra.mxu0 0.0
  %1547 = vmatprep.subr.mxu0 0.0
  %1548 = vmatpush1.msra.mxu0 0.0
  %1549 = vmatprep.subr.mxu0 0.0
  %1550 = vmatpush1.msra.mxu0 0.0
  %1551 = vmatprep.subr.mxu0 0.0
  %1552 = vmatpush1.msra.mxu0 0.0
  %1553 = vmatprep.subr.mxu0 0.0
  %1554 = vmatpush1.msra.mxu0 0.0
  %1555 = vmatprep.subr.mxu0 0.0
  %1556 = vmatpush1.msra.mxu0 0.0
  %1557 = vmatprep.subr.mxu0 0.0
  %1558 = vmatpush1.msra.mxu0 0.0
  %1559 = vmatprep.subr.mxu0 0.0
  %1560 = vmatpush1.msra.mxu0 0.0
  %1561 = vmatprep.subr.mxu0 0.0
  %1562 = vmatpush1.msra.mxu0 %v1316
  %1563 = vmatprep.subr.mxu0 0.0
  %1564 = vmatpush1.msra.mxu0 %v1315
  %1565 = vmatprep.subr.mxu0 0.0
  %1566 = vmatpush1.msra.mxu0 %v1314
  %1567 = vmatprep.subr.mxu0 0.0
  %1568 = vmatpush1.msra.mxu0 %v1313
  %1569 = vmatprep.subr.mxu0 0.0
  %1570 = vmatpush2.msra.mxu0 0.0
  %1571 = vmatprep.subr.mxu0 0.0
  %1572 = vmatpush2.msra.mxu0 0.0
  %1573 = vmatprep.subr.mxu0 0.0
  %1574 = vmatpush2.msra.mxu0 0.0
  %1575 = vmatprep.subr.mxu0 0.0
  %1576 = vmatpush2.msra.mxu0 0.0
  %1577 = vmatprep.subr.mxu0 0.0
  %1578 = vmatpush2.msra.mxu0 0.0
  %1579 = vmatprep.subr.mxu0 0.0
  %1580 = vmatpush2.msra.mxu0 0.0
  %1581 = vmatprep.subr.mxu0 0.0
  %1582 = vmatpush2.msra.mxu0 0.0
  %1583 = vmatprep.subr.mxu0 0.0
  %1584 = vmatpush2.msra.mxu0 0.0
  %1585 = vmatprep.subr.mxu0 0.0
  %1586 = vmatpush2.msra.mxu0 0.0
  %1587 = vmatprep.subr.mxu0 0.0
  %1588 = vmatpush2.msra.mxu0 0.0
  %1589 = vmatprep.subr.mxu0 0.0
  %1590 = vmatpush2.msra.mxu0 0.0
  %1591 = vmatprep.subr.mxu0 0.0
  %1592 = vmatpush2.msra.mxu0 0.0
  %1593 = vmatprep.subr.mxu0 0.0
  %1594 = vmatpush2.msra.mxu0 0.0
  %1595 = vmatprep.subr.mxu0 0.0
  %1596 = vmatpush2.msra.mxu0 0.0
  %1597 = vmatprep.subr.mxu0 0.0
  %1598 = vmatpush2.msra.mxu0 0.0
  %1599 = vmatprep.subr.mxu0 0.0
  %1600 = vmatpush2.msra.mxu0 0.0
  %1601 = vmatprep.mubr.f32.mxu0 0.0
  %1602 = vmatmul.mubr.f32.gmra.mxu0 %v1319
  %v1603 = vpop.f32.mrf.mxu0
  %v1604 = vadd.f32 0.0, %v1603
  %v1605 = vpop.f32.mrf.mxu0
  %1606 = vdwg.mxu0
  %v1607 = vadd.f32 %v1536, %v1604
  %v1608 = vxor.u32 %v1391, 2147483648
  %v1609 = vmul.f32 %v1608, 1.442695
  %v1610 = vpow.pop %v1609
  %v1611 = vadd.f32 %v1610, 1.0
  %v1612 = vrcp.pop %v1611
  %v1613 = vmul.f32 1.0, %v1612
  %v1614 = vxor.u32 %v1463, 2147483648
  %v1615 = vmul.f32 %v1614, 1.442695
  %v1616 = vpow.pop %v1615
  %v1617 = vadd.f32 %v1616, 1.0
  %v1618 = vrcp.pop %v1617
  %v1619 = vmul.f32 1.0, %v1618
  %v1620 = vtanh.pop %v1535
  %v1621 = vxor.u32 %v1607, 2147483648
  %v1622 = vmul.f32 %v1621, 1.442695
  %v1623 = vpow.pop %v1622
  %v1624 = vadd.f32 %v1623, 1.0
  %v1625 = vrcp.pop %v1624
  %v1626 = vmul.f32 1.0, %v1625
  %v1627 = vmul.f32 %v1619, 0.0
  %v1628 = vmul.f32 %v1613, %v1620
  %v1629 = vadd.f32 %v1627, %v1628
  %v1630 = vtanh.pop %v1629
  %v1631 = vmul.f32 %v1626, %v1630
  %vm1632 = vcmask 254976
  %1633 = vst.msk [vmem:[#allocation2] sm:$0x3] %vm1632, %v1631
  %v1635 = vrot.slane %v1061, 6
  %v1637 = vadd.f32 %v736, %v1635
  %v1639 = vsel %vm577, %v1631, 0
  %1641 = vmatprep.subr.mxu0 0.0
  %1642 = vmatpush1.msra.mxu0 0.0
  %1643 = vmatprep.subr.mxu0 0.0
  %1644 = vmatpush1.msra.mxu0 0.0
  %1645 = vmatprep.subr.mxu0 0.0
  %1646 = vmatpush1.msra.mxu0 0.0
  %1647 = vmatprep.subr.mxu0 0.0
  %1648 = vmatpush1.msra.mxu0 0.0
  %1649 = vmatprep.subr.mxu0 0.0
  %1650 = vmatpush1.msra.mxu0 0.0
  %1651 = vmatprep.subr.mxu0 0.0
  %1652 = vmatpush1.msra.mxu0 0.0
  %1653 = vmatprep.subr.mxu0 0.0
  %1654 = vmatpush1.msra.mxu0 0.0
  %1655 = vmatprep.subr.mxu0 0.0
  %1656 = vmatpush1.msra.mxu0 0.0
  %1657 = vmatprep.subr.mxu0 0.0
  %1658 = vmatpush1.msra.mxu0 0.0
  %1659 = vmatprep.subr.mxu0 0.0
  %1660 = vmatpush1.msra.mxu0 0.0
  %1661 = vmatprep.subr.mxu0 0.0
  %1662 = vmatpush1.msra.mxu0 0.0
  %1663 = vmatprep.subr.mxu0 0.0
  %1664 = vmatpush1.msra.mxu0 0.0
  %1665 = vmatprep.subr.mxu0 0.0
  %1666 = vmatpush1.msra.mxu0 %v1301
  %1667 = vmatprep.subr.mxu0 0.0
  %1668 = vmatpush1.msra.mxu0 %v1300
  %1669 = vmatprep.subr.mxu0 0.0
  %1670 = vmatpush1.msra.mxu0 %v1299
  %1671 = vmatprep.subr.mxu0 0.0
  %1672 = vmatpush1.msra.mxu0 %v1298
  %1673 = vmatprep.subr.mxu0 0.0
  %1674 = vmatpush2.msra.mxu0 0.0
  %1675 = vmatprep.subr.mxu0 0.0
  %1676 = vmatpush2.msra.mxu0 0.0
  %1677 = vmatprep.subr.mxu0 0.0
  %1678 = vmatpush2.msra.mxu0 0.0
  %1679 = vmatprep.subr.mxu0 0.0
  %1680 = vmatpush2.msra.mxu0 0.0
  %1681 = vmatprep.subr.mxu0 0.0
  %1682 = vmatpush2.msra.mxu0 0.0
  %1683 = vmatprep.subr.mxu0 0.0
  %1684 = vmatpush2.msra.mxu0 0.0
  %1685 = vmatprep.subr.mxu0 0.0
  %1686 = vmatpush2.msra.mxu0 0.0
  %1687 = vmatprep.subr.mxu0 0.0
  %1688 = vmatpush2.msra.mxu0 0.0
  %1689 = vmatprep.subr.mxu0 0.0
  %1690 = vmatpush2.msra.mxu0 0.0
  %1691 = vmatprep.subr.mxu0 0.0
  %1692 = vmatpush2.msra.mxu0 0.0
  %1693 = vmatprep.subr.mxu0 0.0
  %1694 = vmatpush2.msra.mxu0 0.0
  %1695 = vmatprep.subr.mxu0 0.0
  %1696 = vmatpush2.msra.mxu0 0.0
  %1697 = vmatprep.subr.mxu0 0.0
  %1698 = vmatpush2.msra.mxu0 0.0
  %1699 = vmatprep.subr.mxu0 0.0
  %1700 = vmatpush2.msra.mxu0 0.0
  %1701 = vmatprep.subr.mxu0 0.0
  %1702 = vmatpush2.msra.mxu0 0.0
  %1703 = vmatprep.subr.mxu0 0.0
  %1704 = vmatpush2.msra.mxu0 0.0
  %1705 = vmatprep.mubr.f32.mxu0 0.0
  %1706 = vmatmul.mubr.f32.gmra.mxu0 %v1639
  %v1707 = vpop.f32.mrf.mxu0
  %v1708 = vadd.f32 0.0, %v1707
  %v1709 = vpop.f32.mrf.mxu0
  %1710 = vdwg.mxu0
  %v1712 = vrot.slane %v1708, 6
  %v1714 = vadd.f32 %v1637, %v1712
  %v1716 = vrot.slane %v1139, 6
  %v1718 = vadd.f32 %v816, %v1716
  %1719 = vmatprep.subr.mxu0 0.0
  %1720 = vmatpush1.msra.mxu0 0.0
  %1721 = vmatprep.subr.mxu0 0.0
  %1722 = vmatpush1.msra.mxu0 0.0
  %1723 = vmatprep.subr.mxu0 0.0
  %1724 = vmatpush1.msra.mxu0 0.0
  %1725 = vmatprep.subr.mxu0 0.0
  %1726 = vmatpush1.msra.mxu0 0.0
  %1727 = vmatprep.subr.mxu0 0.0
  %1728 = vmatpush1.msra.mxu0 0.0
  %1729 = vmatprep.subr.mxu0 0.0
  %1730 = vmatpush1.msra.mxu0 0.0
  %1731 = vmatprep.subr.mxu0 0.0
  %1732 = vmatpush1.msra.mxu0 0.0
  %1733 = vmatprep.subr.mxu0 0.0
  %1734 = vmatpush1.msra.mxu0 0.0
  %1735 = vmatprep.subr.mxu0 0.0
  %1736 = vmatpush1.msra.mxu0 0.0
  %1737 = vmatprep.subr.mxu0 0.0
  %1738 = vmatpush1.msra.mxu0 0.0
  %1739 = vmatprep.subr.mxu0 0.0
  %1740 = vmatpush1.msra.mxu0 0.0
  %1741 = vmatprep.subr.mxu0 0.0
  %1742 = vmatpush1.msra.mxu0 0.0
  %1743 = vmatprep.subr.mxu0 0.0
  %1744 = vmatpush1.msra.mxu0 %v1306
  %1745 = vmatprep.subr.mxu0 0.0
  %1746 = vmatpush1.msra.mxu0 %v1305
  %1747 = vmatprep.subr.mxu0 0.0
  %1748 = vmatpush1.msra.mxu0 %v1304
  %1749 = vmatprep.subr.mxu0 0.0
  %1750 = vmatpush1.msra.mxu0 %v1303
  %1751 = vmatprep.subr.mxu0 0.0
  %1752 = vmatpush2.msra.mxu0 0.0
  %1753 = vmatprep.subr.mxu0 0.0
  %1754 = vmatpush2.msra.mxu0 0.0
  %1755 = vmatprep.subr.mxu0 0.0
  %1756 = vmatpush2.msra.mxu0 0.0
  %1757 = vmatprep.subr.mxu0 0.0
  %1758 = vmatpush2.msra.mxu0 0.0
  %1759 = vmatprep.subr.mxu0 0.0
  %1760 = vmatpush2.msra.mxu0 0.0
  %1761 = vmatprep.subr.mxu0 0.0
  %1762 = vmatpush2.msra.mxu0 0.0
  %1763 = vmatprep.subr.mxu0 0.0
  %1764 = vmatpush2.msra.mxu0 0.0
  %1765 = vmatprep.subr.mxu0 0.0
  %1766 = vmatpush2.msra.mxu0 0.0
  %1767 = vmatprep.subr.mxu0 0.0
  %1768 = vmatpush2.msra.mxu0 0.0
  %1769 = vmatprep.subr.mxu0 0.0
  %1770 = vmatpush2.msra.mxu0 0.0
  %1771 = vmatprep.subr.mxu0 0.0
  %1772 = vmatpush2.msra.mxu0 0.0
  %1773 = vmatprep.subr.mxu0 0.0
  %1774 = vmatpush2.msra.mxu0 0.0
  %1775 = vmatprep.subr.mxu0 0.0
  %1776 = vmatpush2.msra.mxu0 0.0
  %1777 = vmatprep.subr.mxu0 0.0
  %1778 = vmatpush2.msra.mxu0 0.0
  %1779 = vmatprep.subr.mxu0 0.0
  %1780 = vmatpush2.msra.mxu0 0.0
  %1781 = vmatprep.subr.mxu0 0.0
  %1782 = vmatpush2.msra.mxu0 0.0
  %1783 = vmatprep.mubr.f32.mxu0 0.0
  %1784 = vmatmul.mubr.f32.gmra.mxu0 %v1639
  %v1785 = vpop.f32.mrf.mxu0
  %v1786 = vadd.f32 0.0, %v1785
  %v1787 = vpop.f32.mrf.mxu0
  %1788 = vdwg.mxu0
  %v1790 = vrot.slane %v1786, 6
  %v1792 = vadd.f32 %v1718, %v1790
  %v1794 = vrot.slane %v1217, 6
  %v1796 = vadd.f32 %v896, %v1794
  %1797 = vmatprep.subr.mxu0 0.0
  %1798 = vmatpush1.msra.mxu0 0.0
  %1799 = vmatprep.subr.mxu0 0.0
  %1800 = vmatpush1.msra.mxu0 0.0
  %1801 = vmatprep.subr.mxu0 0.0
  %1802 = vmatpush1.msra.mxu0 0.0
  %1803 = vmatprep.subr.mxu0 0.0
  %1804 = vmatpush1.msra.mxu0 0.0
  %1805 = vmatprep.subr.mxu0 0.0
  %1806 = vmatpush1.msra.mxu0 0.0
  %1807 = vmatprep.subr.mxu0 0.0
  %1808 = vmatpush1.msra.mxu0 0.0
  %1809 = vmatprep.subr.mxu0 0.0
  %1810 = vmatpush1.msra.mxu0 0.0
  %1811 = vmatprep.subr.mxu0 0.0
  %1812 = vmatpush1.msra.mxu0 0.0
  %1813 = vmatprep.subr.mxu0 0.0
  %1814 = vmatpush1.msra.mxu0 0.0
  %1815 = vmatprep.subr.mxu0 0.0
  %1816 = vmatpush1.msra.mxu0 0.0
  %1817 = vmatprep.subr.mxu0 0.0
  %1818 = vmatpush1.msra.mxu0 0.0
  %1819 = vmatprep.subr.mxu0 0.0
  %1820 = vmatpush1.msra.mxu0 0.0
  %1821 = vmatprep.subr.mxu0 0.0
  %1822 = vmatpush1.msra.mxu0 %v1311
  %1823 = vmatprep.subr.mxu0 0.0
  %1824 = vmatpush1.msra.mxu0 %v1310
  %1825 = vmatprep.subr.mxu0 0.0
  %1826 = vmatpush1.msra.mxu0 %v1309
  %1827 = vmatprep.subr.mxu0 0.0
  %1828 = vmatpush1.msra.mxu0 %v1308
  %1829 = vmatprep.subr.mxu0 0.0
  %1830 = vmatpush2.msra.mxu0 0.0
  %1831 = vmatprep.subr.mxu0 0.0
  %1832 = vmatpush2.msra.mxu0 0.0
  %1833 = vmatprep.subr.mxu0 0.0
  %1834 = vmatpush2.msra.mxu0 0.0
  %1835 = vmatprep.subr.mxu0 0.0
  %1836 = vmatpush2.msra.mxu0 0.0
  %1837 = vmatprep.subr.mxu0 0.0
  %1838 = vmatpush2.msra.mxu0 0.0
  %1839 = vmatprep.subr.mxu0 0.0
  %1840 = vmatpush2.msra.mxu0 0.0
  %1841 = vmatprep.subr.mxu0 0.0
  %1842 = vmatpush2.msra.mxu0 0.0
  %1843 = vmatprep.subr.mxu0 0.0
  %1844 = vmatpush2.msra.mxu0 0.0
  %1845 = vmatprep.subr.mxu0 0.0
  %1846 = vmatpush2.msra.mxu0 0.0
  %1847 = vmatprep.subr.mxu0 0.0
  %1848 = vmatpush2.msra.mxu0 0.0
  %1849 = vmatprep.subr.mxu0 0.0
  %1850 = vmatpush2.msra.mxu0 0.0
  %1851 = vmatprep.subr.mxu0 0.0
  %1852 = vmatpush2.msra.mxu0 0.0
  %1853 = vmatprep.subr.mxu0 0.0
  %1854 = vmatpush2.msra.mxu0 0.0
  %1855 = vmatprep.subr.mxu0 0.0
  %1856 = vmatpush2.msra.mxu0 0.0
  %1857 = vmatprep.subr.mxu0 0.0
  %1858 = vmatpush2.msra.mxu0 0.0
  %1859 = vmatprep.subr.mxu0 0.0
  %1860 = vmatpush2.msra.mxu0 0.0
  %1861 = vmatprep.mubr.f32.mxu0 0.0
  %1862 = vmatmul.mubr.f32.gmra.mxu0 %v1639
  %v1863 = vpop.f32.mrf.mxu0
  %v1864 = vadd.f32 0.0, %v1863
  %v1865 = vpop.f32.mrf.mxu0
  %1866 = vdwg.mxu0
  %v1868 = vrot.slane %v1864, 6
  %v1870 = vadd.f32 %v1796, %v1868
  %v1872 = vrot.slane %v1295, 6
  %v1874 = vadd.f32 %v976, %v1872
  %1875 = vmatprep.subr.mxu0 0.0
  %1876 = vmatpush1.msra.mxu0 0.0
  %1877 = vmatprep.subr.mxu0 0.0
  %1878 = vmatpush1.msra.mxu0 0.0
  %1879 = vmatprep.subr.mxu0 0.0
  %1880 = vmatpush1.msra.mxu0 0.0
  %1881 = vmatprep.subr.mxu0 0.0
  %1882 = vmatpush1.msra.mxu0 0.0
  %1883 = vmatprep.subr.mxu0 0.0
  %1884 = vmatpush1.msra.mxu0 0.0
  %1885 = vmatprep.subr.mxu0 0.0
  %1886 = vmatpush1.msra.mxu0 0.0
  %1887 = vmatprep.subr.mxu0 0.0
  %1888 = vmatpush1.msra.mxu0 0.0
  %1889 = vmatprep.subr.mxu0 0.0
  %1890 = vmatpush1.msra.mxu0 0.0
  %1891 = vmatprep.subr.mxu0 0.0
  %1892 = vmatpush1.msra.mxu0 0.0
  %1893 = vmatprep.subr.mxu0 0.0
  %1894 = vmatpush1.msra.mxu0 0.0
  %1895 = vmatprep.subr.mxu0 0.0
  %1896 = vmatpush1.msra.mxu0 0.0
  %1897 = vmatprep.subr.mxu0 0.0
  %1898 = vmatpush1.msra.mxu0 0.0
  %1899 = vmatprep.subr.mxu0 0.0
  %1900 = vmatpush1.msra.mxu0 %v1316
  %1901 = vmatprep.subr.mxu0 0.0
  %1902 = vmatpush1.msra.mxu0 %v1315
  %1903 = vmatprep.subr.mxu0 0.0
  %1904 = vmatpush1.msra.mxu0 %v1314
  %1905 = vmatprep.subr.mxu0 0.0
  %1906 = vmatpush1.msra.mxu0 %v1313
  %1907 = vmatprep.subr.mxu0 0.0
  %1908 = vmatpush2.msra.mxu0 0.0
  %1909 = vmatprep.subr.mxu0 0.0
  %1910 = vmatpush2.msra.mxu0 0.0
  %1911 = vmatprep.subr.mxu0 0.0
  %1912 = vmatpush2.msra.mxu0 0.0
  %1913 = vmatprep.subr.mxu0 0.0
  %1914 = vmatpush2.msra.mxu0 0.0
  %1915 = vmatprep.subr.mxu0 0.0
  %1916 = vmatpush2.msra.mxu0 0.0
  %1917 = vmatprep.subr.mxu0 0.0
  %1918 = vmatpush2.msra.mxu0 0.0
  %1919 = vmatprep.subr.mxu0 0.0
  %1920 = vmatpush2.msra.mxu0 0.0
  %1921 = vmatprep.subr.mxu0 0.0
  %1922 = vmatpush2.msra.mxu0 0.0
  %1923 = vmatprep.subr.mxu0 0.0
  %1924 = vmatpush2.msra.mxu0 0.0
  %1925 = vmatprep.subr.mxu0 0.0
  %1926 = vmatpush2.msra.mxu0 0.0
  %1927 = vmatprep.subr.mxu0 0.0
  %1928 = vmatpush2.msra.mxu0 0.0
  %1929 = vmatprep.subr.mxu0 0.0
  %1930 = vmatpush2.msra.mxu0 0.0
  %1931 = vmatprep.subr.mxu0 0.0
  %1932 = vmatpush2.msra.mxu0 0.0
  %1933 = vmatprep.subr.mxu0 0.0
  %1934 = vmatpush2.msra.mxu0 0.0
  %1935 = vmatprep.subr.mxu0 0.0
  %1936 = vmatpush2.msra.mxu0 0.0
  %1937 = vmatprep.subr.mxu0 0.0
  %1938 = vmatpush2.msra.mxu0 0.0
  %1939 = vmatprep.mubr.f32.mxu0 0.0
  %1940 = vmatmul.mubr.f32.gmra.mxu0 %v1639
  %v1941 = vpop.f32.mrf.mxu0
  %v1942 = vadd.f32 0.0, %v1941
  %v1943 = vpop.f32.mrf.mxu0
  %1944 = vdwg.mxu0
  %v1946 = vrot.slane %v1942, 6
  %v1948 = vadd.f32 %v1874, %v1946
  %v1949 = vxor.u32 %v1714, 2147483648
  %v1950 = vmul.f32 %v1949, 1.442695
  %v1951 = vpow.pop %v1950
  %v1952 = vadd.f32 %v1951, 1.0
  %v1953 = vrcp.pop %v1952
  %v1954 = vmul.f32 1.0, %v1953
  %v1955 = vxor.u32 %v1792, 2147483648
  %v1956 = vmul.f32 %v1955, 1.442695
  %v1957 = vpow.pop %v1956
  %v1958 = vadd.f32 %v1957, 1.0
  %v1959 = vrcp.pop %v1958
  %v1960 = vmul.f32 1.0, %v1959
  %v1961 = vtanh.pop %v1870
  %v1962 = vxor.u32 %v1948, 2147483648
  %v1963 = vmul.f32 %v1962, 1.442695
  %v1964 = vpow.pop %v1963
  %v1965 = vadd.f32 %v1964, 1.0
  %v1966 = vrcp.pop %v1965
  %v1967 = vmul.f32 1.0, %v1966
  %v1969 = vrot.slane %v1629, 6
  %v1971 = vmul.f32 %v1960, %v1969
  %v1972 = vmul.f32 %v1954, %v1961
  %v1973 = vadd.f32 %v1971, %v1972
  %v1974 = vtanh.pop %v1973
  %v1975 = vmul.f32 %v1967, %v1974
  %vm1976 = vcmask 257026
  %1977 = vst.msk [vmem:[#allocation2] sm:$0xc] %vm1976, %v1975
  %v1978 = vrot.slane %v1061, 4
  %v1980 = vadd.f32 %v736, %v1978
  %v1982 = vrot.slane %v1975, 2
  %v1983 = vsel %vm577, %v1982, 0
  %1985 = vmatprep.subr.mxu0 0.0
  %1986 = vmatpush1.msra.mxu0 0.0
  %1987 = vmatprep.subr.mxu0 0.0
  %1988 = vmatpush1.msra.mxu0 0.0
  %1989 = vmatprep.subr.mxu0 0.0
  %1990 = vmatpush1.msra.mxu0 0.0
  %1991 = vmatprep.subr.mxu0 0.0
  %1992 = vmatpush1.msra.mxu0 0.0
  %1993 = vmatprep.subr.mxu0 0.0
  %1994 = vmatpush1.msra.mxu0 0.0
  %1995 = vmatprep.subr.mxu0 0.0
  %1996 = vmatpush1.msra.mxu0 0.0
  %1997 = vmatprep.subr.mxu0 0.0
  %1998 = vmatpush1.msra.mxu0 0.0
  %1999 = vmatprep.subr.mxu0 0.0
  %2000 = vmatpush1.msra.mxu0 0.0
  %2001 = vmatprep.subr.mxu0 0.0
  %2002 = vmatpush1.msra.mxu0 0.0
  %2003 = vmatprep.subr.mxu0 0.0
  %2004 = vmatpush1.msra.mxu0 0.0
  %2005 = vmatprep.subr.mxu0 0.0
  %2006 = vmatpush1.msra.mxu0 0.0
  %2007 = vmatprep.subr.mxu0 0.0
  %2008 = vmatpush1.msra.mxu0 0.0
  %2009 = vmatprep.subr.mxu0 0.0
  %2010 = vmatpush1.msra.mxu0 %v1301
  %2011 = vmatprep.subr.mxu0 0.0
  %2012 = vmatpush1.msra.mxu0 %v1300
  %2013 = vmatprep.subr.mxu0 0.0
  %2014 = vmatpush1.msra.mxu0 %v1299
  %2015 = vmatprep.subr.mxu0 0.0
  %2016 = vmatpush1.msra.mxu0 %v1298
  %2017 = vmatprep.subr.mxu0 0.0
  %2018 = vmatpush2.msra.mxu0 0.0
  %2019 = vmatprep.subr.mxu0 0.0
  %2020 = vmatpush2.msra.mxu0 0.0
  %2021 = vmatprep.subr.mxu0 0.0
  %2022 = vmatpush2.msra.mxu0 0.0
  %2023 = vmatprep.subr.mxu0 0.0
  %2024 = vmatpush2.msra.mxu0 0.0
  %2025 = vmatprep.subr.mxu0 0.0
  %2026 = vmatpush2.msra.mxu0 0.0
  %2027 = vmatprep.subr.mxu0 0.0
  %2028 = vmatpush2.msra.mxu0 0.0
  %2029 = vmatprep.subr.mxu0 0.0
  %2030 = vmatpush2.msra.mxu0 0.0
  %2031 = vmatprep.subr.mxu0 0.0
  %2032 = vmatpush2.msra.mxu0 0.0
  %2033 = vmatprep.subr.mxu0 0.0
  %2034 = vmatpush2.msra.mxu0 0.0
  %2035 = vmatprep.subr.mxu0 0.0
  %2036 = vmatpush2.msra.mxu0 0.0
  %2037 = vmatprep.subr.mxu0 0.0
  %2038 = vmatpush2.msra.mxu0 0.0
  %2039 = vmatprep.subr.mxu0 0.0
  %2040 = vmatpush2.msra.mxu0 0.0
  %2041 = vmatprep.subr.mxu0 0.0
  %2042 = vmatpush2.msra.mxu0 0.0
  %2043 = vmatprep.subr.mxu0 0.0
  %2044 = vmatpush2.msra.mxu0 0.0
  %2045 = vmatprep.subr.mxu0 0.0
  %2046 = vmatpush2.msra.mxu0 0.0
  %2047 = vmatprep.subr.mxu0 0.0
  %2048 = vmatpush2.msra.mxu0 0.0
  %2049 = vmatprep.mubr.f32.mxu0 0.0
  %2050 = vmatmul.mubr.f32.gmra.mxu0 %v1983
  %v2051 = vpop.f32.mrf.mxu0
  %v2052 = vadd.f32 0.0, %v2051
  %v2053 = vpop.f32.mrf.mxu0
  %2054 = vdwg.mxu0
  %v2056 = vrot.slane %v2052, 4
  %v2058 = vadd.f32 %v1980, %v2056
  %v2059 = vrot.slane %v1139, 4
  %v2061 = vadd.f32 %v816, %v2059
  %2062 = vmatprep.subr.mxu0 0.0
  %2063 = vmatpush1.msra.mxu0 0.0
  %2064 = vmatprep.subr.mxu0 0.0
  %2065 = vmatpush1.msra.mxu0 0.0
  %2066 = vmatprep.subr.mxu0 0.0
  %2067 = vmatpush1.msra.mxu0 0.0
  %2068 = vmatprep.subr.mxu0 0.0
  %2069 = vmatpush1.msra.mxu0 0.0
  %2070 = vmatprep.subr.mxu0 0.0
  %2071 = vmatpush1.msra.mxu0 0.0
  %2072 = vmatprep.subr.mxu0 0.0
  %2073 = vmatpush1.msra.mxu0 0.0
  %2074 = vmatprep.subr.mxu0 0.0
  %2075 = vmatpush1.msra.mxu0 0.0
  %2076 = vmatprep.subr.mxu0 0.0
  %2077 = vmatpush1.msra.mxu0 0.0
  %2078 = vmatprep.subr.mxu0 0.0
  %2079 = vmatpush1.msra.mxu0 0.0
  %2080 = vmatprep.subr.mxu0 0.0
  %2081 = vmatpush1.msra.mxu0 0.0
  %2082 = vmatprep.subr.mxu0 0.0
  %2083 = vmatpush1.msra.mxu0 0.0
  %2084 = vmatprep.subr.mxu0 0.0
  %2085 = vmatpush1.msra.mxu0 0.0
  %2086 = vmatprep.subr.mxu0 0.0
  %2087 = vmatpush1.msra.mxu0 %v1306
  %2088 = vmatprep.subr.mxu0 0.0
  %2089 = vmatpush1.msra.mxu0 %v1305
  %2090 = vmatprep.subr.mxu0 0.0
  %2091 = vmatpush1.msra.mxu0 %v1304
  %2092 = vmatprep.subr.mxu0 0.0
  %2093 = vmatpush1.msra.mxu0 %v1303
  %2094 = vmatprep.subr.mxu0 0.0
  %2095 = vmatpush2.msra.mxu0 0.0
  %2096 = vmatprep.subr.mxu0 0.0
  %2097 = vmatpush2.msra.mxu0 0.0
  %2098 = vmatprep.subr.mxu0 0.0
  %2099 = vmatpush2.msra.mxu0 0.0
  %2100 = vmatprep.subr.mxu0 0.0
  %2101 = vmatpush2.msra.mxu0 0.0
  %2102 = vmatprep.subr.mxu0 0.0
  %2103 = vmatpush2.msra.mxu0 0.0
  %2104 = vmatprep.subr.mxu0 0.0
  %2105 = vmatpush2.msra.mxu0 0.0
  %2106 = vmatprep.subr.mxu0 0.0
  %2107 = vmatpush2.msra.mxu0 0.0
  %2108 = vmatprep.subr.mxu0 0.0
  %2109 = vmatpush2.msra.mxu0 0.0
  %2110 = vmatprep.subr.mxu0 0.0
  %2111 = vmatpush2.msra.mxu0 0.0
  %2112 = vmatprep.subr.mxu0 0.0
  %2113 = vmatpush2.msra.mxu0 0.0
  %2114 = vmatprep.subr.mxu0 0.0
  %2115 = vmatpush2.msra.mxu0 0.0
  %2116 = vmatprep.subr.mxu0 0.0
  %2117 = vmatpush2.msra.mxu0 0.0
  %2118 = vmatprep.subr.mxu0 0.0
  %2119 = vmatpush2.msra.mxu0 0.0
  %2120 = vmatprep.subr.mxu0 0.0
  %2121 = vmatpush2.msra.mxu0 0.0
  %2122 = vmatprep.subr.mxu0 0.0
  %2123 = vmatpush2.msra.mxu0 0.0
  %2124 = vmatprep.subr.mxu0 0.0
  %2125 = vmatpush2.msra.mxu0 0.0
  %2126 = vmatprep.mubr.f32.mxu0 0.0
  %2127 = vmatmul.mubr.f32.gmra.mxu0 %v1983
  %v2128 = vpop.f32.mrf.mxu0
  %v2129 = vadd.f32 0.0, %v2128
  %v2130 = vpop.f32.mrf.mxu0
  %2131 = vdwg.mxu0
  %v2133 = vrot.slane %v2129, 4
  %v2135 = vadd.f32 %v2061, %v2133
  %v2136 = vrot.slane %v1217, 4
  %v2138 = vadd.f32 %v896, %v2136
  %2139 = vmatprep.subr.mxu0 0.0
  %2140 = vmatpush1.msra.mxu0 0.0
  %2141 = vmatprep.subr.mxu0 0.0
  %2142 = vmatpush1.msra.mxu0 0.0
  %2143 = vmatprep.subr.mxu0 0.0
  %2144 = vmatpush1.msra.mxu0 0.0
  %2145 = vmatprep.subr.mxu0 0.0
  %2146 = vmatpush1.msra.mxu0 0.0
  %2147 = vmatprep.subr.mxu0 0.0
  %2148 = vmatpush1.msra.mxu0 0.0
  %2149 = vmatprep.subr.mxu0 0.0
  %2150 = vmatpush1.msra.mxu0 0.0
  %2151 = vmatprep.subr.mxu0 0.0
  %2152 = vmatpush1.msra.mxu0 0.0
  %2153 = vmatprep.subr.mxu0 0.0
  %2154 = vmatpush1.msra.mxu0 0.0
  %2155 = vmatprep.subr.mxu0 0.0
  %2156 = vmatpush1.msra.mxu0 0.0
  %2157 = vmatprep.subr.mxu0 0.0
  %2158 = vmatpush1.msra.mxu0 0.0
  %2159 = vmatprep.subr.mxu0 0.0
  %2160 = vmatpush1.msra.mxu0 0.0
  %2161 = vmatprep.subr.mxu0 0.0
  %2162 = vmatpush1.msra.mxu0 0.0
  %2163 = vmatprep.subr.mxu0 0.0
  %2164 = vmatpush1.msra.mxu0 %v1311
  %2165 = vmatprep.subr.mxu0 0.0
  %2166 = vmatpush1.msra.mxu0 %v1310
  %2167 = vmatprep.subr.mxu0 0.0
  %2168 = vmatpush1.msra.mxu0 %v1309
  %2169 = vmatprep.subr.mxu0 0.0
  %2170 = vmatpush1.msra.mxu0 %v1308
  %2171 = vmatprep.subr.mxu0 0.0
  %2172 = vmatpush2.msra.mxu0 0.0
  %2173 = vmatprep.subr.mxu0 0.0
  %2174 = vmatpush2.msra.mxu0 0.0
  %2175 = vmatprep.subr.mxu0 0.0
  %2176 = vmatpush2.msra.mxu0 0.0
  %2177 = vmatprep.subr.mxu0 0.0
  %2178 = vmatpush2.msra.mxu0 0.0
  %2179 = vmatprep.subr.mxu0 0.0
  %2180 = vmatpush2.msra.mxu0 0.0
  %2181 = vmatprep.subr.mxu0 0.0
  %2182 = vmatpush2.msra.mxu0 0.0
  %2183 = vmatprep.subr.mxu0 0.0
  %2184 = vmatpush2.msra.mxu0 0.0
  %2185 = vmatprep.subr.mxu0 0.0
  %2186 = vmatpush2.msra.mxu0 0.0
  %2187 = vmatprep.subr.mxu0 0.0
  %2188 = vmatpush2.msra.mxu0 0.0
  %2189 = vmatprep.subr.mxu0 0.0
  %2190 = vmatpush2.msra.mxu0 0.0
  %2191 = vmatprep.subr.mxu0 0.0
  %2192 = vmatpush2.msra.mxu0 0.0
  %2193 = vmatprep.subr.mxu0 0.0
  %2194 = vmatpush2.msra.mxu0 0.0
  %2195 = vmatprep.subr.mxu0 0.0
  %2196 = vmatpush2.msra.mxu0 0.0
  %2197 = vmatprep.subr.mxu0 0.0
  %2198 = vmatpush2.msra.mxu0 0.0
  %2199 = vmatprep.subr.mxu0 0.0
  %2200 = vmatpush2.msra.mxu0 0.0
  %2201 = vmatprep.subr.mxu0 0.0
  %2202 = vmatpush2.msra.mxu0 0.0
  %2203 = vmatprep.mubr.f32.mxu0 0.0
  %2204 = vmatmul.mubr.f32.gmra.mxu0 %v1983
  %v2205 = vpop.f32.mrf.mxu0
  %v2206 = vadd.f32 0.0, %v2205
  %v2207 = vpop.f32.mrf.mxu0
  %2208 = vdwg.mxu0
  %v2210 = vrot.slane %v2206, 4
  %v2212 = vadd.f32 %v2138, %v2210
  %v2213 = vrot.slane %v1295, 4
  %v2215 = vadd.f32 %v976, %v2213
  %2216 = vmatprep.subr.mxu0 0.0
  %2217 = vmatpush1.msra.mxu0 0.0
  %2218 = vmatprep.subr.mxu0 0.0
  %2219 = vmatpush1.msra.mxu0 0.0
  %2220 = vmatprep.subr.mxu0 0.0
  %2221 = vmatpush1.msra.mxu0 0.0
  %2222 = vmatprep.subr.mxu0 0.0
  %2223 = vmatpush1.msra.mxu0 0.0
  %2224 = vmatprep.subr.mxu0 0.0
  %2225 = vmatpush1.msra.mxu0 0.0
  %2226 = vmatprep.subr.mxu0 0.0
  %2227 = vmatpush1.msra.mxu0 0.0
  %2228 = vmatprep.subr.mxu0 0.0
  %2229 = vmatpush1.msra.mxu0 0.0
  %2230 = vmatprep.subr.mxu0 0.0
  %2231 = vmatpush1.msra.mxu0 0.0
  %2232 = vmatprep.subr.mxu0 0.0
  %2233 = vmatpush1.msra.mxu0 0.0
  %2234 = vmatprep.subr.mxu0 0.0
  %2235 = vmatpush1.msra.mxu0 0.0
  %2236 = vmatprep.subr.mxu0 0.0
  %2237 = vmatpush1.msra.mxu0 0.0
  %2238 = vmatprep.subr.mxu0 0.0
  %2239 = vmatpush1.msra.mxu0 0.0
  %2240 = vmatprep.subr.mxu0 0.0
  %2241 = vmatpush1.msra.mxu0 %v1316
  %2242 = vmatprep.subr.mxu0 0.0
  %2243 = vmatpush1.msra.mxu0 %v1315
  %2244 = vmatprep.subr.mxu0 0.0
  %2245 = vmatpush1.msra.mxu0 %v1314
  %2246 = vmatprep.subr.mxu0 0.0
  %2247 = vmatpush1.msra.mxu0 %v1313
  %2248 = vmatprep.subr.mxu0 0.0
  %2249 = vmatpush2.msra.mxu0 0.0
  %2250 = vmatprep.subr.mxu0 0.0
  %2251 = vmatpush2.msra.mxu0 0.0
  %2252 = vmatprep.subr.mxu0 0.0
  %2253 = vmatpush2.msra.mxu0 0.0
  %2254 = vmatprep.subr.mxu0 0.0
  %2255 = vmatpush2.msra.mxu0 0.0
  %2256 = vmatprep.subr.mxu0 0.0
  %2257 = vmatpush2.msra.mxu0 0.0
  %2258 = vmatprep.subr.mxu0 0.0
  %2259 = vmatpush2.msra.mxu0 0.0
  %2260 = vmatprep.subr.mxu0 0.0
  %2261 = vmatpush2.msra.mxu0 0.0
  %2262 = vmatprep.subr.mxu0 0.0
  %2263 = vmatpush2.msra.mxu0 0.0
  %2264 = vmatprep.subr.mxu0 0.0
  %2265 = vmatpush2.msra.mxu0 0.0
  %2266 = vmatprep.subr.mxu0 0.0
  %2267 = vmatpush2.msra.mxu0 0.0
  %2268 = vmatprep.subr.mxu0 0.0
  %2269 = vmatpush2.msra.mxu0 0.0
  %2270 = vmatprep.subr.mxu0 0.0
  %2271 = vmatpush2.msra.mxu0 0.0
  %2272 = vmatprep.subr.mxu0 0.0
  %2273 = vmatpush2.msra.mxu0 0.0
  %2274 = vmatprep.subr.mxu0 0.0
  %2275 = vmatpush2.msra.mxu0 0.0
  %2276 = vmatprep.subr.mxu0 0.0
  %2277 = vmatpush2.msra.mxu0 0.0
  %2278 = vmatprep.subr.mxu0 0.0
  %2279 = vmatpush2.msra.mxu0 0.0
  %2280 = vmatprep.mubr.f32.mxu0 0.0
  %2281 = vmatmul.mubr.f32.gmra.mxu0 %v1983
  %v2282 = vpop.f32.mrf.mxu0
  %v2283 = vadd.f32 0.0, %v2282
  %v2284 = vpop.f32.mrf.mxu0
  %2285 = vdwg.mxu0
  %v2287 = vrot.slane %v2283, 4
  %v2289 = vadd.f32 %v2215, %v2287
  %v2290 = vxor.u32 %v2058, 2147483648
  %v2291 = vmul.f32 %v2290, 1.442695
  %v2292 = vpow.pop %v2291
  %v2293 = vadd.f32 %v2292, 1.0
  %v2294 = vrcp.pop %v2293
  %v2295 = vmul.f32 1.0, %v2294
  %v2296 = vxor.u32 %v2135, 2147483648
  %v2297 = vmul.f32 %v2296, 1.442695
  %v2298 = vpow.pop %v2297
  %v2299 = vadd.f32 %v2298, 1.0
  %v2300 = vrcp.pop %v2299
  %v2301 = vmul.f32 1.0, %v2300
  %v2302 = vtanh.pop %v2212
  %v2303 = vxor.u32 %v2289, 2147483648
  %v2304 = vmul.f32 %v2303, 1.442695
  %v2305 = vpow.pop %v2304
  %v2306 = vadd.f32 %v2305, 1.0
  %v2307 = vrcp.pop %v2306
  %v2308 = vmul.f32 1.0, %v2307
  %v2310 = vrot.slane %v1973, 6
  %v2312 = vmul.f32 %v2301, %v2310
  %v2313 = vmul.f32 %v2295, %v2302
  %v2314 = vadd.f32 %v2312, %v2313
  %v2315 = vtanh.pop %v2314
  %v2316 = vmul.f32 %v2308, %v2315
  %vm2317 = vcmask 259076
  %2318 = vst.msk [vmem:[#allocation2] sm:$0x30] %vm2317, %v2316
  %v2319 = vrot.slane %v1061, 2
  %v2321 = vadd.f32 %v736, %v2319
  %v2323 = vrot.slane %v2316, 4
  %v2324 = vsel %vm577, %v2323, 0
  %2326 = vmatprep.subr.mxu0 0.0
  %2327 = vmatpush1.msra.mxu0 0.0
  %2328 = vmatprep.subr.mxu0 0.0
  %2329 = vmatpush1.msra.mxu0 0.0
  %2330 = vmatprep.subr.mxu0 0.0
  %2331 = vmatpush1.msra.mxu0 0.0
  %2332 = vmatprep.subr.mxu0 0.0
  %2333 = vmatpush1.msra.mxu0 0.0
  %2334 = vmatprep.subr.mxu0 0.0
  %2335 = vmatpush1.msra.mxu0 0.0
  %2336 = vmatprep.subr.mxu0 0.0
  %2337 = vmatpush1.msra.mxu0 0.0
  %2338 = vmatprep.subr.mxu0 0.0
  %2339 = vmatpush1.msra.mxu0 0.0
  %2340 = vmatprep.subr.mxu0 0.0
  %2341 = vmatpush1.msra.mxu0 0.0
  %2342 = vmatprep.subr.mxu0 0.0
  %2343 = vmatpush1.msra.mxu0 0.0
  %2344 = vmatprep.subr.mxu0 0.0
  %2345 = vmatpush1.msra.mxu0 0.0
  %2346 = vmatprep.subr.mxu0 0.0
  %2347 = vmatpush1.msra.mxu0 0.0
  %2348 = vmatprep.subr.mxu0 0.0
  %2349 = vmatpush1.msra.mxu0 0.0
  %2350 = vmatprep.subr.mxu0 0.0
  %2351 = vmatpush1.msra.mxu0 %v1301
  %2352 = vmatprep.subr.mxu0 0.0
  %2353 = vmatpush1.msra.mxu0 %v1300
  %2354 = vmatprep.subr.mxu0 0.0
  %2355 = vmatpush1.msra.mxu0 %v1299
  %2356 = vmatprep.subr.mxu0 0.0
  %2357 = vmatpush1.msra.mxu0 %v1298
  %2358 = vmatprep.subr.mxu0 0.0
  %2359 = vmatpush2.msra.mxu0 0.0
  %2360 = vmatprep.subr.mxu0 0.0
  %2361 = vmatpush2.msra.mxu0 0.0
  %2362 = vmatprep.subr.mxu0 0.0
  %2363 = vmatpush2.msra.mxu0 0.0
  %2364 = vmatprep.subr.mxu0 0.0
  %2365 = vmatpush2.msra.mxu0 0.0
  %2366 = vmatprep.subr.mxu0 0.0
  %2367 = vmatpush2.msra.mxu0 0.0
  %2368 = vmatprep.subr.mxu0 0.0
  %2369 = vmatpush2.msra.mxu0 0.0
  %2370 = vmatprep.subr.mxu0 0.0
  %2371 = vmatpush2.msra.mxu0 0.0
  %2372 = vmatprep.subr.mxu0 0.0
  %2373 = vmatpush2.msra.mxu0 0.0
  %2374 = vmatprep.subr.mxu0 0.0
  %2375 = vmatpush2.msra.mxu0 0.0
  %2376 = vmatprep.subr.mxu0 0.0
  %2377 = vmatpush2.msra.mxu0 0.0
  %2378 = vmatprep.subr.mxu0 0.0
  %2379 = vmatpush2.msra.mxu0 0.0
  %2380 = vmatprep.subr.mxu0 0.0
  %2381 = vmatpush2.msra.mxu0 0.0
  %2382 = vmatprep.subr.mxu0 0.0
  %2383 = vmatpush2.msra.mxu0 0.0
  %2384 = vmatprep.subr.mxu0 0.0
  %2385 = vmatpush2.msra.mxu0 0.0
  %2386 = vmatprep.subr.mxu0 0.0
  %2387 = vmatpush2.msra.mxu0 0.0
  %2388 = vmatprep.subr.mxu0 0.0
  %2389 = vmatpush2.msra.mxu0 0.0
  %2390 = vmatprep.mubr.f32.mxu0 0.0
  %2391 = vmatmul.mubr.f32.gmra.mxu0 %v2324
  %v2392 = vpop.f32.mrf.mxu0
  %v2393 = vadd.f32 0.0, %v2392
  %v2394 = vpop.f32.mrf.mxu0
  %2395 = vdwg.mxu0
  %v2397 = vrot.slane %v2393, 2
  %v2399 = vadd.f32 %v2321, %v2397
  %v2400 = vrot.slane %v1139, 2
  %v2402 = vadd.f32 %v816, %v2400
  %2403 = vmatprep.subr.mxu0 0.0
  %2404 = vmatpush1.msra.mxu0 0.0
  %2405 = vmatprep.subr.mxu0 0.0
  %2406 = vmatpush1.msra.mxu0 0.0
  %2407 = vmatprep.subr.mxu0 0.0
  %2408 = vmatpush1.msra.mxu0 0.0
  %2409 = vmatprep.subr.mxu0 0.0
  %2410 = vmatpush1.msra.mxu0 0.0
  %2411 = vmatprep.subr.mxu0 0.0
  %2412 = vmatpush1.msra.mxu0 0.0
  %2413 = vmatprep.subr.mxu0 0.0
  %2414 = vmatpush1.msra.mxu0 0.0
  %2415 = vmatprep.subr.mxu0 0.0
  %2416 = vmatpush1.msra.mxu0 0.0
  %2417 = vmatprep.subr.mxu0 0.0
  %2418 = vmatpush1.msra.mxu0 0.0
  %2419 = vmatprep.subr.mxu0 0.0
  %2420 = vmatpush1.msra.mxu0 0.0
  %2421 = vmatprep.subr.mxu0 0.0
  %2422 = vmatpush1.msra.mxu0 0.0
  %2423 = vmatprep.subr.mxu0 0.0
  %2424 = vmatpush1.msra.mxu0 0.0
  %2425 = vmatprep.subr.mxu0 0.0
  %2426 = vmatpush1.msra.mxu0 0.0
  %2427 = vmatprep.subr.mxu0 0.0
  %2428 = vmatpush1.msra.mxu0 %v1306
  %2429 = vmatprep.subr.mxu0 0.0
  %2430 = vmatpush1.msra.mxu0 %v1305
  %2431 = vmatprep.subr.mxu0 0.0
  %2432 = vmatpush1.msra.mxu0 %v1304
  %2433 = vmatprep.subr.mxu0 0.0
  %2434 = vmatpush1.msra.mxu0 %v1303
  %2435 = vmatprep.subr.mxu0 0.0
  %2436 = vmatpush2.msra.mxu0 0.0
  %2437 = vmatprep.subr.mxu0 0.0
  %2438 = vmatpush2.msra.mxu0 0.0
  %2439 = vmatprep.subr.mxu0 0.0
  %2440 = vmatpush2.msra.mxu0 0.0
  %2441 = vmatprep.subr.mxu0 0.0
  %2442 = vmatpush2.msra.mxu0 0.0
  %2443 = vmatprep.subr.mxu0 0.0
  %2444 = vmatpush2.msra.mxu0 0.0
  %2445 = vmatprep.subr.mxu0 0.0
  %2446 = vmatpush2.msra.mxu0 0.0
  %2447 = vmatprep.subr.mxu0 0.0
  %2448 = vmatpush2.msra.mxu0 0.0
  %2449 = vmatprep.subr.mxu0 0.0
  %2450 = vmatpush2.msra.mxu0 0.0
  %2451 = vmatprep.subr.mxu0 0.0
  %2452 = vmatpush2.msra.mxu0 0.0
  %2453 = vmatprep.subr.mxu0 0.0
  %2454 = vmatpush2.msra.mxu0 0.0
  %2455 = vmatprep.subr.mxu0 0.0
  %2456 = vmatpush2.msra.mxu0 0.0
  %2457 = vmatprep.subr.mxu0 0.0
  %2458 = vmatpush2.msra.mxu0 0.0
  %2459 = vmatprep.subr.mxu0 0.0
  %2460 = vmatpush2.msra.mxu0 0.0
  %2461 = vmatprep.subr.mxu0 0.0
  %2462 = vmatpush2.msra.mxu0 0.0
  %2463 = vmatprep.subr.mxu0 0.0
  %2464 = vmatpush2.msra.mxu0 0.0
  %2465 = vmatprep.subr.mxu0 0.0
  %2466 = vmatpush2.msra.mxu0 0.0
  %2467 = vmatprep.mubr.f32.mxu0 0.0
  %2468 = vmatmul.mubr.f32.gmra.mxu0 %v2324
  %v2469 = vpop.f32.mrf.mxu0
  %v2470 = vadd.f32 0.0, %v2469
  %v2471 = vpop.f32.mrf.mxu0
  %2472 = vdwg.mxu0
  %v2474 = vrot.slane %v2470, 2
  %v2476 = vadd.f32 %v2402, %v2474
  %v2477 = vrot.slane %v1217, 2
  %v2479 = vadd.f32 %v896, %v2477
  %2480 = vmatprep.subr.mxu0 0.0
  %2481 = vmatpush1.msra.mxu0 0.0
  %2482 = vmatprep.subr.mxu0 0.0
  %2483 = vmatpush1.msra.mxu0 0.0
  %2484 = vmatprep.subr.mxu0 0.0
  %2485 = vmatpush1.msra.mxu0 0.0
  %2486 = vmatprep.subr.mxu0 0.0
  %2487 = vmatpush1.msra.mxu0 0.0
  %2488 = vmatprep.subr.mxu0 0.0
  %2489 = vmatpush1.msra.mxu0 0.0
  %2490 = vmatprep.subr.mxu0 0.0
  %2491 = vmatpush1.msra.mxu0 0.0
  %2492 = vmatprep.subr.mxu0 0.0
  %2493 = vmatpush1.msra.mxu0 0.0
  %2494 = vmatprep.subr.mxu0 0.0
  %2495 = vmatpush1.msra.mxu0 0.0
  %2496 = vmatprep.subr.mxu0 0.0
  %2497 = vmatpush1.msra.mxu0 0.0
  %2498 = vmatprep.subr.mxu0 0.0
  %2499 = vmatpush1.msra.mxu0 0.0
  %2500 = vmatprep.subr.mxu0 0.0
  %2501 = vmatpush1.msra.mxu0 0.0
  %2502 = vmatprep.subr.mxu0 0.0
  %2503 = vmatpush1.msra.mxu0 0.0
  %2504 = vmatprep.subr.mxu0 0.0
  %2505 = vmatpush1.msra.mxu0 %v1311
  %2506 = vmatprep.subr.mxu0 0.0
  %2507 = vmatpush1.msra.mxu0 %v1310
  %2508 = vmatprep.subr.mxu0 0.0
  %2509 = vmatpush1.msra.mxu0 %v1309
  %2510 = vmatprep.subr.mxu0 0.0
  %2511 = vmatpush1.msra.mxu0 %v1308
  %2512 = vmatprep.subr.mxu0 0.0
  %2513 = vmatpush2.msra.mxu0 0.0
  %2514 = vmatprep.subr.mxu0 0.0
  %2515 = vmatpush2.msra.mxu0 0.0
  %2516 = vmatprep.subr.mxu0 0.0
  %2517 = vmatpush2.msra.mxu0 0.0
  %2518 = vmatprep.subr.mxu0 0.0
  %2519 = vmatpush2.msra.mxu0 0.0
  %2520 = vmatprep.subr.mxu0 0.0
  %2521 = vmatpush2.msra.mxu0 0.0
  %2522 = vmatprep.subr.mxu0 0.0
  %2523 = vmatpush2.msra.mxu0 0.0
  %2524 = vmatprep.subr.mxu0 0.0
  %2525 = vmatpush2.msra.mxu0 0.0
  %2526 = vmatprep.subr.mxu0 0.0
  %2527 = vmatpush2.msra.mxu0 0.0
  %2528 = vmatprep.subr.mxu0 0.0
  %2529 = vmatpush2.msra.mxu0 0.0
  %2530 = vmatprep.subr.mxu0 0.0
  %2531 = vmatpush2.msra.mxu0 0.0
  %2532 = vmatprep.subr.mxu0 0.0
  %2533 = vmatpush2.msra.mxu0 0.0
  %2534 = vmatprep.subr.mxu0 0.0
  %2535 = vmatpush2.msra.mxu0 0.0
  %2536 = vmatprep.subr.mxu0 0.0
  %2537 = vmatpush2.msra.mxu0 0.0
  %2538 = vmatprep.subr.mxu0 0.0
  %2539 = vmatpush2.msra.mxu0 0.0
  %2540 = vmatprep.subr.mxu0 0.0
  %2541 = vmatpush2.msra.mxu0 0.0
  %2542 = vmatprep.subr.mxu0 0.0
  %2543 = vmatpush2.msra.mxu0 0.0
  %2544 = vmatprep.mubr.f32.mxu0 0.0
  %2545 = vmatmul.mubr.f32.gmra.mxu0 %v2324
  %v2546 = vpop.f32.mrf.mxu0
  %v2547 = vadd.f32 0.0, %v2546
  %v2548 = vpop.f32.mrf.mxu0
  %2549 = vdwg.mxu0
  %v2551 = vrot.slane %v2547, 2
  %v2553 = vadd.f32 %v2479, %v2551
  %v2554 = vrot.slane %v1295, 2
  %v2556 = vadd.f32 %v976, %v2554
  %2557 = vmatprep.subr.mxu0 0.0
  %2558 = vmatpush1.msra.mxu0 0.0
  %2559 = vmatprep.subr.mxu0 0.0
  %2560 = vmatpush1.msra.mxu0 0.0
  %2561 = vmatprep.subr.mxu0 0.0
  %2562 = vmatpush1.msra.mxu0 0.0
  %2563 = vmatprep.subr.mxu0 0.0
  %2564 = vmatpush1.msra.mxu0 0.0
  %2565 = vmatprep.subr.mxu0 0.0
  %2566 = vmatpush1.msra.mxu0 0.0
  %2567 = vmatprep.subr.mxu0 0.0
  %2568 = vmatpush1.msra.mxu0 0.0
  %2569 = vmatprep.subr.mxu0 0.0
  %2570 = vmatpush1.msra.mxu0 0.0
  %2571 = vmatprep.subr.mxu0 0.0
  %2572 = vmatpush1.msra.mxu0 0.0
  %2573 = vmatprep.subr.mxu0 0.0
  %2574 = vmatpush1.msra.mxu0 0.0
  %2575 = vmatprep.subr.mxu0 0.0
  %2576 = vmatpush1.msra.mxu0 0.0
  %2577 = vmatprep.subr.mxu0 0.0
  %2578 = vmatpush1.msra.mxu0 0.0
  %2579 = vmatprep.subr.mxu0 0.0
  %2580 = vmatpush1.msra.mxu0 0.0
  %2581 = vmatprep.subr.mxu0 0.0
  %2582 = vmatpush1.msra.mxu0 %v1316
  %2583 = vmatprep.subr.mxu0 0.0
  %2584 = vmatpush1.msra.mxu0 %v1315
  %2585 = vmatprep.subr.mxu0 0.0
  %2586 = vmatpush1.msra.mxu0 %v1314
  %2587 = vmatprep.subr.mxu0 0.0
  %2588 = vmatpush1.msra.mxu0 %v1313
  %2589 = vmatprep.subr.mxu0 0.0
  %2590 = vmatpush2.msra.mxu0 0.0
  %2591 = vmatprep.subr.mxu0 0.0
  %2592 = vmatpush2.msra.mxu0 0.0
  %2593 = vmatprep.subr.mxu0 0.0
  %2594 = vmatpush2.msra.mxu0 0.0
  %2595 = vmatprep.subr.mxu0 0.0
  %2596 = vmatpush2.msra.mxu0 0.0
  %2597 = vmatprep.subr.mxu0 0.0
  %2598 = vmatpush2.msra.mxu0 0.0
  %2599 = vmatprep.subr.mxu0 0.0
  %2600 = vmatpush2.msra.mxu0 0.0
  %2601 = vmatprep.subr.mxu0 0.0
  %2602 = vmatpush2.msra.mxu0 0.0
  %2603 = vmatprep.subr.mxu0 0.0
  %2604 = vmatpush2.msra.mxu0 0.0
  %2605 = vmatprep.subr.mxu0 0.0
  %2606 = vmatpush2.msra.mxu0 0.0
  %2607 = vmatprep.subr.mxu0 0.0
  %2608 = vmatpush2.msra.mxu0 0.0
  %2609 = vmatprep.subr.mxu0 0.0
  %2610 = vmatpush2.msra.mxu0 0.0
  %2611 = vmatprep.subr.mxu0 0.0
  %2612 = vmatpush2.msra.mxu0 0.0
  %2613 = vmatprep.subr.mxu0 0.0
  %2614 = vmatpush2.msra.mxu0 0.0
  %2615 = vmatprep.subr.mxu0 0.0
  %2616 = vmatpush2.msra.mxu0 0.0
  %2617 = vmatprep.subr.mxu0 0.0
  %2618 = vmatpush2.msra.mxu0 0.0
  %2619 = vmatprep.subr.mxu0 0.0
  %2620 = vmatpush2.msra.mxu0 0.0
  %2621 = vmatprep.mubr.f32.mxu0 0.0
  %2622 = vmatmul.mubr.f32.gmra.mxu0 %v2324
  %v2623 = vpop.f32.mrf.mxu0
  %v2624 = vadd.f32 0.0, %v2623
  %v2625 = vpop.f32.mrf.mxu0
  %2626 = vdwg.mxu0
  %v2628 = vrot.slane %v2624, 2
  %v2630 = vadd.f32 %v2556, %v2628
  %v2631 = vxor.u32 %v2399, 2147483648
  %v2632 = vmul.f32 %v2631, 1.442695
  %v2633 = vpow.pop %v2632
  %v2634 = vadd.f32 %v2633, 1.0
  %v2635 = vrcp.pop %v2634
  %v2636 = vmul.f32 1.0, %v2635
  %v2637 = vxor.u32 %v2476, 2147483648
  %v2638 = vmul.f32 %v2637, 1.442695
  %v2639 = vpow.pop %v2638
  %v2640 = vadd.f32 %v2639, 1.0
  %v2641 = vrcp.pop %v2640
  %v2642 = vmul.f32 1.0, %v2641
  %v2643 = vtanh.pop %v2553
  %v2644 = vxor.u32 %v2630, 2147483648
  %v2645 = vmul.f32 %v2644, 1.442695
  %v2646 = vpow.pop %v2645
  %v2647 = vadd.f32 %v2646, 1.0
  %v2648 = vrcp.pop %v2647
  %v2649 = vmul.f32 1.0, %v2648
  %v2651 = vrot.slane %v2314, 6
  %v2653 = vmul.f32 %v2642, %v2651
  %v2654 = vmul.f32 %v2636, %v2643
  %v2655 = vadd.f32 %v2653, %v2654
  %v2656 = vtanh.pop %v2655
  %v2657 = vmul.f32 %v2649, %v2656
  %vm2658 = vcmask 261126
  %2659 = vst.msk [vmem:[#allocation2] sm:$0xc0] %vm2658, %v2657
  %v2660 = vadd.f32 %v741, %v1061
  %v2662 = vrot.slane %v2657, 6
  %v2663 = vsel %vm577, %v2662, 0
  %2665 = vmatprep.subr.mxu0 0.0
  %2666 = vmatpush1.msra.mxu0 0.0
  %2667 = vmatprep.subr.mxu0 0.0
  %2668 = vmatpush1.msra.mxu0 0.0
  %2669 = vmatprep.subr.mxu0 0.0
  %2670 = vmatpush1.msra.mxu0 0.0
  %2671 = vmatprep.subr.mxu0 0.0
  %2672 = vmatpush1.msra.mxu0 0.0
  %2673 = vmatprep.subr.mxu0 0.0
  %2674 = vmatpush1.msra.mxu0 0.0
  %2675 = vmatprep.subr.mxu0 0.0
  %2676 = vmatpush1.msra.mxu0 0.0
  %2677 = vmatprep.subr.mxu0 0.0
  %2678 = vmatpush1.msra.mxu0 0.0
  %2679 = vmatprep.subr.mxu0 0.0
  %2680 = vmatpush1.msra.mxu0 0.0
  %2681 = vmatprep.subr.mxu0 0.0
  %2682 = vmatpush1.msra.mxu0 0.0
  %2683 = vmatprep.subr.mxu0 0.0
  %2684 = vmatpush1.msra.mxu0 0.0
  %2685 = vmatprep.subr.mxu0 0.0
  %2686 = vmatpush1.msra.mxu0 0.0
  %2687 = vmatprep.subr.mxu0 0.0
  %2688 = vmatpush1.msra.mxu0 0.0
  %2689 = vmatprep.subr.mxu0 0.0
  %2690 = vmatpush1.msra.mxu0 %v1301
  %2691 = vmatprep.subr.mxu0 0.0
  %2692 = vmatpush1.msra.mxu0 %v1300
  %2693 = vmatprep.subr.mxu0 0.0
  %2694 = vmatpush1.msra.mxu0 %v1299
  %2695 = vmatprep.subr.mxu0 0.0
  %2696 = vmatpush1.msra.mxu0 %v1298
  %2697 = vmatprep.subr.mxu0 0.0
  %2698 = vmatpush2.msra.mxu0 0.0
  %2699 = vmatprep.subr.mxu0 0.0
  %2700 = vmatpush2.msra.mxu0 0.0
  %2701 = vmatprep.subr.mxu0 0.0
  %2702 = vmatpush2.msra.mxu0 0.0
  %2703 = vmatprep.subr.mxu0 0.0
  %2704 = vmatpush2.msra.mxu0 0.0
  %2705 = vmatprep.subr.mxu0 0.0
  %2706 = vmatpush2.msra.mxu0 0.0
  %2707 = vmatprep.subr.mxu0 0.0
  %2708 = vmatpush2.msra.mxu0 0.0
  %2709 = vmatprep.subr.mxu0 0.0
  %2710 = vmatpush2.msra.mxu0 0.0
  %2711 = vmatprep.subr.mxu0 0.0
  %2712 = vmatpush2.msra.mxu0 0.0
  %2713 = vmatprep.subr.mxu0 0.0
  %2714 = vmatpush2.msra.mxu0 0.0
  %2715 = vmatprep.subr.mxu0 0.0
  %2716 = vmatpush2.msra.mxu0 0.0
  %2717 = vmatprep.subr.mxu0 0.0
  %2718 = vmatpush2.msra.mxu0 0.0
  %2719 = vmatprep.subr.mxu0 0.0
  %2720 = vmatpush2.msra.mxu0 0.0
  %2721 = vmatprep.subr.mxu0 0.0
  %2722 = vmatpush2.msra.mxu0 0.0
  %2723 = vmatprep.subr.mxu0 0.0
  %2724 = vmatpush2.msra.mxu0 0.0
  %2725 = vmatprep.subr.mxu0 0.0
  %2726 = vmatpush2.msra.mxu0 0.0
  %2727 = vmatprep.subr.mxu0 0.0
  %2728 = vmatpush2.msra.mxu0 0.0
  %2729 = vmatprep.mubr.f32.mxu0 0.0
  %2730 = vmatmul.mubr.f32.gmra.mxu0 %v2663
  %v2731 = vpop.f32.mrf.mxu0
  %v2732 = vadd.f32 0.0, %v2731
  %v2733 = vpop.f32.mrf.mxu0
  %2734 = vdwg.mxu0
  %v2735 = vadd.f32 %v2660, %v2732
  %v2736 = vadd.f32 %v821, %v1139
  %2737 = vmatprep.subr.mxu0 0.0
  %2738 = vmatpush1.msra.mxu0 0.0
  %2739 = vmatprep.subr.mxu0 0.0
  %2740 = vmatpush1.msra.mxu0 0.0
  %2741 = vmatprep.subr.mxu0 0.0
  %2742 = vmatpush1.msra.mxu0 0.0
  %2743 = vmatprep.subr.mxu0 0.0
  %2744 = vmatpush1.msra.mxu0 0.0
  %2745 = vmatprep.subr.mxu0 0.0
  %2746 = vmatpush1.msra.mxu0 0.0
  %2747 = vmatprep.subr.mxu0 0.0
  %2748 = vmatpush1.msra.mxu0 0.0
  %2749 = vmatprep.subr.mxu0 0.0
  %2750 = vmatpush1.msra.mxu0 0.0
  %2751 = vmatprep.subr.mxu0 0.0
  %2752 = vmatpush1.msra.mxu0 0.0
  %2753 = vmatprep.subr.mxu0 0.0
  %2754 = vmatpush1.msra.mxu0 0.0
  %2755 = vmatprep.subr.mxu0 0.0
  %2756 = vmatpush1.msra.mxu0 0.0
  %2757 = vmatprep.subr.mxu0 0.0
  %2758 = vmatpush1.msra.mxu0 0.0
  %2759 = vmatprep.subr.mxu0 0.0
  %2760 = vmatpush1.msra.mxu0 0.0
  %2761 = vmatprep.subr.mxu0 0.0
  %2762 = vmatpush1.msra.mxu0 %v1306
  %2763 = vmatprep.subr.mxu0 0.0
  %2764 = vmatpush1.msra.mxu0 %v1305
  %2765 = vmatprep.subr.mxu0 0.0
  %2766 = vmatpush1.msra.mxu0 %v1304
  %2767 = vmatprep.subr.mxu0 0.0
  %2768 = vmatpush1.msra.mxu0 %v1303
  %2769 = vmatprep.subr.mxu0 0.0
  %2770 = vmatpush2.msra.mxu0 0.0
  %2771 = vmatprep.subr.mxu0 0.0
  %2772 = vmatpush2.msra.mxu0 0.0
  %2773 = vmatprep.subr.mxu0 0.0
  %2774 = vmatpush2.msra.mxu0 0.0
  %2775 = vmatprep.subr.mxu0 0.0
  %2776 = vmatpush2.msra.mxu0 0.0
  %2777 = vmatprep.subr.mxu0 0.0
  %2778 = vmatpush2.msra.mxu0 0.0
  %2779 = vmatprep.subr.mxu0 0.0
  %2780 = vmatpush2.msra.mxu0 0.0
  %2781 = vmatprep.subr.mxu0 0.0
  %2782 = vmatpush2.msra.mxu0 0.0
  %2783 = vmatprep.subr.mxu0 0.0
  %2784 = vmatpush2.msra.mxu0 0.0
  %2785 = vmatprep.subr.mxu0 0.0
  %2786 = vmatpush2.msra.mxu0 0.0
  %2787 = vmatprep.subr.mxu0 0.0
  %2788 = vmatpush2.msra.mxu0 0.0
  %2789 = vmatprep.subr.mxu0 0.0
  %2790 = vmatpush2.msra.mxu0 0.0
  %2791 = vmatprep.subr.mxu0 0.0
  %2792 = vmatpush2.msra.mxu0 0.0
  %2793 = vmatprep.subr.mxu0 0.0
  %2794 = vmatpush2.msra.mxu0 0.0
  %2795 = vmatprep.subr.mxu0 0.0
  %2796 = vmatpush2.msra.mxu0 0.0
  %2797 = vmatprep.subr.mxu0 0.0
  %2798 = vmatpush2.msra.mxu0 0.0
  %2799 = vmatprep.subr.mxu0 0.0
  %2800 = vmatpush2.msra.mxu0 0.0
  %2801 = vmatprep.mubr.f32.mxu0 0.0
  %2802 = vmatmul.mubr.f32.gmra.mxu0 %v2663
  %v2803 = vpop.f32.mrf.mxu0
  %v2804 = vadd.f32 0.0, %v2803
  %v2805 = vpop.f32.mrf.mxu0
  %2806 = vdwg.mxu0
  %v2807 = vadd.f32 %v2736, %v2804
  %v2808 = vadd.f32 %v901, %v1217
  %2809 = vmatprep.subr.mxu0 0.0
  %2810 = vmatpush1.msra.mxu0 0.0
  %2811 = vmatprep.subr.mxu0 0.0
  %2812 = vmatpush1.msra.mxu0 0.0
  %2813 = vmatprep.subr.mxu0 0.0
  %2814 = vmatpush1.msra.mxu0 0.0
  %2815 = vmatprep.subr.mxu0 0.0
  %2816 = vmatpush1.msra.mxu0 0.0
  %2817 = vmatprep.subr.mxu0 0.0
  %2818 = vmatpush1.msra.mxu0 0.0
  %2819 = vmatprep.subr.mxu0 0.0
  %2820 = vmatpush1.msra.mxu0 0.0
  %2821 = vmatprep.subr.mxu0 0.0
  %2822 = vmatpush1.msra.mxu0 0.0
  %2823 = vmatprep.subr.mxu0 0.0
  %2824 = vmatpush1.msra.mxu0 0.0
  %2825 = vmatprep.subr.mxu0 0.0
  %2826 = vmatpush1.msra.mxu0 0.0
  %2827 = vmatprep.subr.mxu0 0.0
  %2828 = vmatpush1.msra.mxu0 0.0
  %2829 = vmatprep.subr.mxu0 0.0
  %2830 = vmatpush1.msra.mxu0 0.0
  %2831 = vmatprep.subr.mxu0 0.0
  %2832 = vmatpush1.msra.mxu0 0.0
  %2833 = vmatprep.subr.mxu0 0.0
  %2834 = vmatpush1.msra.mxu0 %v1311
  %2835 = vmatprep.subr.mxu0 0.0
  %2836 = vmatpush1.msra.mxu0 %v1310
  %2837 = vmatprep.subr.mxu0 0.0
  %2838 = vmatpush1.msra.mxu0 %v1309
  %2839 = vmatprep.subr.mxu0 0.0
  %2840 = vmatpush1.msra.mxu0 %v1308
  %2841 = vmatprep.subr.mxu0 0.0
  %2842 = vmatpush2.msra.mxu0 0.0
  %2843 = vmatprep.subr.mxu0 0.0
  %2844 = vmatpush2.msra.mxu0 0.0
  %2845 = vmatprep.subr.mxu0 0.0
  %2846 = vmatpush2.msra.mxu0 0.0
  %2847 = vmatprep.subr.mxu0 0.0
  %2848 = vmatpush2.msra.mxu0 0.0
  %2849 = vmatprep.subr.mxu0 0.0
  %2850 = vmatpush2.msra.mxu0 0.0
  %2851 = vmatprep.subr.mxu0 0.0
  %2852 = vmatpush2.msra.mxu0 0.0
  %2853 = vmatprep.subr.mxu0 0.0
  %2854 = vmatpush2.msra.mxu0 0.0
  %2855 = vmatprep.subr.mxu0 0.0
  %2856 = vmatpush2.msra.mxu0 0.0
  %2857 = vmatprep.subr.mxu0 0.0
  %2858 = vmatpush2.msra.mxu0 0.0
  %2859 = vmatprep.subr.mxu0 0.0
  %2860 = vmatpush2.msra.mxu0 0.0
  %2861 = vmatprep.subr.mxu0 0.0
  %2862 = vmatpush2.msra.mxu0 0.0
  %2863 = vmatprep.subr.mxu0 0.0
  %2864 = vmatpush2.msra.mxu0 0.0
  %2865 = vmatprep.subr.mxu0 0.0
  %2866 = vmatpush2.msra.mxu0 0.0
  %2867 = vmatprep.subr.mxu0 0.0
  %2868 = vmatpush2.msra.mxu0 0.0
  %2869 = vmatprep.subr.mxu0 0.0
  %2870 = vmatpush2.msra.mxu0 0.0
  %2871 = vmatprep.subr.mxu0 0.0
  %2872 = vmatpush2.msra.mxu0 0.0
  %2873 = vmatprep.mubr.f32.mxu0 0.0
  %2874 = vmatmul.mubr.f32.gmra.mxu0 %v2663
  %v2875 = vpop.f32.mrf.mxu0
  %v2876 = vadd.f32 0.0, %v2875
  %v2877 = vpop.f32.mrf.mxu0
  %2878 = vdwg.mxu0
  %v2879 = vadd.f32 %v2808, %v2876
  %v2880 = vadd.f32 %v981, %v1295
  %2881 = vmatprep.subr.mxu0 0.0
  %2882 = vmatpush1.msra.mxu0 0.0
  %2883 = vmatprep.subr.mxu0 0.0
  %2884 = vmatpush1.msra.mxu0 0.0
  %2885 = vmatprep.subr.mxu0 0.0
  %2886 = vmatpush1.msra.mxu0 0.0
  %2887 = vmatprep.subr.mxu0 0.0
  %2888 = vmatpush1.msra.mxu0 0.0
  %2889 = vmatprep.subr.mxu0 0.0
  %2890 = vmatpush1.msra.mxu0 0.0
  %2891 = vmatprep.subr.mxu0 0.0
  %2892 = vmatpush1.msra.mxu0 0.0
  %2893 = vmatprep.subr.mxu0 0.0
  %2894 = vmatpush1.msra.mxu0 0.0
  %2895 = vmatprep.subr.mxu0 0.0
  %2896 = vmatpush1.msra.mxu0 0.0
  %2897 = vmatprep.subr.mxu0 0.0
  %2898 = vmatpush1.msra.mxu0 0.0
  %2899 = vmatprep.subr.mxu0 0.0
  %2900 = vmatpush1.msra.mxu0 0.0
  %2901 = vmatprep.subr.mxu0 0.0
  %2902 = vmatpush1.msra.mxu0 0.0
  %2903 = vmatprep.subr.mxu0 0.0
  %2904 = vmatpush1.msra.mxu0 0.0
  %2905 = vmatprep.subr.mxu0 0.0
  %2906 = vmatpush1.msra.mxu0 %v1316
  %2907 = vmatprep.subr.mxu0 0.0
  %2908 = vmatpush1.msra.mxu0 %v1315
  %2909 = vmatprep.subr.mxu0 0.0
  %2910 = vmatpush1.msra.mxu0 %v1314
  %2911 = vmatprep.subr.mxu0 0.0
  %2912 = vmatpush1.msra.mxu0 %v1313
  %2913 = vmatprep.subr.mxu0 0.0
  %2914 = vmatpush2.msra.mxu0 0.0
  %2915 = vmatprep.subr.mxu0 0.0
  %2916 = vmatpush2.msra.mxu0 0.0
  %2917 = vmatprep.subr.mxu0 0.0
  %2918 = vmatpush2.msra.mxu0 0.0
  %2919 = vmatprep.subr.mxu0 0.0
  %2920 = vmatpush2.msra.mxu0 0.0
  %2921 = vmatprep.subr.mxu0 0.0
  %2922 = vmatpush2.msra.mxu0 0.0
  %2923 = vmatprep.subr.mxu0 0.0
  %2924 = vmatpush2.msra.mxu0 0.0
  %2925 = vmatprep.subr.mxu0 0.0
  %2926 = vmatpush2.msra.mxu0 0.0
  %2927 = vmatprep.subr.mxu0 0.0
  %2928 = vmatpush2.msra.mxu0 0.0
  %2929 = vmatprep.subr.mxu0 0.0
  %2930 = vmatpush2.msra.mxu0 0.0
  %2931 = vmatprep.subr.mxu0 0.0
  %2932 = vmatpush2.msra.mxu0 0.0
  %2933 = vmatprep.subr.mxu0 0.0
  %2934 = vmatpush2.msra.mxu0 0.0
  %2935 = vmatprep.subr.mxu0 0.0
  %2936 = vmatpush2.msra.mxu0 0.0
  %2937 = vmatprep.subr.mxu0 0.0
  %2938 = vmatpush2.msra.mxu0 0.0
  %2939 = vmatprep.subr.mxu0 0.0
  %2940 = vmatpush2.msra.mxu0 0.0
  %2941 = vmatprep.subr.mxu0 0.0
  %2942 = vmatpush2.msra.mxu0 0.0
  %2943 = vmatprep.subr.mxu0 0.0
  %2944 = vmatpush2.msra.mxu0 0.0
  %2945 = vmatprep.mubr.f32.mxu0 0.0
  %2946 = vmatmul.mubr.f32.gmra.mxu0 %v2663
  %v2947 = vpop.f32.mrf.mxu0
  %v2948 = vadd.f32 0.0, %v2947
  %v2949 = vpop.f32.mrf.mxu0
  %2950 = vdwg.mxu0
  %v2951 = vadd.f32 %v2880, %v2948
  %v2952 = vxor.u32 %v2735, 2147483648
  %v2953 = vmul.f32 %v2952, 1.442695
  %v2954 = vpow.pop %v2953
  %v2955 = vadd.f32 %v2954, 1.0
  %v2956 = vrcp.pop %v2955
  %v2957 = vmul.f32 1.0, %v2956
  %v2958 = vxor.u32 %v2807, 2147483648
  %v2959 = vmul.f32 %v2958, 1.442695
  %v2960 = vpow.pop %v2959
  %v2961 = vadd.f32 %v2960, 1.0
  %v2962 = vrcp.pop %v2961
  %v2963 = vmul.f32 1.0, %v2962
  %v2964 = vtanh.pop %v2879
  %v2965 = vxor.u32 %v2951, 2147483648
  %v2966 = vmul.f32 %v2965, 1.442695
  %v2967 = vpow.pop %v2966
  %v2968 = vadd.f32 %v2967, 1.0
  %v2969 = vrcp.pop %v2968
  %v2970 = vmul.f32 1.0, %v2969
  %v2972 = vrot.slane %v2655, 6
  %v2974 = vmul.f32 %v2963, %v2972
  %v2975 = vmul.f32 %v2957, %v2964
  %v2976 = vadd.f32 %v2974, %v2975
  %v2977 = vtanh.pop %v2976
  %v2978 = vmul.f32 %v2970, %v2977
  %2979 = vst.msk [vmem:[#allocation2 + $0x8] sm:$0x3] %vm1632, %v2978
  %v2980 = vadd.f32 %v741, %v1635
  %v2982 = vsel %vm577, %v2978, 0
  %2984 = vmatprep.subr.mxu0 0.0
  %2985 = vmatpush1.msra.mxu0 0.0
  %2986 = vmatprep.subr.mxu0 0.0
  %2987 = vmatpush1.msra.mxu0 0.0
  %2988 = vmatprep.subr.mxu0 0.0
  %2989 = vmatpush1.msra.mxu0 0.0
  %2990 = vmatprep.subr.mxu0 0.0
  %2991 = vmatpush1.msra.mxu0 0.0
  %2992 = vmatprep.subr.mxu0 0.0
  %2993 = vmatpush1.msra.mxu0 0.0
  %2994 = vmatprep.subr.mxu0 0.0
  %2995 = vmatpush1.msra.mxu0 0.0
  %2996 = vmatprep.subr.mxu0 0.0
  %2997 = vmatpush1.msra.mxu0 0.0
  %2998 = vmatprep.subr.mxu0 0.0
  %2999 = vmatpush1.msra.mxu0 0.0
  %3000 = vmatprep.subr.mxu0 0.0
  %3001 = vmatpush1.msra.mxu0 0.0
  %3002 = vmatprep.subr.mxu0 0.0
  %3003 = vmatpush1.msra.mxu0 0.0
  %3004 = vmatprep.subr.mxu0 0.0
  %3005 = vmatpush1.msra.mxu0 0.0
  %3006 = vmatprep.subr.mxu0 0.0
  %3007 = vmatpush1.msra.mxu0 0.0
  %3008 = vmatprep.subr.mxu0 0.0
  %3009 = vmatpush1.msra.mxu0 %v1301
  %3010 = vmatprep.subr.mxu0 0.0
  %3011 = vmatpush1.msra.mxu0 %v1300
  %3012 = vmatprep.subr.mxu0 0.0
  %3013 = vmatpush1.msra.mxu0 %v1299
  %3014 = vmatprep.subr.mxu0 0.0
  %3015 = vmatpush1.msra.mxu0 %v1298
  %3016 = vmatprep.subr.mxu0 0.0
  %3017 = vmatpush2.msra.mxu0 0.0
  %3018 = vmatprep.subr.mxu0 0.0
  %3019 = vmatpush2.msra.mxu0 0.0
  %3020 = vmatprep.subr.mxu0 0.0
  %3021 = vmatpush2.msra.mxu0 0.0
  %3022 = vmatprep.subr.mxu0 0.0
  %3023 = vmatpush2.msra.mxu0 0.0
  %3024 = vmatprep.subr.mxu0 0.0
  %3025 = vmatpush2.msra.mxu0 0.0
  %3026 = vmatprep.subr.mxu0 0.0
  %3027 = vmatpush2.msra.mxu0 0.0
  %3028 = vmatprep.subr.mxu0 0.0
  %3029 = vmatpush2.msra.mxu0 0.0
  %3030 = vmatprep.subr.mxu0 0.0
  %3031 = vmatpush2.msra.mxu0 0.0
  %3032 = vmatprep.subr.mxu0 0.0
  %3033 = vmatpush2.msra.mxu0 0.0
  %3034 = vmatprep.subr.mxu0 0.0
  %3035 = vmatpush2.msra.mxu0 0.0
  %3036 = vmatprep.subr.mxu0 0.0
  %3037 = vmatpush2.msra.mxu0 0.0
  %3038 = vmatprep.subr.mxu0 0.0
  %3039 = vmatpush2.msra.mxu0 0.0
  %3040 = vmatprep.subr.mxu0 0.0
  %3041 = vmatpush2.msra.mxu0 0.0
  %3042 = vmatprep.subr.mxu0 0.0
  %3043 = vmatpush2.msra.mxu0 0.0
  %3044 = vmatprep.subr.mxu0 0.0
  %3045 = vmatpush2.msra.mxu0 0.0
  %3046 = vmatprep.subr.mxu0 0.0
  %3047 = vmatpush2.msra.mxu0 0.0
  %3048 = vmatprep.mubr.f32.mxu0 0.0
  %3049 = vmatmul.mubr.f32.gmra.mxu0 %v2982
  %v3050 = vpop.f32.mrf.mxu0
  %v3051 = vadd.f32 0.0, %v3050
  %v3052 = vpop.f32.mrf.mxu0
  %3053 = vdwg.mxu0
  %v3055 = vrot.slane %v3051, 6
  %v3057 = vadd.f32 %v2980, %v3055
  %v3058 = vadd.f32 %v821, %v1716
  %3059 = vmatprep.subr.mxu0 0.0
  %3060 = vmatpush1.msra.mxu0 0.0
  %3061 = vmatprep.subr.mxu0 0.0
  %3062 = vmatpush1.msra.mxu0 0.0
  %3063 = vmatprep.subr.mxu0 0.0
  %3064 = vmatpush1.msra.mxu0 0.0
  %3065 = vmatprep.subr.mxu0 0.0
  %3066 = vmatpush1.msra.mxu0 0.0
  %3067 = vmatprep.subr.mxu0 0.0
  %3068 = vmatpush1.msra.mxu0 0.0
  %3069 = vmatprep.subr.mxu0 0.0
  %3070 = vmatpush1.msra.mxu0 0.0
  %3071 = vmatprep.subr.mxu0 0.0
  %3072 = vmatpush1.msra.mxu0 0.0
  %3073 = vmatprep.subr.mxu0 0.0
  %3074 = vmatpush1.msra.mxu0 0.0
  %3075 = vmatprep.subr.mxu0 0.0
  %3076 = vmatpush1.msra.mxu0 0.0
  %3077 = vmatprep.subr.mxu0 0.0
  %3078 = vmatpush1.msra.mxu0 0.0
  %3079 = vmatprep.subr.mxu0 0.0
  %3080 = vmatpush1.msra.mxu0 0.0
  %3081 = vmatprep.subr.mxu0 0.0
  %3082 = vmatpush1.msra.mxu0 0.0
  %3083 = vmatprep.subr.mxu0 0.0
  %3084 = vmatpush1.msra.mxu0 %v1306
  %3085 = vmatprep.subr.mxu0 0.0
  %3086 = vmatpush1.msra.mxu0 %v1305
  %3087 = vmatprep.subr.mxu0 0.0
  %3088 = vmatpush1.msra.mxu0 %v1304
  %3089 = vmatprep.subr.mxu0 0.0
  %3090 = vmatpush1.msra.mxu0 %v1303
  %3091 = vmatprep.subr.mxu0 0.0
  %3092 = vmatpush2.msra.mxu0 0.0
  %3093 = vmatprep.subr.mxu0 0.0
  %3094 = vmatpush2.msra.mxu0 0.0
  %3095 = vmatprep.subr.mxu0 0.0
  %3096 = vmatpush2.msra.mxu0 0.0
  %3097 = vmatprep.subr.mxu0 0.0
  %3098 = vmatpush2.msra.mxu0 0.0
  %3099 = vmatprep.subr.mxu0 0.0
  %3100 = vmatpush2.msra.mxu0 0.0
  %3101 = vmatprep.subr.mxu0 0.0
  %3102 = vmatpush2.msra.mxu0 0.0
  %3103 = vmatprep.subr.mxu0 0.0
  %3104 = vmatpush2.msra.mxu0 0.0
  %3105 = vmatprep.subr.mxu0 0.0
  %3106 = vmatpush2.msra.mxu0 0.0
  %3107 = vmatprep.subr.mxu0 0.0
  %3108 = vmatpush2.msra.mxu0 0.0
  %3109 = vmatprep.subr.mxu0 0.0
  %3110 = vmatpush2.msra.mxu0 0.0
  %3111 = vmatprep.subr.mxu0 0.0
  %3112 = vmatpush2.msra.mxu0 0.0
  %3113 = vmatprep.subr.mxu0 0.0
  %3114 = vmatpush2.msra.mxu0 0.0
  %3115 = vmatprep.subr.mxu0 0.0
  %3116 = vmatpush2.msra.mxu0 0.0
  %3117 = vmatprep.subr.mxu0 0.0
  %3118 = vmatpush2.msra.mxu0 0.0
  %3119 = vmatprep.subr.mxu0 0.0
  %3120 = vmatpush2.msra.mxu0 0.0
  %3121 = vmatprep.subr.mxu0 0.0
  %3122 = vmatpush2.msra.mxu0 0.0
  %3123 = vmatprep.mubr.f32.mxu0 0.0
  %3124 = vmatmul.mubr.f32.gmra.mxu0 %v2982
  %v3125 = vpop.f32.mrf.mxu0
  %v3126 = vadd.f32 0.0, %v3125
  %v3127 = vpop.f32.mrf.mxu0
  %3128 = vdwg.mxu0
  %v3130 = vrot.slane %v3126, 6
  %v3132 = vadd.f32 %v3058, %v3130
  %v3133 = vadd.f32 %v901, %v1794
  %3134 = vmatprep.subr.mxu0 0.0
  %3135 = vmatpush1.msra.mxu0 0.0
  %3136 = vmatprep.subr.mxu0 0.0
  %3137 = vmatpush1.msra.mxu0 0.0
  %3138 = vmatprep.subr.mxu0 0.0
  %3139 = vmatpush1.msra.mxu0 0.0
  %3140 = vmatprep.subr.mxu0 0.0
  %3141 = vmatpush1.msra.mxu0 0.0
  %3142 = vmatprep.subr.mxu0 0.0
  %3143 = vmatpush1.msra.mxu0 0.0
  %3144 = vmatprep.subr.mxu0 0.0
  %3145 = vmatpush1.msra.mxu0 0.0
  %3146 = vmatprep.subr.mxu0 0.0
  %3147 = vmatpush1.msra.mxu0 0.0
  %3148 = vmatprep.subr.mxu0 0.0
  %3149 = vmatpush1.msra.mxu0 0.0
  %3150 = vmatprep.subr.mxu0 0.0
  %3151 = vmatpush1.msra.mxu0 0.0
  %3152 = vmatprep.subr.mxu0 0.0
  %3153 = vmatpush1.msra.mxu0 0.0
  %3154 = vmatprep.subr.mxu0 0.0
  %3155 = vmatpush1.msra.mxu0 0.0
  %3156 = vmatprep.subr.mxu0 0.0
  %3157 = vmatpush1.msra.mxu0 0.0
  %3158 = vmatprep.subr.mxu0 0.0
  %3159 = vmatpush1.msra.mxu0 %v1311
  %3160 = vmatprep.subr.mxu0 0.0
  %3161 = vmatpush1.msra.mxu0 %v1310
  %3162 = vmatprep.subr.mxu0 0.0
  %3163 = vmatpush1.msra.mxu0 %v1309
  %3164 = vmatprep.subr.mxu0 0.0
  %3165 = vmatpush1.msra.mxu0 %v1308
  %3166 = vmatprep.subr.mxu0 0.0
  %3167 = vmatpush2.msra.mxu0 0.0
  %3168 = vmatprep.subr.mxu0 0.0
  %3169 = vmatpush2.msra.mxu0 0.0
  %3170 = vmatprep.subr.mxu0 0.0
  %3171 = vmatpush2.msra.mxu0 0.0
  %3172 = vmatprep.subr.mxu0 0.0
  %3173 = vmatpush2.msra.mxu0 0.0
  %3174 = vmatprep.subr.mxu0 0.0
  %3175 = vmatpush2.msra.mxu0 0.0
  %3176 = vmatprep.subr.mxu0 0.0
  %3177 = vmatpush2.msra.mxu0 0.0
  %3178 = vmatprep.subr.mxu0 0.0
  %3179 = vmatpush2.msra.mxu0 0.0
  %3180 = vmatprep.subr.mxu0 0.0
  %3181 = vmatpush2.msra.mxu0 0.0
  %3182 = vmatprep.subr.mxu0 0.0
  %3183 = vmatpush2.msra.mxu0 0.0
  %3184 = vmatprep.subr.mxu0 0.0
  %3185 = vmatpush2.msra.mxu0 0.0
  %3186 = vmatprep.subr.mxu0 0.0
  %3187 = vmatpush2.msra.mxu0 0.0
  %3188 = vmatprep.subr.mxu0 0.0
  %3189 = vmatpush2.msra.mxu0 0.0
  %3190 = vmatprep.subr.mxu0 0.0
  %3191 = vmatpush2.msra.mxu0 0.0
  %3192 = vmatprep.subr.mxu0 0.0
  %3193 = vmatpush2.msra.mxu0 0.0
  %3194 = vmatprep.subr.mxu0 0.0
  %3195 = vmatpush2.msra.mxu0 0.0
  %3196 = vmatprep.subr.mxu0 0.0
  %3197 = vmatpush2.msra.mxu0 0.0
  %3198 = vmatprep.mubr.f32.mxu0 0.0
  %3199 = vmatmul.mubr.f32.gmra.mxu0 %v2982
  %v3200 = vpop.f32.mrf.mxu0
  %v3201 = vadd.f32 0.0, %v3200
  %v3202 = vpop.f32.mrf.mxu0
  %3203 = vdwg.mxu0
  %v3205 = vrot.slane %v3201, 6
  %v3207 = vadd.f32 %v3133, %v3205
  %v3208 = vadd.f32 %v981, %v1872
  %3209 = vmatprep.subr.mxu0 0.0
  %3210 = vmatpush1.msra.mxu0 0.0
  %3211 = vmatprep.subr.mxu0 0.0
  %3212 = vmatpush1.msra.mxu0 0.0
  %3213 = vmatprep.subr.mxu0 0.0
  %3214 = vmatpush1.msra.mxu0 0.0
  %3215 = vmatprep.subr.mxu0 0.0
  %3216 = vmatpush1.msra.mxu0 0.0
  %3217 = vmatprep.subr.mxu0 0.0
  %3218 = vmatpush1.msra.mxu0 0.0
  %3219 = vmatprep.subr.mxu0 0.0
  %3220 = vmatpush1.msra.mxu0 0.0
  %3221 = vmatprep.subr.mxu0 0.0
  %3222 = vmatpush1.msra.mxu0 0.0
  %3223 = vmatprep.subr.mxu0 0.0
  %3224 = vmatpush1.msra.mxu0 0.0
  %3225 = vmatprep.subr.mxu0 0.0
  %3226 = vmatpush1.msra.mxu0 0.0
  %3227 = vmatprep.subr.mxu0 0.0
  %3228 = vmatpush1.msra.mxu0 0.0
  %3229 = vmatprep.subr.mxu0 0.0
  %3230 = vmatpush1.msra.mxu0 0.0
  %3231 = vmatprep.subr.mxu0 0.0
  %3232 = vmatpush1.msra.mxu0 0.0
  %3233 = vmatprep.subr.mxu0 0.0
  %3234 = vmatpush1.msra.mxu0 %v1316
  %3235 = vmatprep.subr.mxu0 0.0
  %3236 = vmatpush1.msra.mxu0 %v1315
  %3237 = vmatprep.subr.mxu0 0.0
  %3238 = vmatpush1.msra.mxu0 %v1314
  %3239 = vmatprep.subr.mxu0 0.0
  %3240 = vmatpush1.msra.mxu0 %v1313
  %3241 = vmatprep.subr.mxu0 0.0
  %3242 = vmatpush2.msra.mxu0 0.0
  %3243 = vmatprep.subr.mxu0 0.0
  %3244 = vmatpush2.msra.mxu0 0.0
  %3245 = vmatprep.subr.mxu0 0.0
  %3246 = vmatpush2.msra.mxu0 0.0
  %3247 = vmatprep.subr.mxu0 0.0
  %3248 = vmatpush2.msra.mxu0 0.0
  %3249 = vmatprep.subr.mxu0 0.0
  %3250 = vmatpush2.msra.mxu0 0.0
  %3251 = vmatprep.subr.mxu0 0.0
  %3252 = vmatpush2.msra.mxu0 0.0
  %3253 = vmatprep.subr.mxu0 0.0
  %3254 = vmatpush2.msra.mxu0 0.0
  %3255 = vmatprep.subr.mxu0 0.0
  %3256 = vmatpush2.msra.mxu0 0.0
  %3257 = vmatprep.subr.mxu0 0.0
  %3258 = vmatpush2.msra.mxu0 0.0
  %3259 = vmatprep.subr.mxu0 0.0
  %3260 = vmatpush2.msra.mxu0 0.0
  %3261 = vmatprep.subr.mxu0 0.0
  %3262 = vmatpush2.msra.mxu0 0.0
  %3263 = vmatprep.subr.mxu0 0.0
  %3264 = vmatpush2.msra.mxu0 0.0
  %3265 = vmatprep.subr.mxu0 0.0
  %3266 = vmatpush2.msra.mxu0 0.0
  %3267 = vmatprep.subr.mxu0 0.0
  %3268 = vmatpush2.msra.mxu0 0.0
  %3269 = vmatprep.subr.mxu0 0.0
  %3270 = vmatpush2.msra.mxu0 0.0
  %3271 = vmatprep.subr.mxu0 0.0
  %3272 = vmatpush2.msra.mxu0 0.0
  %3273 = vmatprep.mubr.f32.mxu0 0.0
  %3274 = vmatmul.mubr.f32.gmra.mxu0 %v2982
  %v3275 = vpop.f32.mrf.mxu0
  %v3276 = vadd.f32 0.0, %v3275
  %v3277 = vpop.f32.mrf.mxu0
  %3278 = vdwg.mxu0
  %v3280 = vrot.slane %v3276, 6
  %v3282 = vadd.f32 %v3208, %v3280
  %v3283 = vxor.u32 %v3057, 2147483648
  %v3284 = vmul.f32 %v3283, 1.442695
  %v3285 = vpow.pop %v3284
  %v3286 = vadd.f32 %v3285, 1.0
  %v3287 = vrcp.pop %v3286
  %v3288 = vmul.f32 1.0, %v3287
  %v3289 = vxor.u32 %v3132, 2147483648
  %v3290 = vmul.f32 %v3289, 1.442695
  %v3291 = vpow.pop %v3290
  %v3292 = vadd.f32 %v3291, 1.0
  %v3293 = vrcp.pop %v3292
  %v3294 = vmul.f32 1.0, %v3293
  %v3295 = vtanh.pop %v3207
  %v3296 = vxor.u32 %v3282, 2147483648
  %v3297 = vmul.f32 %v3296, 1.442695
  %v3298 = vpow.pop %v3297
  %v3299 = vadd.f32 %v3298, 1.0
  %v3300 = vrcp.pop %v3299
  %v3301 = vmul.f32 1.0, %v3300
  %v3303 = vrot.slane %v2976, 6
  %v3305 = vmul.f32 %v3294, %v3303
  %v3306 = vmul.f32 %v3288, %v3295
  %v3307 = vadd.f32 %v3305, %v3306
  %v3308 = vtanh.pop %v3307
  %v3309 = vmul.f32 %v3301, %v3308
  %3310 = vst.msk [vmem:[#allocation2 + $0x8] sm:$0xc] %vm1976, %v3309
  %v3311 = vadd.f32 %v741, %v1978
  %v3313 = vrot.slane %v3309, 2
  %v3314 = vsel %vm577, %v3313, 0
  %3316 = vmatprep.subr.mxu0 0.0
  %3317 = vmatpush1.msra.mxu0 0.0
  %3318 = vmatprep.subr.mxu0 0.0
  %3319 = vmatpush1.msra.mxu0 0.0
  %3320 = vmatprep.subr.mxu0 0.0
  %3321 = vmatpush1.msra.mxu0 0.0
  %3322 = vmatprep.subr.mxu0 0.0
  %3323 = vmatpush1.msra.mxu0 0.0
  %3324 = vmatprep.subr.mxu0 0.0
  %3325 = vmatpush1.msra.mxu0 0.0
  %3326 = vmatprep.subr.mxu0 0.0
  %3327 = vmatpush1.msra.mxu0 0.0
  %3328 = vmatprep.subr.mxu0 0.0
  %3329 = vmatpush1.msra.mxu0 0.0
  %3330 = vmatprep.subr.mxu0 0.0
  %3331 = vmatpush1.msra.mxu0 0.0
  %3332 = vmatprep.subr.mxu0 0.0
  %3333 = vmatpush1.msra.mxu0 0.0
  %3334 = vmatprep.subr.mxu0 0.0
  %3335 = vmatpush1.msra.mxu0 0.0
  %3336 = vmatprep.subr.mxu0 0.0
  %3337 = vmatpush1.msra.mxu0 0.0
  %3338 = vmatprep.subr.mxu0 0.0
  %3339 = vmatpush1.msra.mxu0 0.0
  %3340 = vmatprep.subr.mxu0 0.0
  %3341 = vmatpush1.msra.mxu0 %v1301
  %3342 = vmatprep.subr.mxu0 0.0
  %3343 = vmatpush1.msra.mxu0 %v1300
  %3344 = vmatprep.subr.mxu0 0.0
  %3345 = vmatpush1.msra.mxu0 %v1299
  %3346 = vmatprep.subr.mxu0 0.0
  %3347 = vmatpush1.msra.mxu0 %v1298
  %3348 = vmatprep.subr.mxu0 0.0
  %3349 = vmatpush2.msra.mxu0 0.0
  %3350 = vmatprep.subr.mxu0 0.0
  %3351 = vmatpush2.msra.mxu0 0.0
  %3352 = vmatprep.subr.mxu0 0.0
  %3353 = vmatpush2.msra.mxu0 0.0
  %3354 = vmatprep.subr.mxu0 0.0
  %3355 = vmatpush2.msra.mxu0 0.0
  %3356 = vmatprep.subr.mxu0 0.0
  %3357 = vmatpush2.msra.mxu0 0.0
  %3358 = vmatprep.subr.mxu0 0.0
  %3359 = vmatpush2.msra.mxu0 0.0
  %3360 = vmatprep.subr.mxu0 0.0
  %3361 = vmatpush2.msra.mxu0 0.0
  %3362 = vmatprep.subr.mxu0 0.0
  %3363 = vmatpush2.msra.mxu0 0.0
  %3364 = vmatprep.subr.mxu0 0.0
  %3365 = vmatpush2.msra.mxu0 0.0
  %3366 = vmatprep.subr.mxu0 0.0
  %3367 = vmatpush2.msra.mxu0 0.0
  %3368 = vmatprep.subr.mxu0 0.0
  %3369 = vmatpush2.msra.mxu0 0.0
  %3370 = vmatprep.subr.mxu0 0.0
  %3371 = vmatpush2.msra.mxu0 0.0
  %3372 = vmatprep.subr.mxu0 0.0
  %3373 = vmatpush2.msra.mxu0 0.0
  %3374 = vmatprep.subr.mxu0 0.0
  %3375 = vmatpush2.msra.mxu0 0.0
  %3376 = vmatprep.subr.mxu0 0.0
  %3377 = vmatpush2.msra.mxu0 0.0
  %3378 = vmatprep.subr.mxu0 0.0
  %3379 = vmatpush2.msra.mxu0 0.0
  %3380 = vmatprep.mubr.f32.mxu0 0.0
  %3381 = vmatmul.mubr.f32.gmra.mxu0 %v3314
  %v3382 = vpop.f32.mrf.mxu0
  %v3383 = vadd.f32 0.0, %v3382
  %v3384 = vpop.f32.mrf.mxu0
  %3385 = vdwg.mxu0
  %v3387 = vrot.slane %v3383, 4
  %v3389 = vadd.f32 %v3311, %v3387
  %v3390 = vadd.f32 %v821, %v2059
  %3391 = vmatprep.subr.mxu0 0.0
  %3392 = vmatpush1.msra.mxu0 0.0
  %3393 = vmatprep.subr.mxu0 0.0
  %3394 = vmatpush1.msra.mxu0 0.0
  %3395 = vmatprep.subr.mxu0 0.0
  %3396 = vmatpush1.msra.mxu0 0.0
  %3397 = vmatprep.subr.mxu0 0.0
  %3398 = vmatpush1.msra.mxu0 0.0
  %3399 = vmatprep.subr.mxu0 0.0
  %3400 = vmatpush1.msra.mxu0 0.0
  %3401 = vmatprep.subr.mxu0 0.0
  %3402 = vmatpush1.msra.mxu0 0.0
  %3403 = vmatprep.subr.mxu0 0.0
  %3404 = vmatpush1.msra.mxu0 0.0
  %3405 = vmatprep.subr.mxu0 0.0
  %3406 = vmatpush1.msra.mxu0 0.0
  %3407 = vmatprep.subr.mxu0 0.0
  %3408 = vmatpush1.msra.mxu0 0.0
  %3409 = vmatprep.subr.mxu0 0.0
  %3410 = vmatpush1.msra.mxu0 0.0
  %3411 = vmatprep.subr.mxu0 0.0
  %3412 = vmatpush1.msra.mxu0 0.0
  %3413 = vmatprep.subr.mxu0 0.0
  %3414 = vmatpush1.msra.mxu0 0.0
  %3415 = vmatprep.subr.mxu0 0.0
  %3416 = vmatpush1.msra.mxu0 %v1306
  %3417 = vmatprep.subr.mxu0 0.0
  %3418 = vmatpush1.msra.mxu0 %v1305
  %3419 = vmatprep.subr.mxu0 0.0
  %3420 = vmatpush1.msra.mxu0 %v1304
  %3421 = vmatprep.subr.mxu0 0.0
  %3422 = vmatpush1.msra.mxu0 %v1303
  %3423 = vmatprep.subr.mxu0 0.0
  %3424 = vmatpush2.msra.mxu0 0.0
  %3425 = vmatprep.subr.mxu0 0.0
  %3426 = vmatpush2.msra.mxu0 0.0
  %3427 = vmatprep.subr.mxu0 0.0
  %3428 = vmatpush2.msra.mxu0 0.0
  %3429 = vmatprep.subr.mxu0 0.0
  %3430 = vmatpush2.msra.mxu0 0.0
  %3431 = vmatprep.subr.mxu0 0.0
  %3432 = vmatpush2.msra.mxu0 0.0
  %3433 = vmatprep.subr.mxu0 0.0
  %3434 = vmatpush2.msra.mxu0 0.0
  %3435 = vmatprep.subr.mxu0 0.0
  %3436 = vmatpush2.msra.mxu0 0.0
  %3437 = vmatprep.subr.mxu0 0.0
  %3438 = vmatpush2.msra.mxu0 0.0
  %3439 = vmatprep.subr.mxu0 0.0
  %3440 = vmatpush2.msra.mxu0 0.0
  %3441 = vmatprep.subr.mxu0 0.0
  %3442 = vmatpush2.msra.mxu0 0.0
  %3443 = vmatprep.subr.mxu0 0.0
  %3444 = vmatpush2.msra.mxu0 0.0
  %3445 = vmatprep.subr.mxu0 0.0
  %3446 = vmatpush2.msra.mxu0 0.0
  %3447 = vmatprep.subr.mxu0 0.0
  %3448 = vmatpush2.msra.mxu0 0.0
  %3449 = vmatprep.subr.mxu0 0.0
  %3450 = vmatpush2.msra.mxu0 0.0
  %3451 = vmatprep.subr.mxu0 0.0
  %3452 = vmatpush2.msra.mxu0 0.0
  %3453 = vmatprep.subr.mxu0 0.0
  %3454 = vmatpush2.msra.mxu0 0.0
  %3455 = vmatprep.mubr.f32.mxu0 0.0
  %3456 = vmatmul.mubr.f32.gmra.mxu0 %v3314
  %v3457 = vpop.f32.mrf.mxu0
  %v3458 = vadd.f32 0.0, %v3457
  %v3459 = vpop.f32.mrf.mxu0
  %3460 = vdwg.mxu0
  %v3462 = vrot.slane %v3458, 4
  %v3464 = vadd.f32 %v3390, %v3462
  %v3465 = vadd.f32 %v901, %v2136
  %3466 = vmatprep.subr.mxu0 0.0
  %3467 = vmatpush1.msra.mxu0 0.0
  %3468 = vmatprep.subr.mxu0 0.0
  %3469 = vmatpush1.msra.mxu0 0.0
  %3470 = vmatprep.subr.mxu0 0.0
  %3471 = vmatpush1.msra.mxu0 0.0
  %3472 = vmatprep.subr.mxu0 0.0
  %3473 = vmatpush1.msra.mxu0 0.0
  %3474 = vmatprep.subr.mxu0 0.0
  %3475 = vmatpush1.msra.mxu0 0.0
  %3476 = vmatprep.subr.mxu0 0.0
  %3477 = vmatpush1.msra.mxu0 0.0
  %3478 = vmatprep.subr.mxu0 0.0
  %3479 = vmatpush1.msra.mxu0 0.0
  %3480 = vmatprep.subr.mxu0 0.0
  %3481 = vmatpush1.msra.mxu0 0.0
  %3482 = vmatprep.subr.mxu0 0.0
  %3483 = vmatpush1.msra.mxu0 0.0
  %3484 = vmatprep.subr.mxu0 0.0
  %3485 = vmatpush1.msra.mxu0 0.0
  %3486 = vmatprep.subr.mxu0 0.0
  %3487 = vmatpush1.msra.mxu0 0.0
  %3488 = vmatprep.subr.mxu0 0.0
  %3489 = vmatpush1.msra.mxu0 0.0
  %3490 = vmatprep.subr.mxu0 0.0
  %3491 = vmatpush1.msra.mxu0 %v1311
  %3492 = vmatprep.subr.mxu0 0.0
  %3493 = vmatpush1.msra.mxu0 %v1310
  %3494 = vmatprep.subr.mxu0 0.0
  %3495 = vmatpush1.msra.mxu0 %v1309
  %3496 = vmatprep.subr.mxu0 0.0
  %3497 = vmatpush1.msra.mxu0 %v1308
  %3498 = vmatprep.subr.mxu0 0.0
  %3499 = vmatpush2.msra.mxu0 0.0
  %3500 = vmatprep.subr.mxu0 0.0
  %3501 = vmatpush2.msra.mxu0 0.0
  %3502 = vmatprep.subr.mxu0 0.0
  %3503 = vmatpush2.msra.mxu0 0.0
  %3504 = vmatprep.subr.mxu0 0.0
  %3505 = vmatpush2.msra.mxu0 0.0
  %3506 = vmatprep.subr.mxu0 0.0
  %3507 = vmatpush2.msra.mxu0 0.0
  %3508 = vmatprep.subr.mxu0 0.0
  %3509 = vmatpush2.msra.mxu0 0.0
  %3510 = vmatprep.subr.mxu0 0.0
  %3511 = vmatpush2.msra.mxu0 0.0
  %3512 = vmatprep.subr.mxu0 0.0
  %3513 = vmatpush2.msra.mxu0 0.0
  %3514 = vmatprep.subr.mxu0 0.0
  %3515 = vmatpush2.msra.mxu0 0.0
  %3516 = vmatprep.subr.mxu0 0.0
  %3517 = vmatpush2.msra.mxu0 0.0
  %3518 = vmatprep.subr.mxu0 0.0
  %3519 = vmatpush2.msra.mxu0 0.0
  %3520 = vmatprep.subr.mxu0 0.0
  %3521 = vmatpush2.msra.mxu0 0.0
  %3522 = vmatprep.subr.mxu0 0.0
  %3523 = vmatpush2.msra.mxu0 0.0
  %3524 = vmatprep.subr.mxu0 0.0
  %3525 = vmatpush2.msra.mxu0 0.0
  %3526 = vmatprep.subr.mxu0 0.0
  %3527 = vmatpush2.msra.mxu0 0.0
  %3528 = vmatprep.subr.mxu0 0.0
  %3529 = vmatpush2.msra.mxu0 0.0
  %3530 = vmatprep.mubr.f32.mxu0 0.0
  %3531 = vmatmul.mubr.f32.gmra.mxu0 %v3314
  %v3532 = vpop.f32.mrf.mxu0
  %v3533 = vadd.f32 0.0, %v3532
  %v3534 = vpop.f32.mrf.mxu0
  %3535 = vdwg.mxu0
  %v3537 = vrot.slane %v3533, 4
  %v3539 = vadd.f32 %v3465, %v3537
  %v3540 = vadd.f32 %v981, %v2213
  %3541 = vmatprep.subr.mxu0 0.0
  %3542 = vmatpush1.msra.mxu0 0.0
  %3543 = vmatprep.subr.mxu0 0.0
  %3544 = vmatpush1.msra.mxu0 0.0
  %3545 = vmatprep.subr.mxu0 0.0
  %3546 = vmatpush1.msra.mxu0 0.0
  %3547 = vmatprep.subr.mxu0 0.0
  %3548 = vmatpush1.msra.mxu0 0.0
  %3549 = vmatprep.subr.mxu0 0.0
  %3550 = vmatpush1.msra.mxu0 0.0
  %3551 = vmatprep.subr.mxu0 0.0
  %3552 = vmatpush1.msra.mxu0 0.0
  %3553 = vmatprep.subr.mxu0 0.0
  %3554 = vmatpush1.msra.mxu0 0.0
  %3555 = vmatprep.subr.mxu0 0.0
  %3556 = vmatpush1.msra.mxu0 0.0
  %3557 = vmatprep.subr.mxu0 0.0
  %3558 = vmatpush1.msra.mxu0 0.0
  %3559 = vmatprep.subr.mxu0 0.0
  %3560 = vmatpush1.msra.mxu0 0.0
  %3561 = vmatprep.subr.mxu0 0.0
  %3562 = vmatpush1.msra.mxu0 0.0
  %3563 = vmatprep.subr.mxu0 0.0
  %3564 = vmatpush1.msra.mxu0 0.0
  %3565 = vmatprep.subr.mxu0 0.0
  %3566 = vmatpush1.msra.mxu0 %v1316
  %3567 = vmatprep.subr.mxu0 0.0
  %3568 = vmatpush1.msra.mxu0 %v1315
  %3569 = vmatprep.subr.mxu0 0.0
  %3570 = vmatpush1.msra.mxu0 %v1314
  %3571 = vmatprep.subr.mxu0 0.0
  %3572 = vmatpush1.msra.mxu0 %v1313
  %3573 = vmatprep.subr.mxu0 0.0
  %3574 = vmatpush2.msra.mxu0 0.0
  %3575 = vmatprep.subr.mxu0 0.0
  %3576 = vmatpush2.msra.mxu0 0.0
  %3577 = vmatprep.subr.mxu0 0.0
  %3578 = vmatpush2.msra.mxu0 0.0
  %3579 = vmatprep.subr.mxu0 0.0
  %3580 = vmatpush2.msra.mxu0 0.0
  %3581 = vmatprep.subr.mxu0 0.0
  %3582 = vmatpush2.msra.mxu0 0.0
  %3583 = vmatprep.subr.mxu0 0.0
  %3584 = vmatpush2.msra.mxu0 0.0
  %3585 = vmatprep.subr.mxu0 0.0
  %3586 = vmatpush2.msra.mxu0 0.0
  %3587 = vmatprep.subr.mxu0 0.0
  %3588 = vmatpush2.msra.mxu0 0.0
  %3589 = vmatprep.subr.mxu0 0.0
  %3590 = vmatpush2.msra.mxu0 0.0
  %3591 = vmatprep.subr.mxu0 0.0
  %3592 = vmatpush2.msra.mxu0 0.0
  %3593 = vmatprep.subr.mxu0 0.0
  %3594 = vmatpush2.msra.mxu0 0.0
  %3595 = vmatprep.subr.mxu0 0.0
  %3596 = vmatpush2.msra.mxu0 0.0
  %3597 = vmatprep.subr.mxu0 0.0
  %3598 = vmatpush2.msra.mxu0 0.0
  %3599 = vmatprep.subr.mxu0 0.0
  %3600 = vmatpush2.msra.mxu0 0.0
  %3601 = vmatprep.subr.mxu0 0.0
  %3602 = vmatpush2.msra.mxu0 0.0
  %3603 = vmatprep.subr.mxu0 0.0
  %3604 = vmatpush2.msra.mxu0 0.0
  %3605 = vmatprep.mubr.f32.mxu0 0.0
  %3606 = vmatmul.mubr.f32.gmra.mxu0 %v3314
  %v3607 = vpop.f32.mrf.mxu0
  %v3608 = vadd.f32 0.0, %v3607
  %v3609 = vpop.f32.mrf.mxu0
  %3610 = vdwg.mxu0
  %v3612 = vrot.slane %v3608, 4
  %v3614 = vadd.f32 %v3540, %v3612
  %v3615 = vxor.u32 %v3389, 2147483648
  %v3616 = vmul.f32 %v3615, 1.442695
  %v3617 = vpow.pop %v3616
  %v3618 = vadd.f32 %v3617, 1.0
  %v3619 = vrcp.pop %v3618
  %v3620 = vmul.f32 1.0, %v3619
  %v3621 = vxor.u32 %v3464, 2147483648
  %v3622 = vmul.f32 %v3621, 1.442695
  %v3623 = vpow.pop %v3622
  %v3624 = vadd.f32 %v3623, 1.0
  %v3625 = vrcp.pop %v3624
  %v3626 = vmul.f32 1.0, %v3625
  %v3627 = vtanh.pop %v3539
  %v3628 = vxor.u32 %v3614, 2147483648
  %v3629 = vmul.f32 %v3628, 1.442695
  %v3630 = vpow.pop %v3629
  %v3631 = vadd.f32 %v3630, 1.0
  %v3632 = vrcp.pop %v3631
  %v3633 = vmul.f32 1.0, %v3632
  %v3635 = vrot.slane %v3307, 6
  %v3637 = vmul.f32 %v3626, %v3635
  %v3638 = vmul.f32 %v3620, %v3627
  %v3639 = vadd.f32 %v3637, %v3638
  %v3640 = vtanh.pop %v3639
  %v3641 = vmul.f32 %v3633, %v3640
  %3642 = vst.msk [vmem:[#allocation2 + $0x8] sm:$0x30] %vm2317, %v3641
  %v3643 = vadd.f32 %v741, %v2319
  %v3645 = vrot.slane %v3641, 4
  %v3646 = vsel %vm577, %v3645, 0
  %3648 = vmatprep.subr.mxu0 0.0
  %3649 = vmatpush1.msra.mxu0 0.0
  %3650 = vmatprep.subr.mxu0 0.0
  %3651 = vmatpush1.msra.mxu0 0.0
  %3652 = vmatprep.subr.mxu0 0.0
  %3653 = vmatpush1.msra.mxu0 0.0
  %3654 = vmatprep.subr.mxu0 0.0
  %3655 = vmatpush1.msra.mxu0 0.0
  %3656 = vmatprep.subr.mxu0 0.0
  %3657 = vmatpush1.msra.mxu0 0.0
  %3658 = vmatprep.subr.mxu0 0.0
  %3659 = vmatpush1.msra.mxu0 0.0
  %3660 = vmatprep.subr.mxu0 0.0
  %3661 = vmatpush1.msra.mxu0 0.0
  %3662 = vmatprep.subr.mxu0 0.0
  %3663 = vmatpush1.msra.mxu0 0.0
  %3664 = vmatprep.subr.mxu0 0.0
  %3665 = vmatpush1.msra.mxu0 0.0
  %3666 = vmatprep.subr.mxu0 0.0
  %3667 = vmatpush1.msra.mxu0 0.0
  %3668 = vmatprep.subr.mxu0 0.0
  %3669 = vmatpush1.msra.mxu0 0.0
  %3670 = vmatprep.subr.mxu0 0.0
  %3671 = vmatpush1.msra.mxu0 0.0
  %3672 = vmatprep.subr.mxu0 0.0
  %3673 = vmatpush1.msra.mxu0 %v1301
  %3674 = vmatprep.subr.mxu0 0.0
  %3675 = vmatpush1.msra.mxu0 %v1300
  %3676 = vmatprep.subr.mxu0 0.0
  %3677 = vmatpush1.msra.mxu0 %v1299
  %3678 = vmatprep.subr.mxu0 0.0
  %3679 = vmatpush1.msra.mxu0 %v1298
  %3680 = vmatprep.subr.mxu0 0.0
  %3681 = vmatpush2.msra.mxu0 0.0
  %3682 = vmatprep.subr.mxu0 0.0
  %3683 = vmatpush2.msra.mxu0 0.0
  %3684 = vmatprep.subr.mxu0 0.0
  %3685 = vmatpush2.msra.mxu0 0.0
  %3686 = vmatprep.subr.mxu0 0.0
  %3687 = vmatpush2.msra.mxu0 0.0
  %3688 = vmatprep.subr.mxu0 0.0
  %3689 = vmatpush2.msra.mxu0 0.0
  %3690 = vmatprep.subr.mxu0 0.0
  %3691 = vmatpush2.msra.mxu0 0.0
  %3692 = vmatprep.subr.mxu0 0.0
  %3693 = vmatpush2.msra.mxu0 0.0
  %3694 = vmatprep.subr.mxu0 0.0
  %3695 = vmatpush2.msra.mxu0 0.0
  %3696 = vmatprep.subr.mxu0 0.0
  %3697 = vmatpush2.msra.mxu0 0.0
  %3698 = vmatprep.subr.mxu0 0.0
  %3699 = vmatpush2.msra.mxu0 0.0
  %3700 = vmatprep.subr.mxu0 0.0
  %3701 = vmatpush2.msra.mxu0 0.0
  %3702 = vmatprep.subr.mxu0 0.0
  %3703 = vmatpush2.msra.mxu0 0.0
  %3704 = vmatprep.subr.mxu0 0.0
  %3705 = vmatpush2.msra.mxu0 0.0
  %3706 = vmatprep.subr.mxu0 0.0
  %3707 = vmatpush2.msra.mxu0 0.0
  %3708 = vmatprep.subr.mxu0 0.0
  %3709 = vmatpush2.msra.mxu0 0.0
  %3710 = vmatprep.subr.mxu0 0.0
  %3711 = vmatpush2.msra.mxu0 0.0
  %3712 = vmatprep.mubr.f32.mxu0 0.0
  %3713 = vmatmul.mubr.f32.gmra.mxu0 %v3646
  %v3714 = vpop.f32.mrf.mxu0
  %v3715 = vadd.f32 0.0, %v3714
  %v3716 = vpop.f32.mrf.mxu0
  %3717 = vdwg.mxu0
  %v3719 = vrot.slane %v3715, 2
  %v3721 = vadd.f32 %v3643, %v3719
  %v3722 = vadd.f32 %v821, %v2400
  %3723 = vmatprep.subr.mxu0 0.0
  %3724 = vmatpush1.msra.mxu0 0.0
  %3725 = vmatprep.subr.mxu0 0.0
  %3726 = vmatpush1.msra.mxu0 0.0
  %3727 = vmatprep.subr.mxu0 0.0
  %3728 = vmatpush1.msra.mxu0 0.0
  %3729 = vmatprep.subr.mxu0 0.0
  %3730 = vmatpush1.msra.mxu0 0.0
  %3731 = vmatprep.subr.mxu0 0.0
  %3732 = vmatpush1.msra.mxu0 0.0
  %3733 = vmatprep.subr.mxu0 0.0
  %3734 = vmatpush1.msra.mxu0 0.0
  %3735 = vmatprep.subr.mxu0 0.0
  %3736 = vmatpush1.msra.mxu0 0.0
  %3737 = vmatprep.subr.mxu0 0.0
  %3738 = vmatpush1.msra.mxu0 0.0
  %3739 = vmatprep.subr.mxu0 0.0
  %3740 = vmatpush1.msra.mxu0 0.0
  %3741 = vmatprep.subr.mxu0 0.0
  %3742 = vmatpush1.msra.mxu0 0.0
  %3743 = vmatprep.subr.mxu0 0.0
  %3744 = vmatpush1.msra.mxu0 0.0
  %3745 = vmatprep.subr.mxu0 0.0
  %3746 = vmatpush1.msra.mxu0 0.0
  %3747 = vmatprep.subr.mxu0 0.0
  %3748 = vmatpush1.msra.mxu0 %v1306
  %3749 = vmatprep.subr.mxu0 0.0
  %3750 = vmatpush1.msra.mxu0 %v1305
  %3751 = vmatprep.subr.mxu0 0.0
  %3752 = vmatpush1.msra.mxu0 %v1304
  %3753 = vmatprep.subr.mxu0 0.0
  %3754 = vmatpush1.msra.mxu0 %v1303
  %3755 = vmatprep.subr.mxu0 0.0
  %3756 = vmatpush2.msra.mxu0 0.0
  %3757 = vmatprep.subr.mxu0 0.0
  %3758 = vmatpush2.msra.mxu0 0.0
  %3759 = vmatprep.subr.mxu0 0.0
  %3760 = vmatpush2.msra.mxu0 0.0
  %3761 = vmatprep.subr.mxu0 0.0
  %3762 = vmatpush2.msra.mxu0 0.0
  %3763 = vmatprep.subr.mxu0 0.0
  %3764 = vmatpush2.msra.mxu0 0.0
  %3765 = vmatprep.subr.mxu0 0.0
  %3766 = vmatpush2.msra.mxu0 0.0
  %3767 = vmatprep.subr.mxu0 0.0
  %3768 = vmatpush2.msra.mxu0 0.0
  %3769 = vmatprep.subr.mxu0 0.0
  %3770 = vmatpush2.msra.mxu0 0.0
  %3771 = vmatprep.subr.mxu0 0.0
  %3772 = vmatpush2.msra.mxu0 0.0
  %3773 = vmatprep.subr.mxu0 0.0
  %3774 = vmatpush2.msra.mxu0 0.0
  %3775 = vmatprep.subr.mxu0 0.0
  %3776 = vmatpush2.msra.mxu0 0.0
  %3777 = vmatprep.subr.mxu0 0.0
  %3778 = vmatpush2.msra.mxu0 0.0
  %3779 = vmatprep.subr.mxu0 0.0
  %3780 = vmatpush2.msra.mxu0 0.0
  %3781 = vmatprep.subr.mxu0 0.0
  %3782 = vmatpush2.msra.mxu0 0.0
  %3783 = vmatprep.subr.mxu0 0.0
  %3784 = vmatpush2.msra.mxu0 0.0
  %3785 = vmatprep.subr.mxu0 0.0
  %3786 = vmatpush2.msra.mxu0 0.0
  %3787 = vmatprep.mubr.f32.mxu0 0.0
  %3788 = vmatmul.mubr.f32.gmra.mxu0 %v3646
  %v3789 = vpop.f32.mrf.mxu0
  %v3790 = vadd.f32 0.0, %v3789
  %v3791 = vpop.f32.mrf.mxu0
  %3792 = vdwg.mxu0
  %v3794 = vrot.slane %v3790, 2
  %v3796 = vadd.f32 %v3722, %v3794
  %v3797 = vadd.f32 %v901, %v2477
  %3798 = vmatprep.subr.mxu0 0.0
  %3799 = vmatpush1.msra.mxu0 0.0
  %3800 = vmatprep.subr.mxu0 0.0
  %3801 = vmatpush1.msra.mxu0 0.0
  %3802 = vmatprep.subr.mxu0 0.0
  %3803 = vmatpush1.msra.mxu0 0.0
  %3804 = vmatprep.subr.mxu0 0.0
  %3805 = vmatpush1.msra.mxu0 0.0
  %3806 = vmatprep.subr.mxu0 0.0
  %3807 = vmatpush1.msra.mxu0 0.0
  %3808 = vmatprep.subr.mxu0 0.0
  %3809 = vmatpush1.msra.mxu0 0.0
  %3810 = vmatprep.subr.mxu0 0.0
  %3811 = vmatpush1.msra.mxu0 0.0
  %3812 = vmatprep.subr.mxu0 0.0
  %3813 = vmatpush1.msra.mxu0 0.0
  %3814 = vmatprep.subr.mxu0 0.0
  %3815 = vmatpush1.msra.mxu0 0.0
  %3816 = vmatprep.subr.mxu0 0.0
  %3817 = vmatpush1.msra.mxu0 0.0
  %3818 = vmatprep.subr.mxu0 0.0
  %3819 = vmatpush1.msra.mxu0 0.0
  %3820 = vmatprep.subr.mxu0 0.0
  %3821 = vmatpush1.msra.mxu0 0.0
  %3822 = vmatprep.subr.mxu0 0.0
  %3823 = vmatpush1.msra.mxu0 %v1311
  %3824 = vmatprep.subr.mxu0 0.0
  %3825 = vmatpush1.msra.mxu0 %v1310
  %3826 = vmatprep.subr.mxu0 0.0
  %3827 = vmatpush1.msra.mxu0 %v1309
  %3828 = vmatprep.subr.mxu0 0.0
  %3829 = vmatpush1.msra.mxu0 %v1308
  %3830 = vmatprep.subr.mxu0 0.0
  %3831 = vmatpush2.msra.mxu0 0.0
  %3832 = vmatprep.subr.mxu0 0.0
  %3833 = vmatpush2.msra.mxu0 0.0
  %3834 = vmatprep.subr.mxu0 0.0
  %3835 = vmatpush2.msra.mxu0 0.0
  %3836 = vmatprep.subr.mxu0 0.0
  %3837 = vmatpush2.msra.mxu0 0.0
  %3838 = vmatprep.subr.mxu0 0.0
  %3839 = vmatpush2.msra.mxu0 0.0
  %3840 = vmatprep.subr.mxu0 0.0
  %3841 = vmatpush2.msra.mxu0 0.0
  %3842 = vmatprep.subr.mxu0 0.0
  %3843 = vmatpush2.msra.mxu0 0.0
  %3844 = vmatprep.subr.mxu0 0.0
  %3845 = vmatpush2.msra.mxu0 0.0
  %3846 = vmatprep.subr.mxu0 0.0
  %3847 = vmatpush2.msra.mxu0 0.0
  %3848 = vmatprep.subr.mxu0 0.0
  %3849 = vmatpush2.msra.mxu0 0.0
  %3850 = vmatprep.subr.mxu0 0.0
  %3851 = vmatpush2.msra.mxu0 0.0
  %3852 = vmatprep.subr.mxu0 0.0
  %3853 = vmatpush2.msra.mxu0 0.0
  %3854 = vmatprep.subr.mxu0 0.0
  %3855 = vmatpush2.msra.mxu0 0.0
  %3856 = vmatprep.subr.mxu0 0.0
  %3857 = vmatpush2.msra.mxu0 0.0
  %3858 = vmatprep.subr.mxu0 0.0
  %3859 = vmatpush2.msra.mxu0 0.0
  %3860 = vmatprep.subr.mxu0 0.0
  %3861 = vmatpush2.msra.mxu0 0.0
  %3862 = vmatprep.mubr.f32.mxu0 0.0
  %3863 = vmatmul.mubr.f32.gmra.mxu0 %v3646
  %v3864 = vpop.f32.mrf.mxu0
  %v3865 = vadd.f32 0.0, %v3864
  %v3866 = vpop.f32.mrf.mxu0
  %3867 = vdwg.mxu0
  %v3869 = vrot.slane %v3865, 2
  %v3871 = vadd.f32 %v3797, %v3869
  %v3872 = vadd.f32 %v981, %v2554
  %3873 = vmatprep.subr.mxu0 0.0
  %3874 = vmatpush1.msra.mxu0 0.0
  %3875 = vmatprep.subr.mxu0 0.0
  %3876 = vmatpush1.msra.mxu0 0.0
  %3877 = vmatprep.subr.mxu0 0.0
  %3878 = vmatpush1.msra.mxu0 0.0
  %3879 = vmatprep.subr.mxu0 0.0
  %3880 = vmatpush1.msra.mxu0 0.0
  %3881 = vmatprep.subr.mxu0 0.0
  %3882 = vmatpush1.msra.mxu0 0.0
  %3883 = vmatprep.subr.mxu0 0.0
  %3884 = vmatpush1.msra.mxu0 0.0
  %3885 = vmatprep.subr.mxu0 0.0
  %3886 = vmatpush1.msra.mxu0 0.0
  %3887 = vmatprep.subr.mxu0 0.0
  %3888 = vmatpush1.msra.mxu0 0.0
  %3889 = vmatprep.subr.mxu0 0.0
  %3890 = vmatpush1.msra.mxu0 0.0
  %3891 = vmatprep.subr.mxu0 0.0
  %3892 = vmatpush1.msra.mxu0 0.0
  %3893 = vmatprep.subr.mxu0 0.0
  %3894 = vmatpush1.msra.mxu0 0.0
  %3895 = vmatprep.subr.mxu0 0.0
  %3896 = vmatpush1.msra.mxu0 0.0
  %3897 = vmatprep.subr.mxu0 0.0
  %3898 = vmatpush1.msra.mxu0 %v1316
  %3899 = vmatprep.subr.mxu0 0.0
  %3900 = vmatpush1.msra.mxu0 %v1315
  %3901 = vmatprep.subr.mxu0 0.0
  %3902 = vmatpush1.msra.mxu0 %v1314
  %3903 = vmatprep.subr.mxu0 0.0
  %3904 = vmatpush1.msra.mxu0 %v1313
  %3905 = vmatprep.subr.mxu0 0.0
  %3906 = vmatpush2.msra.mxu0 0.0
  %3907 = vmatprep.subr.mxu0 0.0
  %3908 = vmatpush2.msra.mxu0 0.0
  %3909 = vmatprep.subr.mxu0 0.0
  %3910 = vmatpush2.msra.mxu0 0.0
  %3911 = vmatprep.subr.mxu0 0.0
  %3912 = vmatpush2.msra.mxu0 0.0
  %3913 = vmatprep.subr.mxu0 0.0
  %3914 = vmatpush2.msra.mxu0 0.0
  %3915 = vmatprep.subr.mxu0 0.0
  %3916 = vmatpush2.msra.mxu0 0.0
  %3917 = vmatprep.subr.mxu0 0.0
  %3918 = vmatpush2.msra.mxu0 0.0
  %3919 = vmatprep.subr.mxu0 0.0
  %3920 = vmatpush2.msra.mxu0 0.0
  %3921 = vmatprep.subr.mxu0 0.0
  %3922 = vmatpush2.msra.mxu0 0.0
  %3923 = vmatprep.subr.mxu0 0.0
  %3924 = vmatpush2.msra.mxu0 0.0
  %3925 = vmatprep.subr.mxu0 0.0
  %3926 = vmatpush2.msra.mxu0 0.0
  %3927 = vmatprep.subr.mxu0 0.0
  %3928 = vmatpush2.msra.mxu0 0.0
  %3929 = vmatprep.subr.mxu0 0.0
  %3930 = vmatpush2.msra.mxu0 0.0
  %3931 = vmatprep.subr.mxu0 0.0
  %3932 = vmatpush2.msra.mxu0 0.0
  %3933 = vmatprep.subr.mxu0 0.0
  %3934 = vmatpush2.msra.mxu0 0.0
  %3935 = vmatprep.subr.mxu0 0.0
  %3936 = vmatpush2.msra.mxu0 0.0
  %3937 = vmatprep.mubr.f32.mxu0 0.0
  %3938 = vmatmul.mubr.f32.gmra.mxu0 %v3646
  %v3939 = vpop.f32.mrf.mxu0
  %v3940 = vadd.f32 0.0, %v3939
  %v3941 = vpop.f32.mrf.mxu0
  %3942 = vdwg.mxu0
  %v3944 = vrot.slane %v3940, 2
  %v3946 = vadd.f32 %v3872, %v3944
  %v3947 = vxor.u32 %v3721, 2147483648
  %v3948 = vmul.f32 %v3947, 1.442695
  %v3949 = vpow.pop %v3948
  %v3950 = vadd.f32 %v3949, 1.0
  %v3951 = vrcp.pop %v3950
  %v3952 = vmul.f32 1.0, %v3951
  %v3953 = vxor.u32 %v3796, 2147483648
  %v3954 = vmul.f32 %v3953, 1.442695
  %v3955 = vpow.pop %v3954
  %v3956 = vadd.f32 %v3955, 1.0
  %v3957 = vrcp.pop %v3956
  %v3958 = vmul.f32 1.0, %v3957
  %v3959 = vtanh.pop %v3871
  %v3960 = vxor.u32 %v3946, 2147483648
  %v3961 = vmul.f32 %v3960, 1.442695
  %v3962 = vpow.pop %v3961
  %v3963 = vadd.f32 %v3962, 1.0
  %v3964 = vrcp.pop %v3963
  %v3965 = vmul.f32 1.0, %v3964
  %v3967 = vrot.slane %v3639, 6
  %v3969 = vmul.f32 %v3958, %v3967
  %v3970 = vmul.f32 %v3952, %v3959
  %v3971 = vadd.f32 %v3969, %v3970
  %v3972 = vtanh.pop %v3971
  %v3973 = vmul.f32 %v3965, %v3972
  %3974 = vst.msk [vmem:[#allocation2 + $0x8] sm:$0xc0] %vm2658, %v3973
  %v3975 = vld [vmem:[#allocation2] sm:$0xff]
  %v3976 = vld [vmem:[#allocation2 + $0x8] sm:$0xff]
  %v3977 = vld [vmem:[%s11] sm:$0xff]
  %v3978 = vld [vmem:[%s11 + $0x8] sm:$0xff]
  %v3979 = vld [vmem:[%s11 + $0x10] sm:$0xff]
  %v3980 = vld [vmem:[%s11 + $0x18] sm:$0xff]
  %v3981 = vld [vmem:[%s12] sm:$0x1]
  %v3983 = vlaneseq
  %v3984 = vshrl.u32 %v3983, 7
  %v3985 = vsub.s32 0, %v3984
  %v3986 = vrot.slane %v3981, %v3985
  %v3989 = vsel %vm577, %v3975, 0
  %v3992 = vsel %vm577, %v3976, 0
  %3994 = vmatprep.subr.mxu0 0.0
  %3995 = vmatpush1.msra.mxu0 0.0
  %3996 = vmatprep.subr.mxu0 0.0
  %3997 = vmatpush1.msra.mxu0 0.0
  %3998 = vmatprep.subr.mxu0 0.0
  %3999 = vmatpush1.msra.mxu0 0.0
  %4000 = vmatprep.subr.mxu0 0.0
  %4001 = vmatpush1.msra.mxu0 0.0
  %4002 = vmatprep.subr.mxu0 0.0
  %4003 = vmatpush1.msra.mxu0 0.0
  %4004 = vmatprep.subr.mxu0 0.0
  %4005 = vmatpush1.msra.mxu0 0.0
  %4006 = vmatprep.subr.mxu0 0.0
  %4007 = vmatpush1.msra.mxu0 0.0
  %4008 = vmatprep.subr.mxu0 0.0
  %4009 = vmatpush1.msra.mxu0 0.0
  %4010 = vmatprep.subr.mxu0 0.0
  %4011 = vmatpush1.msra.mxu0 0.0
  %4012 = vmatprep.subr.mxu0 0.0
  %4013 = vmatpush1.msra.mxu0 0.0
  %4014 = vmatprep.subr.mxu0 0.0
  %4015 = vmatpush1.msra.mxu0 0.0
  %4016 = vmatprep.subr.mxu0 0.0
  %4017 = vmatpush1.msra.mxu0 0.0
  %4018 = vmatprep.subr.mxu0 0.0
  %4019 = vmatpush1.msra.mxu0 %v3980
  %4020 = vmatprep.subr.mxu0 0.0
  %4021 = vmatpush1.msra.mxu0 %v3979
  %4022 = vmatprep.subr.mxu0 0.0
  %4023 = vmatpush1.msra.mxu0 %v3978
  %4024 = vmatprep.subr.mxu0 0.0
  %4025 = vmatpush1.msra.mxu0 %v3977
  %4026 = vmatprep.subr.mxu0 0.0
  %4027 = vmatpush2.msra.mxu0 0.0
  %4028 = vmatprep.subr.mxu0 0.0
  %4029 = vmatpush2.msra.mxu0 0.0
  %4030 = vmatprep.subr.mxu0 0.0
  %4031 = vmatpush2.msra.mxu0 0.0
  %4032 = vmatprep.subr.mxu0 0.0
  %4033 = vmatpush2.msra.mxu0 0.0
  %4034 = vmatprep.subr.mxu0 0.0
  %4035 = vmatpush2.msra.mxu0 0.0
  %4036 = vmatprep.subr.mxu0 0.0
  %4037 = vmatpush2.msra.mxu0 0.0
  %4038 = vmatprep.subr.mxu0 0.0
  %4039 = vmatpush2.msra.mxu0 0.0
  %4040 = vmatprep.subr.mxu0 0.0
  %4041 = vmatpush2.msra.mxu0 0.0
  %4042 = vmatprep.subr.mxu0 0.0
  %4043 = vmatpush2.msra.mxu0 0.0
  %4044 = vmatprep.subr.mxu0 0.0
  %4045 = vmatpush2.msra.mxu0 0.0
  %4046 = vmatprep.subr.mxu0 0.0
  %4047 = vmatpush2.msra.mxu0 0.0
  %4048 = vmatprep.subr.mxu0 0.0
  %4049 = vmatpush2.msra.mxu0 0.0
  %4050 = vmatprep.subr.mxu0 0.0
  %4051 = vmatpush2.msra.mxu0 0.0
  %4052 = vmatprep.subr.mxu0 0.0
  %4053 = vmatpush2.msra.mxu0 0.0
  %4054 = vmatprep.subr.mxu0 0.0
  %4055 = vmatpush2.msra.mxu0 0.0
  %4056 = vmatprep.subr.mxu0 0.0
  %4057 = vmatpush2.msra.mxu0 0.0
  %4058 = vmatprep.mubr.f32.mxu0 0.0
  %4059 = vmatmul.mubr.f32.gmra.mxu0 %v3989
  %v4060 = vpop.f32.mrf.mxu0
  %v4061 = vadd.f32 %v3986, %v4060
  %v4062 = vpop.f32.mrf.mxu0
  %4063 = vmatprep.mubr.f32.mxu0 0.0
  %4064 = vmatmul.mubr.f32.gmra.mxu0 %v3992
  %v4065 = vpop.f32.mrf.mxu0
  %v4066 = vadd.f32 %v3986, %v4065
  %v4067 = vpop.f32.mrf.mxu0
  %4068 = vdwg.mxu0
  %4069 = vst [vmem:[%s13] sm:$0xff] %v4061
  %4070 = vst [vmem:[%s13 + $0x8] sm:$0xff] %v4066
  // Predicated region
  $region54: #{image_captioning_forward.1} parent=0 // pred_check
    _
  $region55: #{image_captioning_forward.1} parent=0 // pred_check_branch
    %4072 = sbr.rel (0) target = $region57
  $region56: #{image_captioning_forward.1} parent=0 // pred_region
    _
  $region57: #{image_captioning_forward.1} parent=0 // pred_fallthru
    _
  // Predicated region
  $region58: #{image_captioning_forward.1} parent=0 // pred_check
    _
  $region59: #{image_captioning_forward.1} parent=0 // pred_check_branch
    %4074 = sbr.rel (0) target = $region61
  $region60: #{image_captioning_forward.1} parent=0 // pred_region
    _
  $region61: #{image_captioning_forward.1} parent=0 // pred_fallthru
    _

</llo_original>
